<compile_context>
chip_gen: v7x
topology: tpu7x:2x2x1
jax: 0.10.0
libtpu: 0.0.40
codegen_flags: <defaults>
</compile_context>

<pallas_src>
import functools

import jax
import jax.numpy as jnp
from jax.experimental import pallas as pl
from jax.experimental.pallas import tpu as pltpu


# ----------------------------- Pallas kernel --------------------------------

def _sentiment_kernel(ids_ref, emb_ref, *refs, seq_len, batch, hidden_dim,
                      n_layers):
    """Entire SentimentModel forward in one kernel invocation.

    refs layout (positional, after the scalar-prefetch ids and the embedding table):
      refs[3*l + 0]        wih_l   (Din_l, 8H)  gate-major cols [i_f i_b|f_f f_b|o_f o_b|g_f g_b]
      refs[3*l + 1]        whh_l   (2H, 8H)     rows [h_f | h_b], block-diag per gate
      refs[3*l + 2]        b_l     (1, 8H)      combined (b_ih + b_hh), gate-major
      refs[3*n_layers]     fc_w    (2H, out)
      refs[3*n_layers+1]   fc_b    (1, out)
      refs[3*n_layers+2]   out_ref (B, out)
    """
    T, B, H = seq_len, batch, hidden_dim
    fcw_ref = refs[3 * n_layers]
    fcb_ref = refs[3 * n_layers + 1]
    out_ref = refs[3 * n_layers + 2]

    # ---- fused embedding gather: dynamic row loads from the VMEM table ----
    # TODO(synk): for a large vocab keep the table in HBM (memory_space=pl.ANY) and
    #             DMA the needed rows instead of holding the whole table in VMEM.
    rows = [emb_ref[pl.ds(ids_ref[r], 1), :] for r in range(T * B)]
    cur_in = jnp.concatenate(rows, axis=0)                 # (T*B, E), time-major f32

    # Hoisted lane mask: inside every gate-major 2H block, first H lanes are fwd.
    lane = jax.lax.broadcasted_iota(jnp.int32, (B, 8 * H), 1)
    fwd_lane = (lane % (2 * H)) < H

    h = None
    for layer in range(n_layers):
        wih = refs[3 * layer + 0][...]
        whh = refs[3 * layer + 1][...]
        bias = refs[3 * layer + 2][...]

        # Hoisted input projection: all T steps, both directions, one MXU matmul.
        gates_in = jnp.dot(cur_in.astype(wih.dtype), wih,
                           preferred_element_type=jnp.float32) + bias  # (T*B, 8H)

        h = jnp.zeros((B, 2 * H), jnp.float32)              # fused [h_f | h_b]
        c = jnp.zeros((B, 2 * H), jnp.float32)
        last_layer = layer == n_layers - 1
        hf_steps, hb_steps = [], []

        # Serial recurrence; T is tiny and static -> fully unrolled, slices static.
        for s in range(T):
            g_f_rows = gates_in[s * B:(s + 1) * B, :]             # fwd @ time s
            g_b_rows = gates_in[(T - 1 - s) * B:(T - s) * B, :]   # bwd @ time T-1-s
            g = jnp.where(fwd_lane, g_f_rows, g_b_rows)
            g = g + jnp.dot(h.astype(whh.dtype), whh,
                            preferred_element_type=jnp.float32)   # (B, 8H)

            # One sigmoid over the contiguous [i|f|o] block, one tanh over [g].
            sig = jax.nn.sigmoid(g[:, 0:6 * H])
            i_g = sig[:, 0:2 * H]
            f_g = sig[:, 2 * H:4 * H]
            o_g = sig[:, 4 * H:6 * H]
            g_g = jnp.tanh(g[:, 6 * H:8 * H])

            c = f_g * c + i_g * g_g
            h = o_g * jnp.tanh(c)

            if not last_layer:
                hf_steps.append(h[:, 0:H])
                hb_steps.append(h[:, H:2 * H])

        if not last_layer:
            # Next-layer input at time t is [h_f(t) | h_b(t)]; bwd steps come out in
            # reverse time order.  One dense concat per layer (no per-step masked
            # sub-tile stores, no scratch round trip).
            cur_in = jnp.concatenate(
                [jnp.concatenate(hf_steps, axis=0),
                 jnp.concatenate(list(reversed(hb_steps)), axis=0)],
                axis=1)                                           # (T*B, 2H)

    # Final hidden = [h_f(T-1) | h_b(0)] == fused h after the last step -> Linear.
    out_ref[...] = (jnp.dot(h.astype(fcw_ref.dtype), fcw_ref[...],
                            preferred_element_type=jnp.float32) + fcb_ref[...])


# --------------------------- weight packing ----------------------------------

# PyTorch gate order is [i, f, g, o]; kernel order is [i, f, o, g] so the three
# sigmoid gates are contiguous (single EUP pass) and tanh's gate is last.
_GATE_ORDER = (0, 1, 3, 2)


def _pack_layer(wih_f, whh_f, b_f, wih_b, whh_b, b_b, H, mm_dtype):
    wih_cols, whh_f_cols, whh_b_cols, b_cols = [], [], [], []
    zeros = jnp.zeros((H, H), jnp.float32)
    for pg in _GATE_ORDER:
        sl = slice(pg * H, (pg + 1) * H)
        wih_cols += [wih_f[:, sl], wih_b[:, sl]]
        whh_f_cols += [whh_f[:, sl], zeros]
        whh_b_cols += [zeros, whh_b[:, sl]]
        b_cols += [b_f[:, sl], b_b[:, sl]]
    wih = jnp.concatenate(wih_cols, axis=1)                        # (Din, 8H)
    whh = jnp.concatenate(
        [jnp.concatenate(whh_f_cols, axis=1),                      # rows 0:H  <- h_f
         jnp.concatenate(whh_b_cols, axis=1)], axis=0)             # rows H:2H <- h_b
    bias = jnp.concatenate(b_cols, axis=1)                         # (1, 8H), stays f32
    return wih.astype(mm_dtype), whh.astype(mm_dtype), bias


# --------------------------- params + forward pass ---------------------------

def init_params(key, vocab_size, embedding_dim, hidden_dim, output_dim, n_layers):
    params = {}
    key, sub = jax.random.split(key)
    params["embedding"] = jax.random.normal(
        sub, (vocab_size, embedding_dim), jnp.float32)

    k = 1.0 / float(hidden_dim) ** 0.5
    lstm = []
    for layer in range(n_layers):
        din = embedding_dim if layer == 0 else 2 * hidden_dim
        dirs = []
        for _direction in range(2):        # bidirectional
            key, k1, k2, k3, k4 = jax.random.split(key, 5)
            wih = jax.random.uniform(k1, (din, 4 * hidden_dim), jnp.float32, -k, k)
            whh = jax.random.uniform(k2, (hidden_dim, 4 * hidden_dim), jnp.float32, -k, k)
            bih = jax.random.uniform(k3, (4 * hidden_dim,), jnp.float32, -k, k)
            bhh = jax.random.uniform(k4, (4 * hidden_dim,), jnp.float32, -k, k)
            dirs.append((wih, whh, (bih + bhh).reshape(1, 4 * hidden_dim)))
        lstm.append(dirs)
    params["lstm"] = lstm

    kf = 1.0 / float(2 * hidden_dim) ** 0.5
    key, k1, k2 = jax.random.split(key, 3)
    params["fc_w"] = jax.random.uniform(
        k1, (2 * hidden_dim, output_dim), jnp.float32, -kf, kf)
    params["fc_b"] = jax.random.uniform(
        k2, (1, output_dim), jnp.float32, -kf, kf)
    return params


@functools.partial(jax.jit, static_argnums=(2, 3, 4))
def sentiment_forward(params, text, hidden_dim, n_layers, matmul_dtype=jnp.float32):
    B, T = text.shape
    H = hidden_dim
    emb = params["embedding"].astype(jnp.float32)            # (V, E), gathered in-kernel
    V, E = emb.shape

    # Flattened time-major token ids (row r = t*B + b), delivered via scalar prefetch.
    ids = jnp.transpose(text).reshape(T * B).astype(jnp.int32)

    inputs = [ids, emb]
    in_specs = [pl.BlockSpec((V, E), lambda i, ids_ref: (0, 0))]
    for layer in range(n_layers):
        (wih_f, whh_f, b_f), (wih_b, whh_b, b_b) = params["lstm"][layer]
        wih, whh, bias = _pack_layer(wih_f, whh_f, b_f, wih_b, whh_b, b_b, H,
                                     matmul_dtype)
        inputs += [wih, whh, bias]
        in_specs += [pl.BlockSpec(wih.shape, lambda i, ids_ref: (0, 0)),
                     pl.BlockSpec(whh.shape, lambda i, ids_ref: (0, 0)),
                     pl.BlockSpec(bias.shape, lambda i, ids_ref: (0, 0))]

    fc_w = params["fc_w"].astype(matmul_dtype)
    fc_b = params["fc_b"]
    out_dim = fc_w.shape[1]
    inputs += [fc_w, fc_b]
    in_specs += [pl.BlockSpec(fc_w.shape, lambda i, ids_ref: (0, 0)),
                 pl.BlockSpec(fc_b.shape, lambda i, ids_ref: (0, 0))]

    kernel = functools.partial(_sentiment_kernel, seq_len=T, batch=B,
                               hidden_dim=H, n_layers=n_layers)
    return pl.pallas_call(
        kernel,
        out_shape=jax.ShapeDtypeStruct((B, out_dim), jnp.float32),
        grid_spec=pltpu.PrefetchScalarGridSpec(
            num_scalar_prefetch=1,
            grid=(1,),
            in_specs=in_specs,
            out_specs=pl.BlockSpec((B, out_dim), lambda i, ids_ref: (0, 0)),
            scratch_shapes=[]),
        compiler_params=pltpu.CompilerParams(
            dimension_semantics=("arbitrary",)),
    )(*inputs)


# -------------------------- pure-JAX reference check -------------------------

def _lstm_dir_ref(x_tm, wih, whh, b, hidden_dim):
    T, B, _ = x_tm.shape
    H = hidden_dim
    h = jnp.zeros((B, H), jnp.float32)
    c = jnp.zeros((B, H), jnp.float32)
    outs = []
    for t in range(T):
        gates = x_tm[t] @ wih + h @ whh + b
        i = jax.nn.sigmoid(gates[:, 0 * H:1 * H])
        f = jax.nn.sigmoid(gates[:, 1 * H:2 * H])
        g = jnp.tanh(gates[:, 2 * H:3 * H])
        o = jax.nn.sigmoid(gates[:, 3 * H:4 * H])
        c = f * c + i * g
        h = o * jnp.tanh(c)
        outs.append(h)
    return jnp.stack(outs, 0)


def reference_forward(params, text, hidden_dim, n_layers):
    embedded = params["embedding"][text]
    x = jnp.transpose(embedded, (1, 0, 2)).astype(jnp.float32)
    h_final_f = h_final_b = None
    for layer in range(n_layers):
        (wih_f, whh_f, b_f), (wih_b, whh_b, b_b) = params["lstm"][layer]
        out_f = _lstm_dir_ref(x, wih_f, whh_f, b_f, hidden_dim)
        out_b_rev = _lstm_dir_ref(x[::-1], wih_b, whh_b, b_b, hidden_dim)
        h_final_f = out_f[-1]
        h_final_b = out_b_rev[-1]
        x = jnp.concatenate([out_f, out_b_rev[::-1]], axis=-1)
    hidden_cat = jnp.concatenate([h_final_f, h_final_b], axis=1)
    return hidden_cat @ params["fc_w"] + params["fc_b"]


# --------------------------------- main ---------------------------------------

if __name__ == "__main__":
    vocab_size, embedding_dim, hidden_dim, output_dim = 50, 32, 32, 2
    n_layers, B, T = 2, 2, 8

    key = jax.random.PRNGKey(0)
    pkey, tkey = jax.random.split(key)
    params = init_params(pkey, vocab_size, embedding_dim, hidden_dim,
                         output_dim, n_layers)
    text = jax.random.randint(tkey, (B, T), 0, vocab_size, dtype=jnp.int32)

    ref = reference_forward(params, text, hidden_dim, n_layers)

    # f32 path: strict check against the pure-JAX reference.
    out = sentiment_forward(params, text, hidden_dim, n_layers, jnp.float32)
    out = jax.block_until_ready(out)
    assert out.shape == (B, output_dim)
    assert jnp.allclose(out, ref, atol=1e-4, rtol=1e-4), (out, ref)

    # bf16 MXU-input path (v6e/v7x: 2x MXU rate, half weight DMA/VMEM); elementwise
    # and state math stay f32, so only matmul rounding differs -> relaxed tolerance.
    out_bf16 = sentiment_forward(params, text, hidden_dim, n_layers, jnp.bfloat16)
    out_bf16 = jax.block_until_ready(out_bf16)
    assert jnp.allclose(out_bf16, ref, atol=5e-2, rtol=5e-2), (out_bf16, ref)

    print("KERNEL_OK")
</pallas_src>

<mosaic_0001>
module attributes {stable_mosaic.version = 11 : i64} {
  func.func @_sentiment_kernel(%arg0: i32, %arg1: memref<16xi32, #tpu.memory_space<smem>>, %arg2: memref<50x32xf32, #tpu.memory_space<vmem>>, %arg3: memref<32x256xf32, #tpu.memory_space<vmem>>, %arg4: memref<64x256xf32, #tpu.memory_space<vmem>>, %arg5: memref<1x256xf32, #tpu.memory_space<vmem>>, %arg6: memref<64x256xf32, #tpu.memory_space<vmem>>, %arg7: memref<64x256xf32, #tpu.memory_space<vmem>>, %arg8: memref<1x256xf32, #tpu.memory_space<vmem>>, %arg9: memref<64x2xf32, #tpu.memory_space<vmem>>, %arg10: memref<1x2xf32, #tpu.memory_space<vmem>>, %arg11: memref<2x2xf32, #tpu.memory_space<vmem>>) attributes {dimension_semantics = [#tpu.dimension_semantics<arbitrary>], iteration_bounds = array<i64: 1>, scalar_prefetch = 1 : i64, scratch_operands = 0 : i64, tpu.core_type = #tpu.core_type<tc>, window_params = [{pipeline_mode = #tpu.pipeline_mode<synchronous>, transform_indices = @transform_0, window_bounds = array<i64: 50, 32>}, {pipeline_mode = #tpu.pipeline_mode<synchronous>, transform_indices = @transform_1, window_bounds = array<i64: 32, 256>}, {pipeline_mode = #tpu.pipeline_mode<synchronous>, transform_indices = @transform_2, window_bounds = array<i64: 64, 256>}, {pipeline_mode = #tpu.pipeline_mode<synchronous>, transform_indices = @transform_3, window_bounds = array<i64: 1, 256>}, {pipeline_mode = #tpu.pipeline_mode<synchronous>, transform_indices = @transform_4, window_bounds = array<i64: 64, 256>}, {pipeline_mode = #tpu.pipeline_mode<synchronous>, transform_indices = @transform_5, window_bounds = array<i64: 64, 256>}, {pipeline_mode = #tpu.pipeline_mode<synchronous>, transform_indices = @transform_6, window_bounds = array<i64: 1, 256>}, {pipeline_mode = #tpu.pipeline_mode<synchronous>, transform_indices = @transform_7, window_bounds = array<i64: 64, 2>}, {pipeline_mode = #tpu.pipeline_mode<synchronous>, transform_indices = @transform_8, window_bounds = array<i64: 1, 2>}, {pipeline_mode = #tpu.pipeline_mode<synchronous>, transform_indices = @transform_9, window_bounds = array<i64: 2, 2>}]} {
    %c0 = arith.constant 0 : index
    %0 = memref.load %arg1[%c0] : memref<16xi32, #tpu.memory_space<smem>>
    %1 = arith.index_cast %0 : i32 to index
    %c0_0 = arith.constant 0 : index
    %2 = vector.load %arg2[%1, %c0_0] : memref<50x32xf32, #tpu.memory_space<vmem>>, vector<1x32xf32>
    %c1 = arith.constant 1 : index
    %3 = memref.load %arg1[%c1] : memref<16xi32, #tpu.memory_space<smem>>
    %4 = arith.index_cast %3 : i32 to index
    %c0_1 = arith.constant 0 : index
    %5 = vector.load %arg2[%4, %c0_1] : memref<50x32xf32, #tpu.memory_space<vmem>>, vector<1x32xf32>
    %c2 = arith.constant 2 : index
    %6 = memref.load %arg1[%c2] : memref<16xi32, #tpu.memory_space<smem>>
    %7 = arith.index_cast %6 : i32 to index
    %c0_2 = arith.constant 0 : index
    %8 = vector.load %arg2[%7, %c0_2] : memref<50x32xf32, #tpu.memory_space<vmem>>, vector<1x32xf32>
    %c3 = arith.constant 3 : index
    %9 = memref.load %arg1[%c3] : memref<16xi32, #tpu.memory_space<smem>>
    %10 = arith.index_cast %9 : i32 to index
    %c0_3 = arith.constant 0 : index
    %11 = vector.load %arg2[%10, %c0_3] : memref<50x32xf32, #tpu.memory_space<vmem>>, vector<1x32xf32>
    %c4 = arith.constant 4 : index
    %12 = memref.load %arg1[%c4] : memref<16xi32, #tpu.memory_space<smem>>
    %13 = arith.index_cast %12 : i32 to index
    %c0_4 = arith.constant 0 : index
    %14 = vector.load %arg2[%13, %c0_4] : memref<50x32xf32, #tpu.memory_space<vmem>>, vector<1x32xf32>
    %c5 = arith.constant 5 : index
    %15 = memref.load %arg1[%c5] : memref<16xi32, #tpu.memory_space<smem>>
    %16 = arith.index_cast %15 : i32 to index
    %c0_5 = arith.constant 0 : index
    %17 = vector.load %arg2[%16, %c0_5] : memref<50x32xf32, #tpu.memory_space<vmem>>, vector<1x32xf32>
    %c6 = arith.constant 6 : index
    %18 = memref.load %arg1[%c6] : memref<16xi32, #tpu.memory_space<smem>>
    %19 = arith.index_cast %18 : i32 to index
    %c0_6 = arith.constant 0 : index
    %20 = vector.load %arg2[%19, %c0_6] : memref<50x32xf32, #tpu.memory_space<vmem>>, vector<1x32xf32>
    %c7 = arith.constant 7 : index
    %21 = memref.load %arg1[%c7] : memref<16xi32, #tpu.memory_space<smem>>
    %22 = arith.index_cast %21 : i32 to index
    %c0_7 = arith.constant 0 : index
    %23 = vector.load %arg2[%22, %c0_7] : memref<50x32xf32, #tpu.memory_space<vmem>>, vector<1x32xf32>
    %c8 = arith.constant 8 : index
    %24 = memref.load %arg1[%c8] : memref<16xi32, #tpu.memory_space<smem>>
    %25 = arith.index_cast %24 : i32 to index
    %c0_8 = arith.constant 0 : index
    %26 = vector.load %arg2[%25, %c0_8] : memref<50x32xf32, #tpu.memory_space<vmem>>, vector<1x32xf32>
    %c9 = arith.constant 9 : index
    %27 = memref.load %arg1[%c9] : memref<16xi32, #tpu.memory_space<smem>>
    %28 = arith.index_cast %27 : i32 to index
    %c0_9 = arith.constant 0 : index
    %29 = vector.load %arg2[%28, %c0_9] : memref<50x32xf32, #tpu.memory_space<vmem>>, vector<1x32xf32>
    %c10 = arith.constant 10 : index
    %30 = memref.load %arg1[%c10] : memref<16xi32, #tpu.memory_space<smem>>
    %31 = arith.index_cast %30 : i32 to index
    %c0_10 = arith.constant 0 : index
    %32 = vector.load %arg2[%31, %c0_10] : memref<50x32xf32, #tpu.memory_space<vmem>>, vector<1x32xf32>
    %c11 = arith.constant 11 : index
    %33 = memref.load %arg1[%c11] : memref<16xi32, #tpu.memory_space<smem>>
    %34 = arith.index_cast %33 : i32 to index
    %c0_11 = arith.constant 0 : index
    %35 = vector.load %arg2[%34, %c0_11] : memref<50x32xf32, #tpu.memory_space<vmem>>, vector<1x32xf32>
    %c12 = arith.constant 12 : index
    %36 = memref.load %arg1[%c12] : memref<16xi32, #tpu.memory_space<smem>>
    %37 = arith.index_cast %36 : i32 to index
    %c0_12 = arith.constant 0 : index
    %38 = vector.load %arg2[%37, %c0_12] : memref<50x32xf32, #tpu.memory_space<vmem>>, vector<1x32xf32>
    %c13 = arith.constant 13 : index
    %39 = memref.load %arg1[%c13] : memref<16xi32, #tpu.memory_space<smem>>
    %40 = arith.index_cast %39 : i32 to index
    %c0_13 = arith.constant 0 : index
    %41 = vector.load %arg2[%40, %c0_13] : memref<50x32xf32, #tpu.memory_space<vmem>>, vector<1x32xf32>
    %c14 = arith.constant 14 : index
    %42 = memref.load %arg1[%c14] : memref<16xi32, #tpu.memory_space<smem>>
    %43 = arith.index_cast %42 : i32 to index
    %c0_14 = arith.constant 0 : index
    %44 = vector.load %arg2[%43, %c0_14] : memref<50x32xf32, #tpu.memory_space<vmem>>, vector<1x32xf32>
    %c15 = arith.constant 15 : index
    %45 = memref.load %arg1[%c15] : memref<16xi32, #tpu.memory_space<smem>>
    %46 = arith.index_cast %45 : i32 to index
    %c0_15 = arith.constant 0 : index
    %47 = vector.load %arg2[%46, %c0_15] : memref<50x32xf32, #tpu.memory_space<vmem>>, vector<1x32xf32>
    %48 = tpu.concatenate %2, %5, %8, %11, %14, %17, %20, %23, %26, %29, %32, %35, %38, %41, %44, %47 in 0 : vector<1x32xf32>, vector<1x32xf32>, vector<1x32xf32>, vector<1x32xf32>, vector<1x32xf32>, vector<1x32xf32>, vector<1x32xf32>, vector<1x32xf32>, vector<1x32xf32>, vector<1x32xf32>, vector<1x32xf32>, vector<1x32xf32>, vector<1x32xf32>, vector<1x32xf32>, vector<1x32xf32>, vector<1x32xf32> -> vector<16x32xf32>
    %49 = tpu.iota {dimensions = array<i32: 1>} : vector<2x256xi32>
    %c64_i32 = arith.constant 64 : i32
    %c0_i32 = arith.constant 0 : i32
    %50 = arith.cmpi eq, %c64_i32, %c0_i32 : i32
    %c1_i32 = arith.constant 1 : i32
    %51 = arith.select %50, %c1_i32, %c64_i32 : i32
    %52 = vector.broadcast %51 : i32 to vector<2x256xi32>
    %53 = arith.remsi %49, %52 : vector<2x256xi32>
    %c0_i32_16 = arith.constant 0 : i32
    %54 = vector.broadcast %c0_i32_16 : i32 to vector<2x256xi32>
    %55 = arith.cmpi ne, %53, %54 : vector<2x256xi32>
    %c0_i32_17 = arith.constant 0 : i32
    %56 = vector.broadcast %c0_i32_17 : i32 to vector<2x256xi32>
    %57 = arith.cmpi slt, %53, %56 : vector<2x256xi32>
    %c0_i32_18 = arith.constant 0 : i32
    %58 = arith.cmpi slt, %51, %c0_i32_18 : i32
    %59 = vector.broadcast %58 : i1 to vector<2x256xi1>
    %60 = vector.broadcast %59 : vector<2x256xi1> to vector<2x256xi1>
    %61 = arith.xori %57, %60 : vector<2x256xi1>
    %62 = arith.andi %61, %55 : vector<2x256xi1>
    %63 = vector.broadcast %51 : i32 to vector<2x256xi32>
    %64 = arith.addi %53, %63 : vector<2x256xi32>
    %65 = arith.select %62, %64, %53 : vector<2x256xi1>, vector<2x256xi32>
    %c32_i32 = arith.constant 32 : i32
    %66 = vector.broadcast %c32_i32 : i32 to vector<2x256xi32>
    %67 = arith.cmpi slt, %65, %66 : vector<2x256xi32>
    %c0_19 = arith.constant 0 : index
    %c0_20 = arith.constant 0 : index
    %68 = vector.load %arg3[%c0_19, %c0_20] : memref<32x256xf32, #tpu.memory_space<vmem>>, vector<32x256xf32>
    %c0_21 = arith.constant 0 : index
    %c0_22 = arith.constant 0 : index
    %69 = vector.load %arg4[%c0_21, %c0_22] : memref<64x256xf32, #tpu.memory_space<vmem>>, vector<64x256xf32>
    %c0_23 = arith.constant 0 : index
    %c0_24 = arith.constant 0 : index
    %70 = vector.load %arg5[%c0_23, %c0_24] : memref<1x256xf32, #tpu.memory_space<vmem>>, vector<1x256xf32>
    %cst = arith.constant dense<0.000000e+00> : vector<16x256xf32>
    %71 = tpu.matmul %48, %68, %cst {dimension_numbers = #tpu.dot_dimension_numbers<[1], [0], [0], [1], [0, 0, 1, 1], [], []>} : vector<16x32xf32>, vector<32x256xf32>, vector<16x256xf32> -> vector<16x256xf32>
    %72 = vector.broadcast %70 : vector<1x256xf32> to vector<16x256xf32>
    %73 = arith.addf %71, %72 : vector<16x256xf32>
    %cst_25 = arith.constant 0.000000e+00 : f32
    %74 = vector.broadcast %cst_25 : f32 to vector<2x64xf32>
    %cst_26 = arith.constant 0.000000e+00 : f32
    %75 = vector.broadcast %cst_26 : f32 to vector<2x64xf32>
    %76 = vector.extract_strided_slice %73 {offsets = [0, 0], sizes = [2, 256], strides = [1, 1]} : vector<16x256xf32> to vector<2x256xf32>
    %77 = vector.extract_strided_slice %73 {offsets = [14, 0], sizes = [2, 256], strides = [1, 1]} : vector<16x256xf32> to vector<2x256xf32>
    %78 = arith.select %67, %76, %77 : vector<2x256xi1>, vector<2x256xf32>
    %cst_27 = arith.constant dense<0.000000e+00> : vector<2x256xf32>
    %79 = tpu.matmul %74, %69, %cst_27 {dimension_numbers = #tpu.dot_dimension_numbers<[1], [0], [0], [1], [0, 0, 1, 1], [], []>} : vector<2x64xf32>, vector<64x256xf32>, vector<2x256xf32> -> vector<2x256xf32>
    %80 = arith.addf %78, %79 : vector<2x256xf32>
    %81 = vector.extract_strided_slice %80 {offsets = [0, 0], sizes = [2, 192], strides = [1, 1]} : vector<2x256xf32> to vector<2x192xf32>
    %82 = arith.negf %81 : vector<2x192xf32>
    %83 = math.exp %82 : vector<2x192xf32>
    %cst_28 = arith.constant 1.000000e+00 : f32
    %84 = vector.broadcast %cst_28 : f32 to vector<2x192xf32>
    %85 = arith.addf %84, %83 : vector<2x192xf32>
    %86 = arith.divf %84, %85 : vector<2x192xf32>
    %87 = vector.extract_strided_slice %86 {offsets = [0, 0], sizes = [2, 64], strides = [1, 1]} : vector<2x192xf32> to vector<2x64xf32>
    %88 = vector.extract_strided_slice %86 {offsets = [0, 64], sizes = [2, 64], strides = [1, 1]} : vector<2x192xf32> to vector<2x64xf32>
    %89 = vector.extract_strided_slice %86 {offsets = [0, 128], sizes = [2, 64], strides = [1, 1]} : vector<2x192xf32> to vector<2x64xf32>
    %90 = vector.extract_strided_slice %80 {offsets = [0, 192], sizes = [2, 64], strides = [1, 1]} : vector<2x256xf32> to vector<2x64xf32>
    %91 = math.tanh %90 : vector<2x64xf32>
    %92 = arith.mulf %88, %75 : vector<2x64xf32>
    %93 = arith.mulf %87, %91 : vector<2x64xf32>
    %94 = arith.addf %92, %93 : vector<2x64xf32>
    %95 = math.tanh %94 : vector<2x64xf32>
    %96 = arith.mulf %89, %95 : vector<2x64xf32>
    %97 = vector.extract_strided_slice %96 {offsets = [0, 0], sizes = [2, 32], strides = [1, 1]} : vector<2x64xf32> to vector<2x32xf32>
    %98 = vector.extract_strided_slice %96 {offsets = [0, 32], sizes = [2, 32], strides = [1, 1]} : vector<2x64xf32> to vector<2x32xf32>
    %99 = vector.extract_strided_slice %73 {offsets = [2, 0], sizes = [2, 256], strides = [1, 1]} : vector<16x256xf32> to vector<2x256xf32>
    %100 = vector.extract_strided_slice %73 {offsets = [12, 0], sizes = [2, 256], strides = [1, 1]} : vector<16x256xf32> to vector<2x256xf32>
    %101 = arith.select %67, %99, %100 : vector<2x256xi1>, vector<2x256xf32>
    %cst_29 = arith.constant dense<0.000000e+00> : vector<2x256xf32>
    %102 = tpu.matmul %96, %69, %cst_29 {dimension_numbers = #tpu.dot_dimension_numbers<[1], [0], [0], [1], [0, 0, 1, 1], [], []>} : vector<2x64xf32>, vector<64x256xf32>, vector<2x256xf32> -> vector<2x256xf32>
    %103 = arith.addf %101, %102 : vector<2x256xf32>
    %104 = vector.extract_strided_slice %103 {offsets = [0, 0], sizes = [2, 192], strides = [1, 1]} : vector<2x256xf32> to vector<2x192xf32>
    %105 = arith.negf %104 : vector<2x192xf32>
    %106 = math.exp %105 : vector<2x192xf32>
    %cst_30 = arith.constant 1.000000e+00 : f32
    %107 = vector.broadcast %cst_30 : f32 to vector<2x192xf32>
    %108 = arith.addf %107, %106 : vector<2x192xf32>
    %109 = arith.divf %107, %108 : vector<2x192xf32>
    %110 = vector.extract_strided_slice %109 {offsets = [0, 0], sizes = [2, 64], strides = [1, 1]} : vector<2x192xf32> to vector<2x64xf32>
    %111 = vector.extract_strided_slice %109 {offsets = [0, 64], sizes = [2, 64], strides = [1, 1]} : vector<2x192xf32> to vector<2x64xf32>
    %112 = vector.extract_strided_slice %109 {offsets = [0, 128], sizes = [2, 64], strides = [1, 1]} : vector<2x192xf32> to vector<2x64xf32>
    %113 = vector.extract_strided_slice %103 {offsets = [0, 192], sizes = [2, 64], strides = [1, 1]} : vector<2x256xf32> to vector<2x64xf32>
    %114 = math.tanh %113 : vector<2x64xf32>
    %115 = arith.mulf %111, %94 : vector<2x64xf32>
    %116 = arith.mulf %110, %114 : vector<2x64xf32>
    %117 = arith.addf %115, %116 : vector<2x64xf32>
    %118 = math.tanh %117 : vector<2x64xf32>
    %119 = arith.mulf %112, %118 : vector<2x64xf32>
    %120 = vector.extract_strided_slice %119 {offsets = [0, 0], sizes = [2, 32], strides = [1, 1]} : vector<2x64xf32> to vector<2x32xf32>
    %121 = vector.extract_strided_slice %119 {offsets = [0, 32], sizes = [2, 32], strides = [1, 1]} : vector<2x64xf32> to vector<2x32xf32>
    %122 = vector.extract_strided_slice %73 {offsets = [4, 0], sizes = [2, 256], strides = [1, 1]} : vector<16x256xf32> to vector<2x256xf32>
    %123 = vector.extract_strided_slice %73 {offsets = [10, 0], sizes = [2, 256], strides = [1, 1]} : vector<16x256xf32> to vector<2x256xf32>
    %124 = arith.select %67, %122, %123 : vector<2x256xi1>, vector<2x256xf32>
    %cst_31 = arith.constant dense<0.000000e+00> : vector<2x256xf32>
    %125 = tpu.matmul %119, %69, %cst_31 {dimension_numbers = #tpu.dot_dimension_numbers<[1], [0], [0], [1], [0, 0, 1, 1], [], []>} : vector<2x64xf32>, vector<64x256xf32>, vector<2x256xf32> -> vector<2x256xf32>
    %126 = arith.addf %124, %125 : vector<2x256xf32>
    %127 = vector.extract_strided_slice %126 {offsets = [0, 0], sizes = [2, 192], strides = [1, 1]} : vector<2x256xf32> to vector<2x192xf32>
    %128 = arith.negf %127 : vector<2x192xf32>
    %129 = math.exp %128 : vector<2x192xf32>
    %cst_32 = arith.constant 1.000000e+00 : f32
    %130 = vector.broadcast %cst_32 : f32 to vector<2x192xf32>
    %131 = arith.addf %130, %129 : vector<2x192xf32>
    %132 = arith.divf %130, %131 : vector<2x192xf32>
    %133 = vector.extract_strided_slice %132 {offsets = [0, 0], sizes = [2, 64], strides = [1, 1]} : vector<2x192xf32> to vector<2x64xf32>
    %134 = vector.extract_strided_slice %132 {offsets = [0, 64], sizes = [2, 64], strides = [1, 1]} : vector<2x192xf32> to vector<2x64xf32>
    %135 = vector.extract_strided_slice %132 {offsets = [0, 128], sizes = [2, 64], strides = [1, 1]} : vector<2x192xf32> to vector<2x64xf32>
    %136 = vector.extract_strided_slice %126 {offsets = [0, 192], sizes = [2, 64], strides = [1, 1]} : vector<2x256xf32> to vector<2x64xf32>
    %137 = math.tanh %136 : vector<2x64xf32>
    %138 = arith.mulf %134, %117 : vector<2x64xf32>
    %139 = arith.mulf %133, %137 : vector<2x64xf32>
    %140 = arith.addf %138, %139 : vector<2x64xf32>
    %141 = math.tanh %140 : vector<2x64xf32>
    %142 = arith.mulf %135, %141 : vector<2x64xf32>
    %143 = vector.extract_strided_slice %142 {offsets = [0, 0], sizes = [2, 32], strides = [1, 1]} : vector<2x64xf32> to vector<2x32xf32>
    %144 = vector.extract_strided_slice %142 {offsets = [0, 32], sizes = [2, 32], strides = [1, 1]} : vector<2x64xf32> to vector<2x32xf32>
    %145 = vector.extract_strided_slice %73 {offsets = [6, 0], sizes = [2, 256], strides = [1, 1]} : vector<16x256xf32> to vector<2x256xf32>
    %146 = vector.extract_strided_slice %73 {offsets = [8, 0], sizes = [2, 256], strides = [1, 1]} : vector<16x256xf32> to vector<2x256xf32>
    %147 = arith.select %67, %145, %146 : vector<2x256xi1>, vector<2x256xf32>
    %cst_33 = arith.constant dense<0.000000e+00> : vector<2x256xf32>
    %148 = tpu.matmul %142, %69, %cst_33 {dimension_numbers = #tpu.dot_dimension_numbers<[1], [0], [0], [1], [0, 0, 1, 1], [], []>} : vector<2x64xf32>, vector<64x256xf32>, vector<2x256xf32> -> vector<2x256xf32>
    %149 = arith.addf %147, %148 : vector<2x256xf32>
    %150 = vector.extract_strided_slice %149 {offsets = [0, 0], sizes = [2, 192], strides = [1, 1]} : vector<2x256xf32> to vector<2x192xf32>
    %151 = arith.negf %150 : vector<2x192xf32>
    %152 = math.exp %151 : vector<2x192xf32>
    %cst_34 = arith.constant 1.000000e+00 : f32
    %153 = vector.broadcast %cst_34 : f32 to vector<2x192xf32>
    %154 = arith.addf %153, %152 : vector<2x192xf32>
    %155 = arith.divf %153, %154 : vector<2x192xf32>
    %156 = vector.extract_strided_slice %155 {offsets = [0, 0], sizes = [2, 64], strides = [1, 1]} : vector<2x192xf32> to vector<2x64xf32>
    %157 = vector.extract_strided_slice %155 {offsets = [0, 64], sizes = [2, 64], strides = [1, 1]} : vector<2x192xf32> to vector<2x64xf32>
    %158 = vector.extract_strided_slice %155 {offsets = [0, 128], sizes = [2, 64], strides = [1, 1]} : vector<2x192xf32> to vector<2x64xf32>
    %159 = vector.extract_strided_slice %149 {offsets = [0, 192], sizes = [2, 64], strides = [1, 1]} : vector<2x256xf32> to vector<2x64xf32>
    %160 = math.tanh %159 : vector<2x64xf32>
    %161 = arith.mulf %157, %140 : vector<2x64xf32>
    %162 = arith.mulf %156, %160 : vector<2x64xf32>
    %163 = arith.addf %161, %162 : vector<2x64xf32>
    %164 = math.tanh %163 : vector<2x64xf32>
    %165 = arith.mulf %158, %164 : vector<2x64xf32>
    %166 = vector.extract_strided_slice %165 {offsets = [0, 0], sizes = [2, 32], strides = [1, 1]} : vector<2x64xf32> to vector<2x32xf32>
    %167 = vector.extract_strided_slice %165 {offsets = [0, 32], sizes = [2, 32], strides = [1, 1]} : vector<2x64xf32> to vector<2x32xf32>
    %168 = vector.extract_strided_slice %73 {offsets = [8, 0], sizes = [2, 256], strides = [1, 1]} : vector<16x256xf32> to vector<2x256xf32>
    %169 = vector.extract_strided_slice %73 {offsets = [6, 0], sizes = [2, 256], strides = [1, 1]} : vector<16x256xf32> to vector<2x256xf32>
    %170 = arith.select %67, %168, %169 : vector<2x256xi1>, vector<2x256xf32>
    %cst_35 = arith.constant dense<0.000000e+00> : vector<2x256xf32>
    %171 = tpu.matmul %165, %69, %cst_35 {dimension_numbers = #tpu.dot_dimension_numbers<[1], [0], [0], [1], [0, 0, 1, 1], [], []>} : vector<2x64xf32>, vector<64x256xf32>, vector<2x256xf32> -> vector<2x256xf32>
    %172 = arith.addf %170, %171 : vector<2x256xf32>
    %173 = vector.extract_strided_slice %172 {offsets = [0, 0], sizes = [2, 192], strides = [1, 1]} : vector<2x256xf32> to vector<2x192xf32>
    %174 = arith.negf %173 : vector<2x192xf32>
    %175 = math.exp %174 : vector<2x192xf32>
    %cst_36 = arith.constant 1.000000e+00 : f32
    %176 = vector.broadcast %cst_36 : f32 to vector<2x192xf32>
    %177 = arith.addf %176, %175 : vector<2x192xf32>
    %178 = arith.divf %176, %177 : vector<2x192xf32>
    %179 = vector.extract_strided_slice %178 {offsets = [0, 0], sizes = [2, 64], strides = [1, 1]} : vector<2x192xf32> to vector<2x64xf32>
    %180 = vector.extract_strided_slice %178 {offsets = [0, 64], sizes = [2, 64], strides = [1, 1]} : vector<2x192xf32> to vector<2x64xf32>
    %181 = vector.extract_strided_slice %178 {offsets = [0, 128], sizes = [2, 64], strides = [1, 1]} : vector<2x192xf32> to vector<2x64xf32>
    %182 = vector.extract_strided_slice %172 {offsets = [0, 192], sizes = [2, 64], strides = [1, 1]} : vector<2x256xf32> to vector<2x64xf32>
    %183 = math.tanh %182 : vector<2x64xf32>
    %184 = arith.mulf %180, %163 : vector<2x64xf32>
    %185 = arith.mulf %179, %183 : vector<2x64xf32>
    %186 = arith.addf %184, %185 : vector<2x64xf32>
    %187 = math.tanh %186 : vector<2x64xf32>
    %188 = arith.mulf %181, %187 : vector<2x64xf32>
    %189 = vector.extract_strided_slice %188 {offsets = [0, 0], sizes = [2, 32], strides = [1, 1]} : vector<2x64xf32> to vector<2x32xf32>
    %190 = vector.extract_strided_slice %188 {offsets = [0, 32], sizes = [2, 32], strides = [1, 1]} : vector<2x64xf32> to vector<2x32xf32>
    %191 = vector.extract_strided_slice %73 {offsets = [10, 0], sizes = [2, 256], strides = [1, 1]} : vector<16x256xf32> to vector<2x256xf32>
    %192 = vector.extract_strided_slice %73 {offsets = [4, 0], sizes = [2, 256], strides = [1, 1]} : vector<16x256xf32> to vector<2x256xf32>
    %193 = arith.select %67, %191, %192 : vector<2x256xi1>, vector<2x256xf32>
    %cst_37 = arith.constant dense<0.000000e+00> : vector<2x256xf32>
    %194 = tpu.matmul %188, %69, %cst_37 {dimension_numbers = #tpu.dot_dimension_numbers<[1], [0], [0], [1], [0, 0, 1, 1], [], []>} : vector<2x64xf32>, vector<64x256xf32>, vector<2x256xf32> -> vector<2x256xf32>
    %195 = arith.addf %193, %194 : vector<2x256xf32>
    %196 = vector.extract_strided_slice %195 {offsets = [0, 0], sizes = [2, 192], strides = [1, 1]} : vector<2x256xf32> to vector<2x192xf32>
    %197 = arith.negf %196 : vector<2x192xf32>
    %198 = math.exp %197 : vector<2x192xf32>
    %cst_38 = arith.constant 1.000000e+00 : f32
    %199 = vector.broadcast %cst_38 : f32 to vector<2x192xf32>
    %200 = arith.addf %199, %198 : vector<2x192xf32>
    %201 = arith.divf %199, %200 : vector<2x192xf32>
    %202 = vector.extract_strided_slice %201 {offsets = [0, 0], sizes = [2, 64], strides = [1, 1]} : vector<2x192xf32> to vector<2x64xf32>
    %203 = vector.extract_strided_slice %201 {offsets = [0, 64], sizes = [2, 64], strides = [1, 1]} : vector<2x192xf32> to vector<2x64xf32>
    %204 = vector.extract_strided_slice %201 {offsets = [0, 128], sizes = [2, 64], strides = [1, 1]} : vector<2x192xf32> to vector<2x64xf32>
    %205 = vector.extract_strided_slice %195 {offsets = [0, 192], sizes = [2, 64], strides = [1, 1]} : vector<2x256xf32> to vector<2x64xf32>
    %206 = math.tanh %205 : vector<2x64xf32>
    %207 = arith.mulf %203, %186 : vector<2x64xf32>
    %208 = arith.mulf %202, %206 : vector<2x64xf32>
    %209 = arith.addf %207, %208 : vector<2x64xf32>
    %210 = math.tanh %209 : vector<2x64xf32>
    %211 = arith.mulf %204, %210 : vector<2x64xf32>
    %212 = vector.extract_strided_slice %211 {offsets = [0, 0], sizes = [2, 32], strides = [1, 1]} : vector<2x64xf32> to vector<2x32xf32>
    %213 = vector.extract_strided_slice %211 {offsets = [0, 32], sizes = [2, 32], strides = [1, 1]} : vector<2x64xf32> to vector<2x32xf32>
    %214 = vector.extract_strided_slice %73 {offsets = [12, 0], sizes = [2, 256], strides = [1, 1]} : vector<16x256xf32> to vector<2x256xf32>
    %215 = vector.extract_strided_slice %73 {offsets = [2, 0], sizes = [2, 256], strides = [1, 1]} : vector<16x256xf32> to vector<2x256xf32>
    %216 = arith.select %67, %214, %215 : vector<2x256xi1>, vector<2x256xf32>
    %cst_39 = arith.constant dense<0.000000e+00> : vector<2x256xf32>
    %217 = tpu.matmul %211, %69, %cst_39 {dimension_numbers = #tpu.dot_dimension_numbers<[1], [0], [0], [1], [0, 0, 1, 1], [], []>} : vector<2x64xf32>, vector<64x256xf32>, vector<2x256xf32> -> vector<2x256xf32>
    %218 = arith.addf %216, %217 : vector<2x256xf32>
    %219 = vector.extract_strided_slice %218 {offsets = [0, 0], sizes = [2, 192], strides = [1, 1]} : vector<2x256xf32> to vector<2x192xf32>
    %220 = arith.negf %219 : vector<2x192xf32>
    %221 = math.exp %220 : vector<2x192xf32>
    %cst_40 = arith.constant 1.000000e+00 : f32
    %222 = vector.broadcast %cst_40 : f32 to vector<2x192xf32>
    %223 = arith.addf %222, %221 : vector<2x192xf32>
    %224 = arith.divf %222, %223 : vector<2x192xf32>
    %225 = vector.extract_strided_slice %224 {offsets = [0, 0], sizes = [2, 64], strides = [1, 1]} : vector<2x192xf32> to vector<2x64xf32>
    %226 = vector.extract_strided_slice %224 {offsets = [0, 64], sizes = [2, 64], strides = [1, 1]} : vector<2x192xf32> to vector<2x64xf32>
    %227 = vector.extract_strided_slice %224 {offsets = [0, 128], sizes = [2, 64], strides = [1, 1]} : vector<2x192xf32> to vector<2x64xf32>
    %228 = vector.extract_strided_slice %218 {offsets = [0, 192], sizes = [2, 64], strides = [1, 1]} : vector<2x256xf32> to vector<2x64xf32>
    %229 = math.tanh %228 : vector<2x64xf32>
    %230 = arith.mulf %226, %209 : vector<2x64xf32>
    %231 = arith.mulf %225, %229 : vector<2x64xf32>
    %232 = arith.addf %230, %231 : vector<2x64xf32>
    %233 = math.tanh %232 : vector<2x64xf32>
    %234 = arith.mulf %227, %233 : vector<2x64xf32>
    %235 = vector.extract_strided_slice %234 {offsets = [0, 0], sizes = [2, 32], strides = [1, 1]} : vector<2x64xf32> to vector<2x32xf32>
    %236 = vector.extract_strided_slice %234 {offsets = [0, 32], sizes = [2, 32], strides = [1, 1]} : vector<2x64xf32> to vector<2x32xf32>
    %237 = vector.extract_strided_slice %73 {offsets = [14, 0], sizes = [2, 256], strides = [1, 1]} : vector<16x256xf32> to vector<2x256xf32>
    %238 = vector.extract_strided_slice %73 {offsets = [0, 0], sizes = [2, 256], strides = [1, 1]} : vector<16x256xf32> to vector<2x256xf32>
    %239 = arith.select %67, %237, %238 : vector<2x256xi1>, vector<2x256xf32>
    %cst_41 = arith.constant dense<0.000000e+00> : vector<2x256xf32>
    %240 = tpu.matmul %234, %69, %cst_41 {dimension_numbers = #tpu.dot_dimension_numbers<[1], [0], [0], [1], [0, 0, 1, 1], [], []>} : vector<2x64xf32>, vector<64x256xf32>, vector<2x256xf32> -> vector<2x256xf32>
    %241 = arith.addf %239, %240 : vector<2x256xf32>
    %242 = vector.extract_strided_slice %241 {offsets = [0, 0], sizes = [2, 192], strides = [1, 1]} : vector<2x256xf32> to vector<2x192xf32>
    %243 = arith.negf %242 : vector<2x192xf32>
    %244 = math.exp %243 : vector<2x192xf32>
    %cst_42 = arith.constant 1.000000e+00 : f32
    %245 = vector.broadcast %cst_42 : f32 to vector<2x192xf32>
    %246 = arith.addf %245, %244 : vector<2x192xf32>
    %247 = arith.divf %245, %246 : vector<2x192xf32>
    %248 = vector.extract_strided_slice %247 {offsets = [0, 0], sizes = [2, 64], strides = [1, 1]} : vector<2x192xf32> to vector<2x64xf32>
    %249 = vector.extract_strided_slice %247 {offsets = [0, 64], sizes = [2, 64], strides = [1, 1]} : vector<2x192xf32> to vector<2x64xf32>
    %250 = vector.extract_strided_slice %247 {offsets = [0, 128], sizes = [2, 64], strides = [1, 1]} : vector<2x192xf32> to vector<2x64xf32>
    %251 = vector.extract_strided_slice %241 {offsets = [0, 192], sizes = [2, 64], strides = [1, 1]} : vector<2x256xf32> to vector<2x64xf32>
    %252 = math.tanh %251 : vector<2x64xf32>
    %253 = arith.mulf %249, %232 : vector<2x64xf32>
    %254 = arith.mulf %248, %252 : vector<2x64xf32>
    %255 = arith.addf %253, %254 : vector<2x64xf32>
    %256 = math.tanh %255 : vector<2x64xf32>
    %257 = arith.mulf %250, %256 : vector<2x64xf32>
    %258 = vector.extract_strided_slice %257 {offsets = [0, 0], sizes = [2, 32], strides = [1, 1]} : vector<2x64xf32> to vector<2x32xf32>
    %259 = vector.extract_strided_slice %257 {offsets = [0, 32], sizes = [2, 32], strides = [1, 1]} : vector<2x64xf32> to vector<2x32xf32>
    %260 = tpu.concatenate %97, %120, %143, %166, %189, %212, %235, %258 in 0 : vector<2x32xf32>, vector<2x32xf32>, vector<2x32xf32>, vector<2x32xf32>, vector<2x32xf32>, vector<2x32xf32>, vector<2x32xf32>, vector<2x32xf32> -> vector<16x32xf32>
    %261 = tpu.concatenate %259, %236, %213, %190, %167, %144, %121, %98 in 0 : vector<2x32xf32>, vector<2x32xf32>, vector<2x32xf32>, vector<2x32xf32>, vector<2x32xf32>, vector<2x32xf32>, vector<2x32xf32>, vector<2x32xf32> -> vector<16x32xf32>
    %262 = tpu.concatenate %260, %261 in 1 : vector<16x32xf32>, vector<16x32xf32> -> vector<16x64xf32>
    %c0_43 = arith.constant 0 : index
    %c0_44 = arith.constant 0 : index
    %263 = vector.load %arg6[%c0_43, %c0_44] : memref<64x256xf32, #tpu.memory_space<vmem>>, vector<64x256xf32>
    %c0_45 = arith.constant 0 : index
    %c0_46 = arith.constant 0 : index
    %264 = vector.load %arg7[%c0_45, %c0_46] : memref<64x256xf32, #tpu.memory_space<vmem>>, vector<64x256xf32>
    %c0_47 = arith.constant 0 : index
    %c0_48 = arith.constant 0 : index
    %265 = vector.load %arg8[%c0_47, %c0_48] : memref<1x256xf32, #tpu.memory_space<vmem>>, vector<1x256xf32>
    %cst_49 = arith.constant dense<0.000000e+00> : vector<16x256xf32>
    %266 = tpu.matmul %262, %263, %cst_49 {dimension_numbers = #tpu.dot_dimension_numbers<[1], [0], [0], [1], [0, 0, 1, 1], [], []>} : vector<16x64xf32>, vector<64x256xf32>, vector<16x256xf32> -> vector<16x256xf32>
    %267 = vector.broadcast %265 : vector<1x256xf32> to vector<16x256xf32>
    %268 = arith.addf %266, %267 : vector<16x256xf32>
    %cst_50 = arith.constant 0.000000e+00 : f32
    %269 = vector.broadcast %cst_50 : f32 to vector<2x64xf32>
    %cst_51 = arith.constant 0.000000e+00 : f32
    %270 = vector.broadcast %cst_51 : f32 to vector<2x64xf32>
    %271 = vector.extract_strided_slice %268 {offsets = [0, 0], sizes = [2, 256], strides = [1, 1]} : vector<16x256xf32> to vector<2x256xf32>
    %272 = vector.extract_strided_slice %268 {offsets = [14, 0], sizes = [2, 256], strides = [1, 1]} : vector<16x256xf32> to vector<2x256xf32>
    %273 = arith.select %67, %271, %272 : vector<2x256xi1>, vector<2x256xf32>
    %cst_52 = arith.constant dense<0.000000e+00> : vector<2x256xf32>
    %274 = tpu.matmul %269, %264, %cst_52 {dimension_numbers = #tpu.dot_dimension_numbers<[1], [0], [0], [1], [0, 0, 1, 1], [], []>} : vector<2x64xf32>, vector<64x256xf32>, vector<2x256xf32> -> vector<2x256xf32>
    %275 = arith.addf %273, %274 : vector<2x256xf32>
    %276 = vector.extract_strided_slice %275 {offsets = [0, 0], sizes = [2, 192], strides = [1, 1]} : vector<2x256xf32> to vector<2x192xf32>
    %277 = arith.negf %276 : vector<2x192xf32>
    %278 = math.exp %277 : vector<2x192xf32>
    %cst_53 = arith.constant 1.000000e+00 : f32
    %279 = vector.broadcast %cst_53 : f32 to vector<2x192xf32>
    %280 = arith.addf %279, %278 : vector<2x192xf32>
    %281 = arith.divf %279, %280 : vector<2x192xf32>
    %282 = vector.extract_strided_slice %281 {offsets = [0, 0], sizes = [2, 64], strides = [1, 1]} : vector<2x192xf32> to vector<2x64xf32>
    %283 = vector.extract_strided_slice %281 {offsets = [0, 64], sizes = [2, 64], strides = [1, 1]} : vector<2x192xf32> to vector<2x64xf32>
    %284 = vector.extract_strided_slice %281 {offsets = [0, 128], sizes = [2, 64], strides = [1, 1]} : vector<2x192xf32> to vector<2x64xf32>
    %285 = vector.extract_strided_slice %275 {offsets = [0, 192], sizes = [2, 64], strides = [1, 1]} : vector<2x256xf32> to vector<2x64xf32>
    %286 = math.tanh %285 : vector<2x64xf32>
    %287 = arith.mulf %283, %270 : vector<2x64xf32>
    %288 = arith.mulf %282, %286 : vector<2x64xf32>
    %289 = arith.addf %287, %288 : vector<2x64xf32>
    %290 = math.tanh %289 : vector<2x64xf32>
    %291 = arith.mulf %284, %290 : vector<2x64xf32>
    %292 = vector.extract_strided_slice %268 {offsets = [2, 0], sizes = [2, 256], strides = [1, 1]} : vector<16x256xf32> to vector<2x256xf32>
    %293 = vector.extract_strided_slice %268 {offsets = [12, 0], sizes = [2, 256], strides = [1, 1]} : vector<16x256xf32> to vector<2x256xf32>
    %294 = arith.select %67, %292, %293 : vector<2x256xi1>, vector<2x256xf32>
    %cst_54 = arith.constant dense<0.000000e+00> : vector<2x256xf32>
    %295 = tpu.matmul %291, %264, %cst_54 {dimension_numbers = #tpu.dot_dimension_numbers<[1], [0], [0], [1], [0, 0, 1, 1], [], []>} : vector<2x64xf32>, vector<64x256xf32>, vector<2x256xf32> -> vector<2x256xf32>
    %296 = arith.addf %294, %295 : vector<2x256xf32>
    %297 = vector.extract_strided_slice %296 {offsets = [0, 0], sizes = [2, 192], strides = [1, 1]} : vector<2x256xf32> to vector<2x192xf32>
    %298 = arith.negf %297 : vector<2x192xf32>
    %299 = math.exp %298 : vector<2x192xf32>
    %cst_55 = arith.constant 1.000000e+00 : f32
    %300 = vector.broadcast %cst_55 : f32 to vector<2x192xf32>
    %301 = arith.addf %300, %299 : vector<2x192xf32>
    %302 = arith.divf %300, %301 : vector<2x192xf32>
    %303 = vector.extract_strided_slice %302 {offsets = [0, 0], sizes = [2, 64], strides = [1, 1]} : vector<2x192xf32> to vector<2x64xf32>
    %304 = vector.extract_strided_slice %302 {offsets = [0, 64], sizes = [2, 64], strides = [1, 1]} : vector<2x192xf32> to vector<2x64xf32>
    %305 = vector.extract_strided_slice %302 {offsets = [0, 128], sizes = [2, 64], strides = [1, 1]} : vector<2x192xf32> to vector<2x64xf32>
    %306 = vector.extract_strided_slice %296 {offsets = [0, 192], sizes = [2, 64], strides = [1, 1]} : vector<2x256xf32> to vector<2x64xf32>
    %307 = math.tanh %306 : vector<2x64xf32>
    %308 = arith.mulf %304, %289 : vector<2x64xf32>
    %309 = arith.mulf %303, %307 : vector<2x64xf32>
    %310 = arith.addf %308, %309 : vector<2x64xf32>
    %311 = math.tanh %310 : vector<2x64xf32>
    %312 = arith.mulf %305, %311 : vector<2x64xf32>
    %313 = vector.extract_strided_slice %268 {offsets = [4, 0], sizes = [2, 256], strides = [1, 1]} : vector<16x256xf32> to vector<2x256xf32>
    %314 = vector.extract_strided_slice %268 {offsets = [10, 0], sizes = [2, 256], strides = [1, 1]} : vector<16x256xf32> to vector<2x256xf32>
    %315 = arith.select %67, %313, %314 : vector<2x256xi1>, vector<2x256xf32>
    %cst_56 = arith.constant dense<0.000000e+00> : vector<2x256xf32>
    %316 = tpu.matmul %312, %264, %cst_56 {dimension_numbers = #tpu.dot_dimension_numbers<[1], [0], [0], [1], [0, 0, 1, 1], [], []>} : vector<2x64xf32>, vector<64x256xf32>, vector<2x256xf32> -> vector<2x256xf32>
    %317 = arith.addf %315, %316 : vector<2x256xf32>
    %318 = vector.extract_strided_slice %317 {offsets = [0, 0], sizes = [2, 192], strides = [1, 1]} : vector<2x256xf32> to vector<2x192xf32>
    %319 = arith.negf %318 : vector<2x192xf32>
    %320 = math.exp %319 : vector<2x192xf32>
    %cst_57 = arith.constant 1.000000e+00 : f32
    %321 = vector.broadcast %cst_57 : f32 to vector<2x192xf32>
    %322 = arith.addf %321, %320 : vector<2x192xf32>
    %323 = arith.divf %321, %322 : vector<2x192xf32>
    %324 = vector.extract_strided_slice %323 {offsets = [0, 0], sizes = [2, 64], strides = [1, 1]} : vector<2x192xf32> to vector<2x64xf32>
    %325 = vector.extract_strided_slice %323 {offsets = [0, 64], sizes = [2, 64], strides = [1, 1]} : vector<2x192xf32> to vector<2x64xf32>
    %326 = vector.extract_strided_slice %323 {offsets = [0, 128], sizes = [2, 64], strides = [1, 1]} : vector<2x192xf32> to vector<2x64xf32>
    %327 = vector.extract_strided_slice %317 {offsets = [0, 192], sizes = [2, 64], strides = [1, 1]} : vector<2x256xf32> to vector<2x64xf32>
    %328 = math.tanh %327 : vector<2x64xf32>
    %329 = arith.mulf %325, %310 : vector<2x64xf32>
    %330 = arith.mulf %324, %328 : vector<2x64xf32>
    %331 = arith.addf %329, %330 : vector<2x64xf32>
    %332 = math.tanh %331 : vector<2x64xf32>
    %333 = arith.mulf %326, %332 : vector<2x64xf32>
    %334 = vector.extract_strided_slice %268 {offsets = [6, 0], sizes = [2, 256], strides = [1, 1]} : vector<16x256xf32> to vector<2x256xf32>
    %335 = vector.extract_strided_slice %268 {offsets = [8, 0], sizes = [2, 256], strides = [1, 1]} : vector<16x256xf32> to vector<2x256xf32>
    %336 = arith.select %67, %334, %335 : vector<2x256xi1>, vector<2x256xf32>
    %cst_58 = arith.constant dense<0.000000e+00> : vector<2x256xf32>
    %337 = tpu.matmul %333, %264, %cst_58 {dimension_numbers = #tpu.dot_dimension_numbers<[1], [0], [0], [1], [0, 0, 1, 1], [], []>} : vector<2x64xf32>, vector<64x256xf32>, vector<2x256xf32> -> vector<2x256xf32>
    %338 = arith.addf %336, %337 : vector<2x256xf32>
    %339 = vector.extract_strided_slice %338 {offsets = [0, 0], sizes = [2, 192], strides = [1, 1]} : vector<2x256xf32> to vector<2x192xf32>
    %340 = arith.negf %339 : vector<2x192xf32>
    %341 = math.exp %340 : vector<2x192xf32>
    %cst_59 = arith.constant 1.000000e+00 : f32
    %342 = vector.broadcast %cst_59 : f32 to vector<2x192xf32>
    %343 = arith.addf %342, %341 : vector<2x192xf32>
    %344 = arith.divf %342, %343 : vector<2x192xf32>
    %345 = vector.extract_strided_slice %344 {offsets = [0, 0], sizes = [2, 64], strides = [1, 1]} : vector<2x192xf32> to vector<2x64xf32>
    %346 = vector.extract_strided_slice %344 {offsets = [0, 64], sizes = [2, 64], strides = [1, 1]} : vector<2x192xf32> to vector<2x64xf32>
    %347 = vector.extract_strided_slice %344 {offsets = [0, 128], sizes = [2, 64], strides = [1, 1]} : vector<2x192xf32> to vector<2x64xf32>
    %348 = vector.extract_strided_slice %338 {offsets = [0, 192], sizes = [2, 64], strides = [1, 1]} : vector<2x256xf32> to vector<2x64xf32>
    %349 = math.tanh %348 : vector<2x64xf32>
    %350 = arith.mulf %346, %331 : vector<2x64xf32>
    %351 = arith.mulf %345, %349 : vector<2x64xf32>
    %352 = arith.addf %350, %351 : vector<2x64xf32>
    %353 = math.tanh %352 : vector<2x64xf32>
    %354 = arith.mulf %347, %353 : vector<2x64xf32>
    %355 = vector.extract_strided_slice %268 {offsets = [8, 0], sizes = [2, 256], strides = [1, 1]} : vector<16x256xf32> to vector<2x256xf32>
    %356 = vector.extract_strided_slice %268 {offsets = [6, 0], sizes = [2, 256], strides = [1, 1]} : vector<16x256xf32> to vector<2x256xf32>
    %357 = arith.select %67, %355, %356 : vector<2x256xi1>, vector<2x256xf32>
    %cst_60 = arith.constant dense<0.000000e+00> : vector<2x256xf32>
    %358 = tpu.matmul %354, %264, %cst_60 {dimension_numbers = #tpu.dot_dimension_numbers<[1], [0], [0], [1], [0, 0, 1, 1], [], []>} : vector<2x64xf32>, vector<64x256xf32>, vector<2x256xf32> -> vector<2x256xf32>
    %359 = arith.addf %357, %358 : vector<2x256xf32>
    %360 = vector.extract_strided_slice %359 {offsets = [0, 0], sizes = [2, 192], strides = [1, 1]} : vector<2x256xf32> to vector<2x192xf32>
    %361 = arith.negf %360 : vector<2x192xf32>
    %362 = math.exp %361 : vector<2x192xf32>
    %cst_61 = arith.constant 1.000000e+00 : f32
    %363 = vector.broadcast %cst_61 : f32 to vector<2x192xf32>
    %364 = arith.addf %363, %362 : vector<2x192xf32>
    %365 = arith.divf %363, %364 : vector<2x192xf32>
    %366 = vector.extract_strided_slice %365 {offsets = [0, 0], sizes = [2, 64], strides = [1, 1]} : vector<2x192xf32> to vector<2x64xf32>
    %367 = vector.extract_strided_slice %365 {offsets = [0, 64], sizes = [2, 64], strides = [1, 1]} : vector<2x192xf32> to vector<2x64xf32>
    %368 = vector.extract_strided_slice %365 {offsets = [0, 128], sizes = [2, 64], strides = [1, 1]} : vector<2x192xf32> to vector<2x64xf32>
    %369 = vector.extract_strided_slice %359 {offsets = [0, 192], sizes = [2, 64], strides = [1, 1]} : vector<2x256xf32> to vector<2x64xf32>
    %370 = math.tanh %369 : vector<2x64xf32>
    %371 = arith.mulf %367, %352 : vector<2x64xf32>
    %372 = arith.mulf %366, %370 : vector<2x64xf32>
    %373 = arith.addf %371, %372 : vector<2x64xf32>
    %374 = math.tanh %373 : vector<2x64xf32>
    %375 = arith.mulf %368, %374 : vector<2x64xf32>
    %376 = vector.extract_strided_slice %268 {offsets = [10, 0], sizes = [2, 256], strides = [1, 1]} : vector<16x256xf32> to vector<2x256xf32>
    %377 = vector.extract_strided_slice %268 {offsets = [4, 0], sizes = [2, 256], strides = [1, 1]} : vector<16x256xf32> to vector<2x256xf32>
    %378 = arith.select %67, %376, %377 : vector<2x256xi1>, vector<2x256xf32>
    %cst_62 = arith.constant dense<0.000000e+00> : vector<2x256xf32>
    %379 = tpu.matmul %375, %264, %cst_62 {dimension_numbers = #tpu.dot_dimension_numbers<[1], [0], [0], [1], [0, 0, 1, 1], [], []>} : vector<2x64xf32>, vector<64x256xf32>, vector<2x256xf32> -> vector<2x256xf32>
    %380 = arith.addf %378, %379 : vector<2x256xf32>
    %381 = vector.extract_strided_slice %380 {offsets = [0, 0], sizes = [2, 192], strides = [1, 1]} : vector<2x256xf32> to vector<2x192xf32>
    %382 = arith.negf %381 : vector<2x192xf32>
    %383 = math.exp %382 : vector<2x192xf32>
    %cst_63 = arith.constant 1.000000e+00 : f32
    %384 = vector.broadcast %cst_63 : f32 to vector<2x192xf32>
    %385 = arith.addf %384, %383 : vector<2x192xf32>
    %386 = arith.divf %384, %385 : vector<2x192xf32>
    %387 = vector.extract_strided_slice %386 {offsets = [0, 0], sizes = [2, 64], strides = [1, 1]} : vector<2x192xf32> to vector<2x64xf32>
    %388 = vector.extract_strided_slice %386 {offsets = [0, 64], sizes = [2, 64], strides = [1, 1]} : vector<2x192xf32> to vector<2x64xf32>
    %389 = vector.extract_strided_slice %386 {offsets = [0, 128], sizes = [2, 64], strides = [1, 1]} : vector<2x192xf32> to vector<2x64xf32>
    %390 = vector.extract_strided_slice %380 {offsets = [0, 192], sizes = [2, 64], strides = [1, 1]} : vector<2x256xf32> to vector<2x64xf32>
    %391 = math.tanh %390 : vector<2x64xf32>
    %392 = arith.mulf %388, %373 : vector<2x64xf32>
    %393 = arith.mulf %387, %391 : vector<2x64xf32>
    %394 = arith.addf %392, %393 : vector<2x64xf32>
    %395 = math.tanh %394 : vector<2x64xf32>
    %396 = arith.mulf %389, %395 : vector<2x64xf32>
    %397 = vector.extract_strided_slice %268 {offsets = [12, 0], sizes = [2, 256], strides = [1, 1]} : vector<16x256xf32> to vector<2x256xf32>
    %398 = vector.extract_strided_slice %268 {offsets = [2, 0], sizes = [2, 256], strides = [1, 1]} : vector<16x256xf32> to vector<2x256xf32>
    %399 = arith.select %67, %397, %398 : vector<2x256xi1>, vector<2x256xf32>
    %cst_64 = arith.constant dense<0.000000e+00> : vector<2x256xf32>
    %400 = tpu.matmul %396, %264, %cst_64 {dimension_numbers = #tpu.dot_dimension_numbers<[1], [0], [0], [1], [0, 0, 1, 1], [], []>} : vector<2x64xf32>, vector<64x256xf32>, vector<2x256xf32> -> vector<2x256xf32>
    %401 = arith.addf %399, %400 : vector<2x256xf32>
    %402 = vector.extract_strided_slice %401 {offsets = [0, 0], sizes = [2, 192], strides = [1, 1]} : vector<2x256xf32> to vector<2x192xf32>
    %403 = arith.negf %402 : vector<2x192xf32>
    %404 = math.exp %403 : vector<2x192xf32>
    %cst_65 = arith.constant 1.000000e+00 : f32
    %405 = vector.broadcast %cst_65 : f32 to vector<2x192xf32>
    %406 = arith.addf %405, %404 : vector<2x192xf32>
    %407 = arith.divf %405, %406 : vector<2x192xf32>
    %408 = vector.extract_strided_slice %407 {offsets = [0, 0], sizes = [2, 64], strides = [1, 1]} : vector<2x192xf32> to vector<2x64xf32>
    %409 = vector.extract_strided_slice %407 {offsets = [0, 64], sizes = [2, 64], strides = [1, 1]} : vector<2x192xf32> to vector<2x64xf32>
    %410 = vector.extract_strided_slice %407 {offsets = [0, 128], sizes = [2, 64], strides = [1, 1]} : vector<2x192xf32> to vector<2x64xf32>
    %411 = vector.extract_strided_slice %401 {offsets = [0, 192], sizes = [2, 64], strides = [1, 1]} : vector<2x256xf32> to vector<2x64xf32>
    %412 = math.tanh %411 : vector<2x64xf32>
    %413 = arith.mulf %409, %394 : vector<2x64xf32>
    %414 = arith.mulf %408, %412 : vector<2x64xf32>
    %415 = arith.addf %413, %414 : vector<2x64xf32>
    %416 = math.tanh %415 : vector<2x64xf32>
    %417 = arith.mulf %410, %416 : vector<2x64xf32>
    %418 = vector.extract_strided_slice %268 {offsets = [14, 0], sizes = [2, 256], strides = [1, 1]} : vector<16x256xf32> to vector<2x256xf32>
    %419 = vector.extract_strided_slice %268 {offsets = [0, 0], sizes = [2, 256], strides = [1, 1]} : vector<16x256xf32> to vector<2x256xf32>
    %420 = arith.select %67, %418, %419 : vector<2x256xi1>, vector<2x256xf32>
    %cst_66 = arith.constant dense<0.000000e+00> : vector<2x256xf32>
    %421 = tpu.matmul %417, %264, %cst_66 {dimension_numbers = #tpu.dot_dimension_numbers<[1], [0], [0], [1], [0, 0, 1, 1], [], []>} : vector<2x64xf32>, vector<64x256xf32>, vector<2x256xf32> -> vector<2x256xf32>
    %422 = arith.addf %420, %421 : vector<2x256xf32>
    %423 = vector.extract_strided_slice %422 {offsets = [0, 0], sizes = [2, 192], strides = [1, 1]} : vector<2x256xf32> to vector<2x192xf32>
    %424 = arith.negf %423 : vector<2x192xf32>
    %425 = math.exp %424 : vector<2x192xf32>
    %cst_67 = arith.constant 1.000000e+00 : f32
    %426 = vector.broadcast %cst_67 : f32 to vector<2x192xf32>
    %427 = arith.addf %426, %425 : vector<2x192xf32>
    %428 = arith.divf %426, %427 : vector<2x192xf32>
    %429 = vector.extract_strided_slice %428 {offsets = [0, 0], sizes = [2, 64], strides = [1, 1]} : vector<2x192xf32> to vector<2x64xf32>
    %430 = vector.extract_strided_slice %428 {offsets = [0, 64], sizes = [2, 64], strides = [1, 1]} : vector<2x192xf32> to vector<2x64xf32>
    %431 = vector.extract_strided_slice %428 {offsets = [0, 128], sizes = [2, 64], strides = [1, 1]} : vector<2x192xf32> to vector<2x64xf32>
    %432 = vector.extract_strided_slice %422 {offsets = [0, 192], sizes = [2, 64], strides = [1, 1]} : vector<2x256xf32> to vector<2x64xf32>
    %433 = math.tanh %432 : vector<2x64xf32>
    %434 = arith.mulf %430, %415 : vector<2x64xf32>
    %435 = arith.mulf %429, %433 : vector<2x64xf32>
    %436 = arith.addf %434, %435 : vector<2x64xf32>
    %437 = math.tanh %436 : vector<2x64xf32>
    %438 = arith.mulf %431, %437 : vector<2x64xf32>
    %c0_68 = arith.constant 0 : index
    %c0_69 = arith.constant 0 : index
    %439 = vector.load %arg9[%c0_68, %c0_69] : memref<64x2xf32, #tpu.memory_space<vmem>>, vector<64x2xf32>
    %cst_70 = arith.constant dense<0.000000e+00> : vector<2x2xf32>
    %440 = tpu.matmul %438, %439, %cst_70 {dimension_numbers = #tpu.dot_dimension_numbers<[1], [0], [0], [1], [0, 0, 1, 1], [], []>} : vector<2x64xf32>, vector<64x2xf32>, vector<2x2xf32> -> vector<2x2xf32>
    %c0_71 = arith.constant 0 : index
    %c0_72 = arith.constant 0 : index
    %441 = vector.load %arg10[%c0_71, %c0_72] : memref<1x2xf32, #tpu.memory_space<vmem>>, vector<1x2xf32>
    %442 = vector.broadcast %441 : vector<1x2xf32> to vector<2x2xf32>
    %443 = arith.addf %440, %442 : vector<2x2xf32>
    %c0_73 = arith.constant 0 : index
    %c0_74 = arith.constant 0 : index
    %444 = vector.load %arg11[%c0_73, %c0_74] : memref<2x2xf32, #tpu.memory_space<vmem>>, vector<2x2xf32>
    tpu.vector_store %arg11[%c0_73, %c0_74], %443 {strides = array<i32>} : memref<2x2xf32, #tpu.memory_space<vmem>>, vector<2x2xf32>,
    return
  }
  func.func @transform_0(%arg0: i32, %arg1: memref<16xi32, #tpu.memory_space<smem>>) -> (i32, i32) {
    %c0_i32 = arith.constant 0 : i32
    %c0_i32_0 = arith.constant 0 : i32
    %c0_i32_1 = arith.constant 0 : i32
    return %c0_i32, %c0_i32_0 : i32, i32
  }
  func.func @transform_1(%arg0: i32, %arg1: memref<16xi32, #tpu.memory_space<smem>>) -> (i32, i32) {
    %c0_i32 = arith.constant 0 : i32
    %c0_i32_0 = arith.constant 0 : i32
    %c0_i32_1 = arith.constant 0 : i32
    return %c0_i32, %c0_i32_0 : i32, i32
  }
  func.func @transform_2(%arg0: i32, %arg1: memref<16xi32, #tpu.memory_space<smem>>) -> (i32, i32) {
    %c0_i32 = arith.constant 0 : i32
    %c0_i32_0 = arith.constant 0 : i32
    %c0_i32_1 = arith.constant 0 : i32
    return %c0_i32, %c0_i32_0 : i32, i32
  }
  func.func @transform_3(%arg0: i32, %arg1: memref<16xi32, #tpu.memory_space<smem>>) -> (i32, i32) {
    %c0_i32 = arith.constant 0 : i32
    %c0_i32_0 = arith.constant 0 : i32
    %c0_i32_1 = arith.constant 0 : i32
    return %c0_i32, %c0_i32_0 : i32, i32
  }
  func.func @transform_4(%arg0: i32, %arg1: memref<16xi32, #tpu.memory_space<smem>>) -> (i32, i32) {
    %c0_i32 = arith.constant 0 : i32
    %c0_i32_0 = arith.constant 0 : i32
    %c0_i32_1 = arith.constant 0 : i32
    return %c0_i32, %c0_i32_0 : i32, i32
  }
  func.func @transform_5(%arg0: i32, %arg1: memref<16xi32, #tpu.memory_space<smem>>) -> (i32, i32) {
    %c0_i32 = arith.constant 0 : i32
    %c0_i32_0 = arith.constant 0 : i32
    %c0_i32_1 = arith.constant 0 : i32
    return %c0_i32, %c0_i32_0 : i32, i32
  }
  func.func @transform_6(%arg0: i32, %arg1: memref<16xi32, #tpu.memory_space<smem>>) -> (i32, i32) {
    %c0_i32 = arith.constant 0 : i32
    %c0_i32_0 = arith.constant 0 : i32
    %c0_i32_1 = arith.constant 0 : i32
    return %c0_i32, %c0_i32_0 : i32, i32
  }
  func.func @transform_7(%arg0: i32, %arg1: memref<16xi32, #tpu.memory_space<smem>>) -> (i32, i32) {
    %c0_i32 = arith.constant 0 : i32
    %c0_i32_0 = arith.constant 0 : i32
    %c0_i32_1 = arith.constant 0 : i32
    return %c0_i32, %c0_i32_0 : i32, i32
  }
  func.func @transform_8(%arg0: i32, %arg1: memref<16xi32, #tpu.memory_space<smem>>) -> (i32, i32) {
    %c0_i32 = arith.constant 0 : i32
    %c0_i32_0 = arith.constant 0 : i32
    %c0_i32_1 = arith.constant 0 : i32
    return %c0_i32, %c0_i32_0 : i32, i32
  }
  func.func @transform_9(%arg0: i32, %arg1: memref<16xi32, #tpu.memory_space<smem>>) -> (i32, i32) {
    %c0_i32 = arith.constant 0 : i32
    %c0_i32_0 = arith.constant 0 : i32
    %c0_i32_1 = arith.constant 0 : i32
    return %c0_i32, %c0_i32_0 : i32, i32
  }
}

</mosaic_0001>

<llo_original>
// kernel: sentiment_forward.1
$region0: #{sentiment_forward.1}
  #allocation0 [shape = 'u32[]', space=smem, size = 0x4, offset = 0x4, fixed_abs, tag = 'smem constant byte address 0x4 - core index']
  #allocation1 [shape = 'u32[144,128]{1,0:T(1,128)}', space=vmem, size = 0x12000, scoped, tag = 'internal scratch']
  #allocation2 [shape = 's32[1]{0}', space=sflag, size = 0x4, scoped, tag = 'scoped memory for sentiment_forward.1']
  #allocation3 [shape = 'u8[512]{0}', space=smem, size = 0x200, scoped, tag = 'prefetched SMEM operand 0']
  %s0 = inlined_call_operand.vmem [shape: s32[16], index: 0, kind: input, shape index: {}]
  %s1 = inlined_call_operand.vmem [shape: f32[50,32], index: 1, kind: input, shape index: {}]
  %s2 = inlined_call_operand.vmem [shape: f32[32,256], index: 2, kind: input, shape index: {}]
  %s3 = inlined_call_operand.vmem [shape: f32[64,256], index: 3, kind: input, shape index: {}]
  %s4 = inlined_call_operand.vmem [shape: f32[1,256], index: 4, kind: input, shape index: {}]
  %s5 = inlined_call_operand.vmem [shape: f32[64,256], index: 5, kind: input, shape index: {}]
  %s6 = inlined_call_operand.vmem [shape: f32[64,256], index: 6, kind: input, shape index: {}]
  %s7 = inlined_call_operand.vmem [shape: f32[1,256], index: 7, kind: input, shape index: {}]
  %s8 = inlined_call_operand.vmem [shape: f32[64,2], index: 8, kind: input, shape index: {}]
  %s9 = inlined_call_operand.vmem [shape: f32[1,2], index: 9, kind: input, shape index: {}]
  %s10 = inlined_call_operand.hbm [shape: f32[2,2], index: 10, kind: output, shape index: {}]
  %s11 = sld [smem:[#allocation0]]
  $region46: #{sentiment_forward.1} parent=0
    _
  %s13 = ssub.s32 1, %s11
  %s14 = scalar_select 0, %s13, %s11
  %s15 = sshll.u32 %s0, 4
  %s16 = int_to_ptr.vmem [resolvable:$true] %s15
  %18 = dma.vmem_to_smem %s16, 16, [#allocation3], [#allocation2]
  %19 = dma.done [#allocation2], 16
  %20 = sfence
  $region1: #{sentiment_forward.1} parent=0
    #allocation4 [shape = 'u8[1024]{0}', space=vmem, size = 0x400, scoped, tag = 'output window, operand 0, single buffered']
    #allocation5 [shape = 's32[1]{0}', space=sflag, size = 0x4, scoped, tag = 'scoped memory for sentiment_forward.1']
    %21 = vsyncpa [#allocation5], 0
    // Predicated region
    $region2: #{sentiment_forward.1} parent=1 // pred_check
      _
    $region3: #{sentiment_forward.1} parent=1 // pred_check_branch
      %23 = sbr.rel (0) target = $region5
    $region4: #{sentiment_forward.1} parent=1 // pred_region
      _
    $region5: #{sentiment_forward.1} parent=1 // pred_fallthru
      _
    // Predicated region
    $region6: #{sentiment_forward.1} parent=1 // pred_check
      _
    $region7: #{sentiment_forward.1} parent=1 // pred_check_branch
      %25 = sbr.rel (0) target = $region9
    $region8: #{sentiment_forward.1} parent=1 // pred_region
      _
    $region9: #{sentiment_forward.1} parent=1 // pred_fallthru
      _
    // Predicated region
    $region10: #{sentiment_forward.1} parent=1 // pred_check
      _
    $region11: #{sentiment_forward.1} parent=1 // pred_check_branch
      %27 = sbr.rel (0) target = $region13
    $region12: #{sentiment_forward.1} parent=1 // pred_region
      _
    $region13: #{sentiment_forward.1} parent=1 // pred_fallthru
      _
    // Predicated region
    $region14: #{sentiment_forward.1} parent=1 // pred_check
      _
    $region15: #{sentiment_forward.1} parent=1 // pred_check_branch
      %29 = sbr.rel (0) target = $region17
    $region16: #{sentiment_forward.1} parent=1 // pred_region
      _
    $region17: #{sentiment_forward.1} parent=1 // pred_fallthru
      _
    // Predicated region
    $region18: #{sentiment_forward.1} parent=1 // pred_check
      _
    $region19: #{sentiment_forward.1} parent=1 // pred_check_branch
      %31 = sbr.rel (0) target = $region21
    $region20: #{sentiment_forward.1} parent=1 // pred_region
      _
    $region21: #{sentiment_forward.1} parent=1 // pred_fallthru
      _
    // Predicated region
    $region22: #{sentiment_forward.1} parent=1 // pred_check
      _
    $region23: #{sentiment_forward.1} parent=1 // pred_check_branch
      %33 = sbr.rel (0) target = $region25
    $region24: #{sentiment_forward.1} parent=1 // pred_region
      _
    $region25: #{sentiment_forward.1} parent=1 // pred_fallthru
      _
    // Predicated region
    $region26: #{sentiment_forward.1} parent=1 // pred_check
      _
    $region27: #{sentiment_forward.1} parent=1 // pred_check_branch
      %35 = sbr.rel (0) target = $region29
    $region28: #{sentiment_forward.1} parent=1 // pred_region
      _
    $region29: #{sentiment_forward.1} parent=1 // pred_fallthru
      _
    // Predicated region
    $region30: #{sentiment_forward.1} parent=1 // pred_check
      _
    $region31: #{sentiment_forward.1} parent=1 // pred_check_branch
      %37 = sbr.rel (0) target = $region33
    $region32: #{sentiment_forward.1} parent=1 // pred_region
      _
    $region33: #{sentiment_forward.1} parent=1 // pred_fallthru
      _
    // Predicated region
    $region34: #{sentiment_forward.1} parent=1 // pred_check
      _
    $region35: #{sentiment_forward.1} parent=1 // pred_check_branch
      %39 = sbr.rel (0) target = $region37
    $region36: #{sentiment_forward.1} parent=1 // pred_region
      _
    $region37: #{sentiment_forward.1} parent=1 // pred_fallthru
      _
    %s40 = sld [smem:[#allocation3]]
    %s41 = scalar_lea.vmem %s1, %s40
    %v42 = vld [vmem:[%s41] sm:$0x1]
    %s43 = sld [smem:[#allocation3 + $0x1]]
    %s44 = scalar_lea.vmem %s1, %s43
    %v45 = vld [vmem:[%s44] sm:$0x1]
    %s46 = sld [smem:[#allocation3 + $0x2]]
    %s47 = scalar_lea.vmem %s1, %s46
    %v48 = vld [vmem:[%s47] sm:$0x1]
    %s49 = sld [smem:[#allocation3 + $0x3]]
    %s50 = scalar_lea.vmem %s1, %s49
    %v51 = vld [vmem:[%s50] sm:$0x1]
    %s52 = sld [smem:[#allocation3 + $0x4]]
    %s53 = scalar_lea.vmem %s1, %s52
    %v54 = vld [vmem:[%s53] sm:$0x1]
    %s55 = sld [smem:[#allocation3 + $0x5]]
    %s56 = scalar_lea.vmem %s1, %s55
    %v57 = vld [vmem:[%s56] sm:$0x1]
    %s58 = sld [smem:[#allocation3 + $0x6]]
    %s59 = scalar_lea.vmem %s1, %s58
    %v60 = vld [vmem:[%s59] sm:$0x1]
    %s61 = sld [smem:[#allocation3 + $0x7]]
    %s62 = scalar_lea.vmem %s1, %s61
    %v63 = vld [vmem:[%s62] sm:$0x1]
    %s64 = sld [smem:[#allocation3 + $0x8]]
    %s65 = scalar_lea.vmem %s1, %s64
    %v66 = vld [vmem:[%s65] sm:$0x1]
    %s67 = sld [smem:[#allocation3 + $0x9]]
    %s68 = scalar_lea.vmem %s1, %s67
    %v69 = vld [vmem:[%s68] sm:$0x1]
    %s70 = sld [smem:[#allocation3 + $0xa]]
    %s71 = scalar_lea.vmem %s1, %s70
    %v72 = vld [vmem:[%s71] sm:$0x1]
    %s73 = sld [smem:[#allocation3 + $0xb]]
    %s74 = scalar_lea.vmem %s1, %s73
    %v75 = vld [vmem:[%s74] sm:$0x1]
    %s76 = sld [smem:[#allocation3 + $0xc]]
    %s77 = scalar_lea.vmem %s1, %s76
    %v78 = vld [vmem:[%s77] sm:$0x1]
    %s79 = sld [smem:[#allocation3 + $0xd]]
    %s80 = scalar_lea.vmem %s1, %s79
    %v81 = vld [vmem:[%s80] sm:$0x1]
    %s82 = sld [smem:[#allocation3 + $0xe]]
    %s83 = scalar_lea.vmem %s1, %s82
    %v84 = vld [vmem:[%s83] sm:$0x1]
    %s85 = sld [smem:[#allocation3 + $0xf]]
    %s86 = scalar_lea.vmem %s1, %s85
    %v87 = vld [vmem:[%s86] sm:$0x1]
    %v89 = vrot.slane %v45, 7
    %v92 = vrot.slane %v48, 6
    %v95 = vrot.slane %v51, 5
    %v98 = vrot.slane %v54, 4
    %v101 = vrot.slane %v57, 3
    %v104 = vrot.slane %v60, 2
    %v107 = vrot.slane %v63, 1
    %v110 = vrot.slane %v69, 7
    %v113 = vrot.slane %v72, 6
    %v116 = vrot.slane %v75, 5
    %v119 = vrot.slane %v78, 4
    %v122 = vrot.slane %v81, 3
    %v125 = vrot.slane %v84, 2
    %v128 = vrot.slane %v87, 1
    %vm130 = vcmask 1040384
    %v131 = vsel %vm130, %v42, %v89
    %vm132 = vcmask 1041408
    %v133 = vsel %vm132, %v131, %v92
    %vm134 = vcmask 1042432
    %v135 = vsel %vm134, %v133, %v95
    %vm136 = vcmask 1043456
    %v137 = vsel %vm136, %v135, %v98
    %vm138 = vcmask 1044480
    %v139 = vsel %vm138, %v137, %v101
    %vm140 = vcmask 1045504
    %v141 = vsel %vm140, %v139, %v104
    %vm142 = vcmask 1046528
    %v143 = vsel %vm142, %v141, %v107
    %v144 = vsel %vm130, %v66, %v110
    %v145 = vsel %vm132, %v144, %v113
    %v146 = vsel %vm134, %v145, %v116
    %v147 = vsel %vm136, %v146, %v119
    %v148 = vsel %vm138, %v147, %v122
    %v149 = vsel %vm140, %v148, %v125
    %v150 = vsel %vm142, %v149, %v128
    %v151 = vlaneseq
    %v152 = vand.u32 %v151, 127
    %v153 = vadd.s32 %v152, 128
    %vm154 = vcmp.lt.s32.totalorder %v152, 0
    %v155 = vsub.s32 0, %v152
    %v156 = vsel %vm154, %v155, %v152
    %v157 = vshrl.u32 %v156, 6
    %v158 = vand.u32 %v156, 63
    %v159 = vsub.s32 0, %v158
    %v160 = vsel %vm154, %v159, %v158
    %vm161 = vcmp.lt.s32.totalorder %v153, 0
    %v162 = vsub.s32 0, %v153
    %v163 = vsel %vm161, %v162, %v153
    %v164 = vshrl.u32 %v163, 6
    %v165 = vand.u32 %v163, 63
    %v166 = vsub.s32 0, %v165
    %v167 = vsel %vm161, %v166, %v165
    %vm168 = vcmp.ne.s32.totalorder %v160, 0
    %vm169 = vcmp.ne.s32.totalorder %v167, 0
    %vm170 = vcmp.lt.s32.totalorder %v160, 0
    %vm171 = vcmp.lt.s32.totalorder %v167, 0
    %vm172 = vmand %vm170, %vm168
    %vm173 = vmand %vm171, %vm169
    %v174 = vadd.s32 %v160, 64
    %v175 = vadd.s32 %v167, 64
    %v176 = vsel %vm172, %v174, %v160
    %v177 = vsel %vm173, %v175, %v167
    %vm178 = vcmp.lt.s32.totalorder %v176, 32
    %vm179 = vcmp.lt.s32.totalorder %v177, 32
    %v180 = vld [vmem:[%s2] sm:$0xff]
    %v181 = vld [vmem:[%s2 + $0x8] sm:$0xff]
    %v182 = vld [vmem:[%s2 + $0x10] sm:$0xff]
    %v183 = vld [vmem:[%s2 + $0x18] sm:$0xff]
    %v184 = vld [vmem:[%s2 + $0x20] sm:$0xff]
    %v185 = vld [vmem:[%s2 + $0x28] sm:$0xff]
    %v186 = vld [vmem:[%s2 + $0x30] sm:$0xff]
    %v187 = vld [vmem:[%s2 + $0x38] sm:$0xff]
    %v188 = vld [vmem:[%s3] sm:$0xff]
    %v189 = vld [vmem:[%s3 + $0x8] sm:$0xff]
    %v190 = vld [vmem:[%s3 + $0x10] sm:$0xff]
    %v191 = vld [vmem:[%s3 + $0x18] sm:$0xff]
    %v192 = vld [vmem:[%s3 + $0x20] sm:$0xff]
    %v193 = vld [vmem:[%s3 + $0x28] sm:$0xff]
    %v194 = vld [vmem:[%s3 + $0x30] sm:$0xff]
    %v195 = vld [vmem:[%s3 + $0x38] sm:$0xff]
    %v196 = vld [vmem:[%s3 + $0x40] sm:$0xff]
    %v197 = vld [vmem:[%s3 + $0x48] sm:$0xff]
    %v198 = vld [vmem:[%s3 + $0x50] sm:$0xff]
    %v199 = vld [vmem:[%s3 + $0x58] sm:$0xff]
    %v200 = vld [vmem:[%s3 + $0x60] sm:$0xff]
    %v201 = vld [vmem:[%s3 + $0x68] sm:$0xff]
    %v202 = vld [vmem:[%s3 + $0x70] sm:$0xff]
    %v203 = vld [vmem:[%s3 + $0x78] sm:$0xff]
    %v204 = vld [vmem:[%s4] sm:$0x3]
    %v206 = vlaneseq
    %v207 = vshrl.u32 %v206, 7
    %v208 = vsub.s32 0, %v207
    %v209 = vrot.slane %v204, %v208
    %v210 = vlaneseq
    %v211 = vshrl.u32 %v210, 7
    %v212 = vsub.s32 1, %v211
    %v213 = vrot.slane %v204, %v212
    %vm216 = vcmask 261120
    %v218 = vsel %vm216, %v143, 0
    %v221 = vsel %vm216, %v150, 0
    %223 = vmatprep.subr.mxu0 %v181
    %224 = vmatpush1.msra.mxu0 %v180
    %225 = vmatprep.subr.mxu0 %v183
    %226 = vmatpush1.msra.mxu0 %v182
    %227 = vmatprep.subr.mxu0 %v185
    %228 = vmatpush1.msra.mxu0 %v184
    %229 = vmatprep.subr.mxu0 %v187
    %230 = vmatpush1.msra.mxu0 %v186
    %231 = vmatprep.subr.mxu0 0.0
    %232 = vmatpush1.msra.mxu0 0.0
    %233 = vmatprep.subr.mxu0 0.0
    %234 = vmatpush1.msra.mxu0 0.0
    %235 = vmatprep.subr.mxu0 0.0
    %236 = vmatpush1.msra.mxu0 0.0
    %237 = vmatprep.subr.mxu0 0.0
    %238 = vmatpush1.msra.mxu0 0.0
    %239 = vmatprep.subr.mxu0 0.0
    %240 = vmatpush1.msra.mxu0 0.0
    %241 = vmatprep.subr.mxu0 0.0
    %242 = vmatpush1.msra.mxu0 0.0
    %243 = vmatprep.subr.mxu0 0.0
    %244 = vmatpush1.msra.mxu0 0.0
    %245 = vmatprep.subr.mxu0 0.0
    %246 = vmatpush1.msra.mxu0 0.0
    %247 = vmatprep.subr.mxu0 0.0
    %248 = vmatpush1.msra.mxu0 0.0
    %249 = vmatprep.subr.mxu0 0.0
    %250 = vmatpush1.msra.mxu0 0.0
    %251 = vmatprep.subr.mxu0 0.0
    %252 = vmatpush1.msra.mxu0 0.0
    %253 = vmatprep.subr.mxu0 0.0
    %254 = vmatpush1.msra.mxu0 0.0
    %255 = vmatprep.subr.mxu0 0.0
    %256 = vmatpush1.msra.mxu0 0.0
    %257 = vmatprep.subr.mxu0 0.0
    %258 = vmatpush1.msra.mxu0 0.0
    %259 = vmatprep.subr.mxu0 0.0
    %260 = vmatpush1.msra.mxu0 0.0
    %261 = vmatprep.subr.mxu0 0.0
    %262 = vmatpush1.msra.mxu0 0.0
    %263 = vmatprep.subr.mxu0 0.0
    %264 = vmatpush1.msra.mxu0 0.0
    %265 = vmatprep.subr.mxu0 0.0
    %266 = vmatpush1.msra.mxu0 0.0
    %267 = vmatprep.subr.mxu0 0.0
    %268 = vmatpush1.msra.mxu0 0.0
    %269 = vmatprep.subr.mxu0 0.0
    %270 = vmatpush1.msra.mxu0 0.0
    %271 = vmatprep.subr.mxu0 0.0
    %272 = vmatpush1.msra.mxu0 0.0
    %273 = vmatprep.subr.mxu0 0.0
    %274 = vmatpush1.msra.mxu0 0.0
    %275 = vmatprep.subr.mxu0 0.0
    %276 = vmatpush1.msra.mxu0 0.0
    %277 = vmatprep.subr.mxu0 0.0
    %278 = vmatpush1.msra.mxu0 0.0
    %279 = vmatprep.subr.mxu0 0.0
    %280 = vmatpush1.msra.mxu0 0.0
    %281 = vmatprep.subr.mxu0 0.0
    %282 = vmatpush1.msra.mxu0 0.0
    %283 = vmatprep.subr.mxu0 0.0
    %284 = vmatpush1.msra.mxu0 0.0
    %285 = vmatprep.subr.mxu0 0.0
    %286 = vmatpush1.msra.mxu0 0.0
    %287 = vmatprep.mubr.f32.mxu0 0.0
    %288 = vmatmul.mubr.f32.gmra.mrb[0].mxu0 %v218
    %v289 = vpop.f32.mrb[0].mxu0
    %v290 = vadd.f32 %v209, %v289
    %v291 = vpop.f32.mrb[0].mxu0
    %v292 = vadd.f32 %v213, %v291
    %293 = vmatprep.mubr.f32.mxu0 0.0
    %294 = vmatmul.mubr.f32.gmra.mrb[0].mxu0 %v221
    %v295 = vpop.f32.mrb[0].mxu0
    %v296 = vadd.f32 %v209, %v295
    %v297 = vpop.f32.mrb[0].mxu0
    %v298 = vadd.f32 %v213, %v297
    %299 = vdwg.mxu0
    %v302 = vrot.slane %v296, 6
    %v303 = vrot.slane %v298, 6
    %v306 = vsel %vm178, %v290, %v302
    %v307 = vsel %vm179, %v292, %v303
    %vm308 = vcmask 523264
    %v310 = vsel %vm308, 0.0, 0
    %312 = vmatprep.subr.mxu0 %v189
    %313 = vmatpush1.msra.mxu0 %v188
    %314 = vmatprep.subr.mxu0 %v191
    %315 = vmatpush1.msra.mxu0 %v190
    %316 = vmatprep.subr.mxu0 %v193
    %317 = vmatpush1.msra.mxu0 %v192
    %318 = vmatprep.subr.mxu0 %v195
    %319 = vmatpush1.msra.mxu0 %v194
    %320 = vmatprep.subr.mxu0 %v197
    %321 = vmatpush1.msra.mxu0 %v196
    %322 = vmatprep.subr.mxu0 %v199
    %323 = vmatpush1.msra.mxu0 %v198
    %324 = vmatprep.subr.mxu0 %v201
    %325 = vmatpush1.msra.mxu0 %v200
    %326 = vmatprep.subr.mxu0 %v203
    %327 = vmatpush1.msra.mxu0 %v202
    %328 = vmatprep.subr.mxu0 0.0
    %329 = vmatpush1.msra.mxu0 0.0
    %330 = vmatprep.subr.mxu0 0.0
    %331 = vmatpush1.msra.mxu0 0.0
    %332 = vmatprep.subr.mxu0 0.0
    %333 = vmatpush1.msra.mxu0 0.0
    %334 = vmatprep.subr.mxu0 0.0
    %335 = vmatpush1.msra.mxu0 0.0
    %336 = vmatprep.subr.mxu0 0.0
    %337 = vmatpush1.msra.mxu0 0.0
    %338 = vmatprep.subr.mxu0 0.0
    %339 = vmatpush1.msra.mxu0 0.0
    %340 = vmatprep.subr.mxu0 0.0
    %341 = vmatpush1.msra.mxu0 0.0
    %342 = vmatprep.subr.mxu0 0.0
    %343 = vmatpush1.msra.mxu0 0.0
    %344 = vmatprep.subr.mxu0 0.0
    %345 = vmatpush1.msra.mxu0 0.0
    %346 = vmatprep.subr.mxu0 0.0
    %347 = vmatpush1.msra.mxu0 0.0
    %348 = vmatprep.subr.mxu0 0.0
    %349 = vmatpush1.msra.mxu0 0.0
    %350 = vmatprep.subr.mxu0 0.0
    %351 = vmatpush1.msra.mxu0 0.0
    %352 = vmatprep.subr.mxu0 0.0
    %353 = vmatpush1.msra.mxu0 0.0
    %354 = vmatprep.subr.mxu0 0.0
    %355 = vmatpush1.msra.mxu0 0.0
    %356 = vmatprep.subr.mxu0 0.0
    %357 = vmatpush1.msra.mxu0 0.0
    %358 = vmatprep.subr.mxu0 0.0
    %359 = vmatpush1.msra.mxu0 0.0
    %360 = vmatprep.subr.mxu0 0.0
    %361 = vmatpush1.msra.mxu0 0.0
    %362 = vmatprep.subr.mxu0 0.0
    %363 = vmatpush1.msra.mxu0 0.0
    %364 = vmatprep.subr.mxu0 0.0
    %365 = vmatpush1.msra.mxu0 0.0
    %366 = vmatprep.subr.mxu0 0.0
    %367 = vmatpush1.msra.mxu0 0.0
    %368 = vmatprep.subr.mxu0 0.0
    %369 = vmatpush1.msra.mxu0 0.0
    %370 = vmatprep.subr.mxu0 0.0
    %371 = vmatpush1.msra.mxu0 0.0
    %372 = vmatprep.subr.mxu0 0.0
    %373 = vmatpush1.msra.mxu0 0.0
    %374 = vmatprep.subr.mxu0 0.0
    %375 = vmatpush1.msra.mxu0 0.0
    %376 = vmatprep.mubr.f32.mxu0 0.0
    %377 = vmatmul.mubr.f32.gmra.mrb[0].mxu0 %v310
    %v378 = vpop.f32.mrb[0].mxu0
    %v379 = vadd.f32 0.0, %v378
    %v380 = vpop.f32.mrb[0].mxu0
    %v381 = vadd.f32 0.0, %v380
    %382 = vdwg.mxu0
    %v383 = vadd.f32 %v306, %v379
    %v384 = vadd.f32 %v307, %v381
    %v385 = vxor.u32 %v383, 2147483648
    %v386 = vxor.u32 %v384, 2147483648
    %v387 = vmul.f32 %v385, 1.442695
    %v388 = vpow.pop %v387
    %v389 = vmul.f32 %v386, 1.442695
    %v390 = vpow.pop %v389
    %v391 = vadd.f32 %v388, 1.0
    %v392 = vadd.f32 %v390, 1.0
    %v393 = vrcp.pop %v391
    %v394 = vmul.f32 1.0, %v393
    %v395 = vrcp.pop %v392
    %v396 = vmul.f32 1.0, %v395
    %v397 = vtanh.pop %v384
    %v398 = vmul.f32 %v394, 0.0
    %400 = vrot.lane.b32.xlu0 %v397, 64
    %v401 = vpop.permute.xlu0 %400
    %v403 = vmul.f32 %v394, %v401
    %405 = vrot.lane.b32.xlu0 %v403, 64
    %v406 = vpop.permute.xlu0 %405
    %v408 = vadd.f32 %v398, %v406
    %v409 = vtanh.pop %v408
    %411 = vrot.lane.b32.xlu0 %v409, 64
    %v412 = vpop.permute.xlu0 %411
    %v414 = vmul.f32 %v396, %v412
    %v415 = vrot.slane %v296, 2
    %v416 = vrot.slane %v298, 2
    %v419 = vsel %vm178, %v290, %v415
    %v420 = vsel %vm179, %v292, %v416
    %v422 = vsel %vm308, %v414, 0
    %424 = vmatprep.subr.mxu0 %v189
    %425 = vmatpush1.msra.mxu0 %v188
    %426 = vmatprep.subr.mxu0 %v191
    %427 = vmatpush1.msra.mxu0 %v190
    %428 = vmatprep.subr.mxu0 %v193
    %429 = vmatpush1.msra.mxu0 %v192
    %430 = vmatprep.subr.mxu0 %v195
    %431 = vmatpush1.msra.mxu0 %v194
    %432 = vmatprep.subr.mxu0 %v197
    %433 = vmatpush1.msra.mxu0 %v196
    %434 = vmatprep.subr.mxu0 %v199
    %435 = vmatpush1.msra.mxu0 %v198
    %436 = vmatprep.subr.mxu0 %v201
    %437 = vmatpush1.msra.mxu0 %v200
    %438 = vmatprep.subr.mxu0 %v203
    %439 = vmatpush1.msra.mxu0 %v202
    %440 = vmatprep.subr.mxu0 0.0
    %441 = vmatpush1.msra.mxu0 0.0
    %442 = vmatprep.subr.mxu0 0.0
    %443 = vmatpush1.msra.mxu0 0.0
    %444 = vmatprep.subr.mxu0 0.0
    %445 = vmatpush1.msra.mxu0 0.0
    %446 = vmatprep.subr.mxu0 0.0
    %447 = vmatpush1.msra.mxu0 0.0
    %448 = vmatprep.subr.mxu0 0.0
    %449 = vmatpush1.msra.mxu0 0.0
    %450 = vmatprep.subr.mxu0 0.0
    %451 = vmatpush1.msra.mxu0 0.0
    %452 = vmatprep.subr.mxu0 0.0
    %453 = vmatpush1.msra.mxu0 0.0
    %454 = vmatprep.subr.mxu0 0.0
    %455 = vmatpush1.msra.mxu0 0.0
    %456 = vmatprep.subr.mxu0 0.0
    %457 = vmatpush1.msra.mxu0 0.0
    %458 = vmatprep.subr.mxu0 0.0
    %459 = vmatpush1.msra.mxu0 0.0
    %460 = vmatprep.subr.mxu0 0.0
    %461 = vmatpush1.msra.mxu0 0.0
    %462 = vmatprep.subr.mxu0 0.0
    %463 = vmatpush1.msra.mxu0 0.0
    %464 = vmatprep.subr.mxu0 0.0
    %465 = vmatpush1.msra.mxu0 0.0
    %466 = vmatprep.subr.mxu0 0.0
    %467 = vmatpush1.msra.mxu0 0.0
    %468 = vmatprep.subr.mxu0 0.0
    %469 = vmatpush1.msra.mxu0 0.0
    %470 = vmatprep.subr.mxu0 0.0
    %471 = vmatpush1.msra.mxu0 0.0
    %472 = vmatprep.subr.mxu0 0.0
    %473 = vmatpush1.msra.mxu0 0.0
    %474 = vmatprep.subr.mxu0 0.0
    %475 = vmatpush1.msra.mxu0 0.0
    %476 = vmatprep.subr.mxu0 0.0
    %477 = vmatpush1.msra.mxu0 0.0
    %478 = vmatprep.subr.mxu0 0.0
    %479 = vmatpush1.msra.mxu0 0.0
    %480 = vmatprep.subr.mxu0 0.0
    %481 = vmatpush1.msra.mxu0 0.0
    %482 = vmatprep.subr.mxu0 0.0
    %483 = vmatpush1.msra.mxu0 0.0
    %484 = vmatprep.subr.mxu0 0.0
    %485 = vmatpush1.msra.mxu0 0.0
    %486 = vmatprep.subr.mxu0 0.0
    %487 = vmatpush1.msra.mxu0 0.0
    %488 = vmatprep.mubr.f32.mxu0 0.0
    %489 = vmatmul.mubr.f32.gmra.mrb[0].mxu0 %v422
    %v490 = vpop.f32.mrb[0].mxu0
    %v491 = vadd.f32 0.0, %v490
    %v492 = vpop.f32.mrb[0].mxu0
    %v493 = vadd.f32 0.0, %v492
    %494 = vdwg.mxu0
    %v497 = vrot.slane %v491, 6
    %v498 = vrot.slane %v493, 6
    %v501 = vadd.f32 %v419, %v497
    %v502 = vadd.f32 %v420, %v498
    %v503 = vxor.u32 %v501, 2147483648
    %v504 = vxor.u32 %v502, 2147483648
    %v505 = vmul.f32 %v503, 1.442695
    %v506 = vpow.pop %v505
    %v507 = vmul.f32 %v504, 1.442695
    %v508 = vpow.pop %v507
    %v509 = vadd.f32 %v506, 1.0
    %v510 = vadd.f32 %v508, 1.0
    %v511 = vrcp.pop %v509
    %v512 = vmul.f32 1.0, %v511
    %v513 = vrcp.pop %v510
    %v514 = vmul.f32 1.0, %v513
    %v515 = vtanh.pop %v502
    %v517 = vrot.slane %v408, 6
    %v519 = vmul.f32 %v512, %v517
    %521 = vrot.lane.b32.xlu0 %v515, 64
    %v522 = vpop.permute.xlu0 %521
    %v524 = vmul.f32 %v512, %v522
    %526 = vrot.lane.b32.xlu0 %v524, 64
    %v527 = vpop.permute.xlu0 %526
    %v529 = vadd.f32 %v519, %v527
    %v530 = vtanh.pop %v529
    %532 = vrot.lane.b32.xlu0 %v530, 64
    %v533 = vpop.permute.xlu0 %532
    %v535 = vmul.f32 %v514, %v533
    %v537 = vrot.slane %v535, 2
    %v538 = vsel %vm308, %v537, 0
    %540 = vmatprep.subr.mxu0 %v189
    %541 = vmatpush1.msra.mxu0 %v188
    %542 = vmatprep.subr.mxu0 %v191
    %543 = vmatpush1.msra.mxu0 %v190
    %544 = vmatprep.subr.mxu0 %v193
    %545 = vmatpush1.msra.mxu0 %v192
    %546 = vmatprep.subr.mxu0 %v195
    %547 = vmatpush1.msra.mxu0 %v194
    %548 = vmatprep.subr.mxu0 %v197
    %549 = vmatpush1.msra.mxu0 %v196
    %550 = vmatprep.subr.mxu0 %v199
    %551 = vmatpush1.msra.mxu0 %v198
    %552 = vmatprep.subr.mxu0 %v201
    %553 = vmatpush1.msra.mxu0 %v200
    %554 = vmatprep.subr.mxu0 %v203
    %555 = vmatpush1.msra.mxu0 %v202
    %556 = vmatprep.subr.mxu0 0.0
    %557 = vmatpush1.msra.mxu0 0.0
    %558 = vmatprep.subr.mxu0 0.0
    %559 = vmatpush1.msra.mxu0 0.0
    %560 = vmatprep.subr.mxu0 0.0
    %561 = vmatpush1.msra.mxu0 0.0
    %562 = vmatprep.subr.mxu0 0.0
    %563 = vmatpush1.msra.mxu0 0.0
    %564 = vmatprep.subr.mxu0 0.0
    %565 = vmatpush1.msra.mxu0 0.0
    %566 = vmatprep.subr.mxu0 0.0
    %567 = vmatpush1.msra.mxu0 0.0
    %568 = vmatprep.subr.mxu0 0.0
    %569 = vmatpush1.msra.mxu0 0.0
    %570 = vmatprep.subr.mxu0 0.0
    %571 = vmatpush1.msra.mxu0 0.0
    %572 = vmatprep.subr.mxu0 0.0
    %573 = vmatpush1.msra.mxu0 0.0
    %574 = vmatprep.subr.mxu0 0.0
    %575 = vmatpush1.msra.mxu0 0.0
    %576 = vmatprep.subr.mxu0 0.0
    %577 = vmatpush1.msra.mxu0 0.0
    %578 = vmatprep.subr.mxu0 0.0
    %579 = vmatpush1.msra.mxu0 0.0
    %580 = vmatprep.subr.mxu0 0.0
    %581 = vmatpush1.msra.mxu0 0.0
    %582 = vmatprep.subr.mxu0 0.0
    %583 = vmatpush1.msra.mxu0 0.0
    %584 = vmatprep.subr.mxu0 0.0
    %585 = vmatpush1.msra.mxu0 0.0
    %586 = vmatprep.subr.mxu0 0.0
    %587 = vmatpush1.msra.mxu0 0.0
    %588 = vmatprep.subr.mxu0 0.0
    %589 = vmatpush1.msra.mxu0 0.0
    %590 = vmatprep.subr.mxu0 0.0
    %591 = vmatpush1.msra.mxu0 0.0
    %592 = vmatprep.subr.mxu0 0.0
    %593 = vmatpush1.msra.mxu0 0.0
    %594 = vmatprep.subr.mxu0 0.0
    %595 = vmatpush1.msra.mxu0 0.0
    %596 = vmatprep.subr.mxu0 0.0
    %597 = vmatpush1.msra.mxu0 0.0
    %598 = vmatprep.subr.mxu0 0.0
    %599 = vmatpush1.msra.mxu0 0.0
    %600 = vmatprep.subr.mxu0 0.0
    %601 = vmatpush1.msra.mxu0 0.0
    %602 = vmatprep.subr.mxu0 0.0
    %603 = vmatpush1.msra.mxu0 0.0
    %604 = vmatprep.mubr.f32.mxu0 0.0
    %605 = vmatmul.mubr.f32.gmra.mrb[0].mxu0 %v538
    %v606 = vpop.f32.mrb[0].mxu0
    %v607 = vadd.f32 0.0, %v606
    %v608 = vpop.f32.mrb[0].mxu0
    %v609 = vadd.f32 0.0, %v608
    %610 = vdwg.mxu0
    %v613 = vrot.slane %v607, 4
    %v614 = vrot.slane %v609, 4
    %v617 = vadd.f32 %v306, %v613
    %v618 = vadd.f32 %v307, %v614
    %v619 = vxor.u32 %v617, 2147483648
    %v620 = vxor.u32 %v618, 2147483648
    %v621 = vmul.f32 %v619, 1.442695
    %v622 = vpow.pop %v621
    %v623 = vmul.f32 %v620, 1.442695
    %v624 = vpow.pop %v623
    %v625 = vadd.f32 %v622, 1.0
    %v626 = vadd.f32 %v624, 1.0
    %v627 = vrcp.pop %v625
    %v628 = vmul.f32 1.0, %v627
    %v629 = vrcp.pop %v626
    %v630 = vmul.f32 1.0, %v629
    %v631 = vtanh.pop %v618
    %v633 = vrot.slane %v529, 6
    %v635 = vmul.f32 %v628, %v633
    %637 = vrot.lane.b32.xlu0 %v631, 64
    %v638 = vpop.permute.xlu0 %637
    %v640 = vmul.f32 %v628, %v638
    %642 = vrot.lane.b32.xlu0 %v640, 64
    %v643 = vpop.permute.xlu0 %642
    %v645 = vadd.f32 %v635, %v643
    %v646 = vtanh.pop %v645
    %648 = vrot.lane.b32.xlu0 %v646, 64
    %v649 = vpop.permute.xlu0 %648
    %v651 = vmul.f32 %v630, %v649
    %v653 = vrot.slane %v651, 4
    %v654 = vsel %vm308, %v653, 0
    %656 = vmatprep.subr.mxu0 %v189
    %657 = vmatpush1.msra.mxu0 %v188
    %658 = vmatprep.subr.mxu0 %v191
    %659 = vmatpush1.msra.mxu0 %v190
    %660 = vmatprep.subr.mxu0 %v193
    %661 = vmatpush1.msra.mxu0 %v192
    %662 = vmatprep.subr.mxu0 %v195
    %663 = vmatpush1.msra.mxu0 %v194
    %664 = vmatprep.subr.mxu0 %v197
    %665 = vmatpush1.msra.mxu0 %v196
    %666 = vmatprep.subr.mxu0 %v199
    %667 = vmatpush1.msra.mxu0 %v198
    %668 = vmatprep.subr.mxu0 %v201
    %669 = vmatpush1.msra.mxu0 %v200
    %670 = vmatprep.subr.mxu0 %v203
    %671 = vmatpush1.msra.mxu0 %v202
    %672 = vmatprep.subr.mxu0 0.0
    %673 = vmatpush1.msra.mxu0 0.0
    %674 = vmatprep.subr.mxu0 0.0
    %675 = vmatpush1.msra.mxu0 0.0
    %676 = vmatprep.subr.mxu0 0.0
    %677 = vmatpush1.msra.mxu0 0.0
    %678 = vmatprep.subr.mxu0 0.0
    %679 = vmatpush1.msra.mxu0 0.0
    %680 = vmatprep.subr.mxu0 0.0
    %681 = vmatpush1.msra.mxu0 0.0
    %682 = vmatprep.subr.mxu0 0.0
    %683 = vmatpush1.msra.mxu0 0.0
    %684 = vmatprep.subr.mxu0 0.0
    %685 = vmatpush1.msra.mxu0 0.0
    %686 = vmatprep.subr.mxu0 0.0
    %687 = vmatpush1.msra.mxu0 0.0
    %688 = vmatprep.subr.mxu0 0.0
    %689 = vmatpush1.msra.mxu0 0.0
    %690 = vmatprep.subr.mxu0 0.0
    %691 = vmatpush1.msra.mxu0 0.0
    %692 = vmatprep.subr.mxu0 0.0
    %693 = vmatpush1.msra.mxu0 0.0
    %694 = vmatprep.subr.mxu0 0.0
    %695 = vmatpush1.msra.mxu0 0.0
    %696 = vmatprep.subr.mxu0 0.0
    %697 = vmatpush1.msra.mxu0 0.0
    %698 = vmatprep.subr.mxu0 0.0
    %699 = vmatpush1.msra.mxu0 0.0
    %700 = vmatprep.subr.mxu0 0.0
    %701 = vmatpush1.msra.mxu0 0.0
    %702 = vmatprep.subr.mxu0 0.0
    %703 = vmatpush1.msra.mxu0 0.0
    %704 = vmatprep.subr.mxu0 0.0
    %705 = vmatpush1.msra.mxu0 0.0
    %706 = vmatprep.subr.mxu0 0.0
    %707 = vmatpush1.msra.mxu0 0.0
    %708 = vmatprep.subr.mxu0 0.0
    %709 = vmatpush1.msra.mxu0 0.0
    %710 = vmatprep.subr.mxu0 0.0
    %711 = vmatpush1.msra.mxu0 0.0
    %712 = vmatprep.subr.mxu0 0.0
    %713 = vmatpush1.msra.mxu0 0.0
    %714 = vmatprep.subr.mxu0 0.0
    %715 = vmatpush1.msra.mxu0 0.0
    %716 = vmatprep.subr.mxu0 0.0
    %717 = vmatpush1.msra.mxu0 0.0
    %718 = vmatprep.subr.mxu0 0.0
    %719 = vmatpush1.msra.mxu0 0.0
    %720 = vmatprep.mubr.f32.mxu0 0.0
    %721 = vmatmul.mubr.f32.gmra.mrb[0].mxu0 %v654
    %v722 = vpop.f32.mrb[0].mxu0
    %v723 = vadd.f32 0.0, %v722
    %v724 = vpop.f32.mrb[0].mxu0
    %v725 = vadd.f32 0.0, %v724
    %726 = vdwg.mxu0
    %v729 = vrot.slane %v723, 2
    %v730 = vrot.slane %v725, 2
    %v733 = vadd.f32 %v419, %v729
    %v734 = vadd.f32 %v420, %v730
    %v735 = vxor.u32 %v733, 2147483648
    %v736 = vxor.u32 %v734, 2147483648
    %v737 = vmul.f32 %v735, 1.442695
    %v738 = vpow.pop %v737
    %v739 = vmul.f32 %v736, 1.442695
    %v740 = vpow.pop %v739
    %v741 = vadd.f32 %v738, 1.0
    %v742 = vadd.f32 %v740, 1.0
    %v743 = vrcp.pop %v741
    %v744 = vmul.f32 1.0, %v743
    %v745 = vrcp.pop %v742
    %v746 = vmul.f32 1.0, %v745
    %v747 = vtanh.pop %v734
    %v749 = vrot.slane %v645, 6
    %v751 = vmul.f32 %v744, %v749
    %753 = vrot.lane.b32.xlu0 %v747, 64
    %v754 = vpop.permute.xlu0 %753
    %v756 = vmul.f32 %v744, %v754
    %758 = vrot.lane.b32.xlu0 %v756, 64
    %v759 = vpop.permute.xlu0 %758
    %v761 = vadd.f32 %v751, %v759
    %v762 = vtanh.pop %v761
    %764 = vrot.lane.b32.xlu0 %v762, 64
    %v765 = vpop.permute.xlu0 %764
    %v767 = vmul.f32 %v746, %v765
    %v770 = vrot.slane %v290, 6
    %v771 = vrot.slane %v292, 6
    %v774 = vsel %vm178, %v296, %v770
    %v775 = vsel %vm179, %v298, %v771
    %v777 = vrot.slane %v767, 6
    %v778 = vsel %vm308, %v777, 0
    %780 = vmatprep.subr.mxu0 %v189
    %781 = vmatpush1.msra.mxu0 %v188
    %782 = vmatprep.subr.mxu0 %v191
    %783 = vmatpush1.msra.mxu0 %v190
    %784 = vmatprep.subr.mxu0 %v193
    %785 = vmatpush1.msra.mxu0 %v192
    %786 = vmatprep.subr.mxu0 %v195
    %787 = vmatpush1.msra.mxu0 %v194
    %788 = vmatprep.subr.mxu0 %v197
    %789 = vmatpush1.msra.mxu0 %v196
    %790 = vmatprep.subr.mxu0 %v199
    %791 = vmatpush1.msra.mxu0 %v198
    %792 = vmatprep.subr.mxu0 %v201
    %793 = vmatpush1.msra.mxu0 %v200
    %794 = vmatprep.subr.mxu0 %v203
    %795 = vmatpush1.msra.mxu0 %v202
    %796 = vmatprep.subr.mxu0 0.0
    %797 = vmatpush1.msra.mxu0 0.0
    %798 = vmatprep.subr.mxu0 0.0
    %799 = vmatpush1.msra.mxu0 0.0
    %800 = vmatprep.subr.mxu0 0.0
    %801 = vmatpush1.msra.mxu0 0.0
    %802 = vmatprep.subr.mxu0 0.0
    %803 = vmatpush1.msra.mxu0 0.0
    %804 = vmatprep.subr.mxu0 0.0
    %805 = vmatpush1.msra.mxu0 0.0
    %806 = vmatprep.subr.mxu0 0.0
    %807 = vmatpush1.msra.mxu0 0.0
    %808 = vmatprep.subr.mxu0 0.0
    %809 = vmatpush1.msra.mxu0 0.0
    %810 = vmatprep.subr.mxu0 0.0
    %811 = vmatpush1.msra.mxu0 0.0
    %812 = vmatprep.subr.mxu0 0.0
    %813 = vmatpush1.msra.mxu0 0.0
    %814 = vmatprep.subr.mxu0 0.0
    %815 = vmatpush1.msra.mxu0 0.0
    %816 = vmatprep.subr.mxu0 0.0
    %817 = vmatpush1.msra.mxu0 0.0
    %818 = vmatprep.subr.mxu0 0.0
    %819 = vmatpush1.msra.mxu0 0.0
    %820 = vmatprep.subr.mxu0 0.0
    %821 = vmatpush1.msra.mxu0 0.0
    %822 = vmatprep.subr.mxu0 0.0
    %823 = vmatpush1.msra.mxu0 0.0
    %824 = vmatprep.subr.mxu0 0.0
    %825 = vmatpush1.msra.mxu0 0.0
    %826 = vmatprep.subr.mxu0 0.0
    %827 = vmatpush1.msra.mxu0 0.0
    %828 = vmatprep.subr.mxu0 0.0
    %829 = vmatpush1.msra.mxu0 0.0
    %830 = vmatprep.subr.mxu0 0.0
    %831 = vmatpush1.msra.mxu0 0.0
    %832 = vmatprep.subr.mxu0 0.0
    %833 = vmatpush1.msra.mxu0 0.0
    %834 = vmatprep.subr.mxu0 0.0
    %835 = vmatpush1.msra.mxu0 0.0
    %836 = vmatprep.subr.mxu0 0.0
    %837 = vmatpush1.msra.mxu0 0.0
    %838 = vmatprep.subr.mxu0 0.0
    %839 = vmatpush1.msra.mxu0 0.0
    %840 = vmatprep.subr.mxu0 0.0
    %841 = vmatpush1.msra.mxu0 0.0
    %842 = vmatprep.subr.mxu0 0.0
    %843 = vmatpush1.msra.mxu0 0.0
    %844 = vmatprep.mubr.f32.mxu0 0.0
    %845 = vmatmul.mubr.f32.gmra.mrb[0].mxu0 %v778
    %v846 = vpop.f32.mrb[0].mxu0
    %v847 = vadd.f32 0.0, %v846
    %v848 = vpop.f32.mrb[0].mxu0
    %v849 = vadd.f32 0.0, %v848
    %850 = vdwg.mxu0
    %v851 = vadd.f32 %v774, %v847
    %v852 = vadd.f32 %v775, %v849
    %v853 = vxor.u32 %v851, 2147483648
    %v854 = vxor.u32 %v852, 2147483648
    %v855 = vmul.f32 %v853, 1.442695
    %v856 = vpow.pop %v855
    %v857 = vmul.f32 %v854, 1.442695
    %v858 = vpow.pop %v857
    %v859 = vadd.f32 %v856, 1.0
    %v860 = vadd.f32 %v858, 1.0
    %v861 = vrcp.pop %v859
    %v862 = vmul.f32 1.0, %v861
    %v863 = vrcp.pop %v860
    %v864 = vmul.f32 1.0, %v863
    %v865 = vtanh.pop %v852
    %v867 = vrot.slane %v761, 6
    %v869 = vmul.f32 %v862, %v867
    %871 = vrot.lane.b32.xlu0 %v865, 64
    %v872 = vpop.permute.xlu0 %871
    %v874 = vmul.f32 %v862, %v872
    %876 = vrot.lane.b32.xlu0 %v874, 64
    %v877 = vpop.permute.xlu0 %876
    %v879 = vadd.f32 %v869, %v877
    %v880 = vtanh.pop %v879
    %882 = vrot.lane.b32.xlu0 %v880, 64
    %v883 = vpop.permute.xlu0 %882
    %v885 = vmul.f32 %v864, %v883
    %v886 = vrot.slane %v290, 2
    %v887 = vrot.slane %v292, 2
    %v890 = vsel %vm178, %v296, %v886
    %v891 = vsel %vm179, %v298, %v887
    %v893 = vsel %vm308, %v885, 0
    %895 = vmatprep.subr.mxu0 %v189
    %896 = vmatpush1.msra.mxu0 %v188
    %897 = vmatprep.subr.mxu0 %v191
    %898 = vmatpush1.msra.mxu0 %v190
    %899 = vmatprep.subr.mxu0 %v193
    %900 = vmatpush1.msra.mxu0 %v192
    %901 = vmatprep.subr.mxu0 %v195
    %902 = vmatpush1.msra.mxu0 %v194
    %903 = vmatprep.subr.mxu0 %v197
    %904 = vmatpush1.msra.mxu0 %v196
    %905 = vmatprep.subr.mxu0 %v199
    %906 = vmatpush1.msra.mxu0 %v198
    %907 = vmatprep.subr.mxu0 %v201
    %908 = vmatpush1.msra.mxu0 %v200
    %909 = vmatprep.subr.mxu0 %v203
    %910 = vmatpush1.msra.mxu0 %v202
    %911 = vmatprep.subr.mxu0 0.0
    %912 = vmatpush1.msra.mxu0 0.0
    %913 = vmatprep.subr.mxu0 0.0
    %914 = vmatpush1.msra.mxu0 0.0
    %915 = vmatprep.subr.mxu0 0.0
    %916 = vmatpush1.msra.mxu0 0.0
    %917 = vmatprep.subr.mxu0 0.0
    %918 = vmatpush1.msra.mxu0 0.0
    %919 = vmatprep.subr.mxu0 0.0
    %920 = vmatpush1.msra.mxu0 0.0
    %921 = vmatprep.subr.mxu0 0.0
    %922 = vmatpush1.msra.mxu0 0.0
    %923 = vmatprep.subr.mxu0 0.0
    %924 = vmatpush1.msra.mxu0 0.0
    %925 = vmatprep.subr.mxu0 0.0
    %926 = vmatpush1.msra.mxu0 0.0
    %927 = vmatprep.subr.mxu0 0.0
    %928 = vmatpush1.msra.mxu0 0.0
    %929 = vmatprep.subr.mxu0 0.0
    %930 = vmatpush1.msra.mxu0 0.0
    %931 = vmatprep.subr.mxu0 0.0
    %932 = vmatpush1.msra.mxu0 0.0
    %933 = vmatprep.subr.mxu0 0.0
    %934 = vmatpush1.msra.mxu0 0.0
    %935 = vmatprep.subr.mxu0 0.0
    %936 = vmatpush1.msra.mxu0 0.0
    %937 = vmatprep.subr.mxu0 0.0
    %938 = vmatpush1.msra.mxu0 0.0
    %939 = vmatprep.subr.mxu0 0.0
    %940 = vmatpush1.msra.mxu0 0.0
    %941 = vmatprep.subr.mxu0 0.0
    %942 = vmatpush1.msra.mxu0 0.0
    %943 = vmatprep.subr.mxu0 0.0
    %944 = vmatpush1.msra.mxu0 0.0
    %945 = vmatprep.subr.mxu0 0.0
    %946 = vmatpush1.msra.mxu0 0.0
    %947 = vmatprep.subr.mxu0 0.0
    %948 = vmatpush1.msra.mxu0 0.0
    %949 = vmatprep.subr.mxu0 0.0
    %950 = vmatpush1.msra.mxu0 0.0
    %951 = vmatprep.subr.mxu0 0.0
    %952 = vmatpush1.msra.mxu0 0.0
    %953 = vmatprep.subr.mxu0 0.0
    %954 = vmatpush1.msra.mxu0 0.0
    %955 = vmatprep.subr.mxu0 0.0
    %956 = vmatpush1.msra.mxu0 0.0
    %957 = vmatprep.subr.mxu0 0.0
    %958 = vmatpush1.msra.mxu0 0.0
    %959 = vmatprep.mubr.f32.mxu0 0.0
    %960 = vmatmul.mubr.f32.gmra.mrb[0].mxu0 %v893
    %v961 = vpop.f32.mrb[0].mxu0
    %v962 = vadd.f32 0.0, %v961
    %v963 = vpop.f32.mrb[0].mxu0
    %v964 = vadd.f32 0.0, %v963
    %965 = vdwg.mxu0
    %v968 = vrot.slane %v962, 6
    %v969 = vrot.slane %v964, 6
    %v972 = vadd.f32 %v890, %v968
    %v973 = vadd.f32 %v891, %v969
    %v974 = vxor.u32 %v972, 2147483648
    %v975 = vxor.u32 %v973, 2147483648
    %v976 = vmul.f32 %v974, 1.442695
    %v977 = vpow.pop %v976
    %v978 = vmul.f32 %v975, 1.442695
    %v979 = vpow.pop %v978
    %v980 = vadd.f32 %v977, 1.0
    %v981 = vadd.f32 %v979, 1.0
    %v982 = vrcp.pop %v980
    %v983 = vmul.f32 1.0, %v982
    %v984 = vrcp.pop %v981
    %v985 = vmul.f32 1.0, %v984
    %v986 = vtanh.pop %v973
    %v988 = vrot.slane %v879, 6
    %v990 = vmul.f32 %v983, %v988
    %992 = vrot.lane.b32.xlu0 %v986, 64
    %v993 = vpop.permute.xlu0 %992
    %v995 = vmul.f32 %v983, %v993
    %997 = vrot.lane.b32.xlu0 %v995, 64
    %v998 = vpop.permute.xlu0 %997
    %v1000 = vadd.f32 %v990, %v998
    %v1001 = vtanh.pop %v1000
    %1003 = vrot.lane.b32.xlu0 %v1001, 64
    %v1004 = vpop.permute.xlu0 %1003
    %v1006 = vmul.f32 %v985, %v1004
    %v1008 = vrot.slane %v1006, 2
    %v1009 = vsel %vm308, %v1008, 0
    %1011 = vmatprep.subr.mxu0 %v189
    %1012 = vmatpush1.msra.mxu0 %v188
    %1013 = vmatprep.subr.mxu0 %v191
    %1014 = vmatpush1.msra.mxu0 %v190
    %1015 = vmatprep.subr.mxu0 %v193
    %1016 = vmatpush1.msra.mxu0 %v192
    %1017 = vmatprep.subr.mxu0 %v195
    %1018 = vmatpush1.msra.mxu0 %v194
    %1019 = vmatprep.subr.mxu0 %v197
    %1020 = vmatpush1.msra.mxu0 %v196
    %1021 = vmatprep.subr.mxu0 %v199
    %1022 = vmatpush1.msra.mxu0 %v198
    %1023 = vmatprep.subr.mxu0 %v201
    %1024 = vmatpush1.msra.mxu0 %v200
    %1025 = vmatprep.subr.mxu0 %v203
    %1026 = vmatpush1.msra.mxu0 %v202
    %1027 = vmatprep.subr.mxu0 0.0
    %1028 = vmatpush1.msra.mxu0 0.0
    %1029 = vmatprep.subr.mxu0 0.0
    %1030 = vmatpush1.msra.mxu0 0.0
    %1031 = vmatprep.subr.mxu0 0.0
    %1032 = vmatpush1.msra.mxu0 0.0
    %1033 = vmatprep.subr.mxu0 0.0
    %1034 = vmatpush1.msra.mxu0 0.0
    %1035 = vmatprep.subr.mxu0 0.0
    %1036 = vmatpush1.msra.mxu0 0.0
    %1037 = vmatprep.subr.mxu0 0.0
    %1038 = vmatpush1.msra.mxu0 0.0
    %1039 = vmatprep.subr.mxu0 0.0
    %1040 = vmatpush1.msra.mxu0 0.0
    %1041 = vmatprep.subr.mxu0 0.0
    %1042 = vmatpush1.msra.mxu0 0.0
    %1043 = vmatprep.subr.mxu0 0.0
    %1044 = vmatpush1.msra.mxu0 0.0
    %1045 = vmatprep.subr.mxu0 0.0
    %1046 = vmatpush1.msra.mxu0 0.0
    %1047 = vmatprep.subr.mxu0 0.0
    %1048 = vmatpush1.msra.mxu0 0.0
    %1049 = vmatprep.subr.mxu0 0.0
    %1050 = vmatpush1.msra.mxu0 0.0
    %1051 = vmatprep.subr.mxu0 0.0
    %1052 = vmatpush1.msra.mxu0 0.0
    %1053 = vmatprep.subr.mxu0 0.0
    %1054 = vmatpush1.msra.mxu0 0.0
    %1055 = vmatprep.subr.mxu0 0.0
    %1056 = vmatpush1.msra.mxu0 0.0
    %1057 = vmatprep.subr.mxu0 0.0
    %1058 = vmatpush1.msra.mxu0 0.0
    %1059 = vmatprep.subr.mxu0 0.0
    %1060 = vmatpush1.msra.mxu0 0.0
    %1061 = vmatprep.subr.mxu0 0.0
    %1062 = vmatpush1.msra.mxu0 0.0
    %1063 = vmatprep.subr.mxu0 0.0
    %1064 = vmatpush1.msra.mxu0 0.0
    %1065 = vmatprep.subr.mxu0 0.0
    %1066 = vmatpush1.msra.mxu0 0.0
    %1067 = vmatprep.subr.mxu0 0.0
    %1068 = vmatpush1.msra.mxu0 0.0
    %1069 = vmatprep.subr.mxu0 0.0
    %1070 = vmatpush1.msra.mxu0 0.0
    %1071 = vmatprep.subr.mxu0 0.0
    %1072 = vmatpush1.msra.mxu0 0.0
    %1073 = vmatprep.subr.mxu0 0.0
    %1074 = vmatpush1.msra.mxu0 0.0
    %1075 = vmatprep.mubr.f32.mxu0 0.0
    %1076 = vmatmul.mubr.f32.gmra.mrb[0].mxu0 %v1009
    %v1077 = vpop.f32.mrb[0].mxu0
    %v1078 = vadd.f32 0.0, %v1077
    %v1079 = vpop.f32.mrb[0].mxu0
    %v1080 = vadd.f32 0.0, %v1079
    %1081 = vdwg.mxu0
    %v1084 = vrot.slane %v1078, 4
    %v1085 = vrot.slane %v1080, 4
    %v1088 = vadd.f32 %v774, %v1084
    %v1089 = vadd.f32 %v775, %v1085
    %v1090 = vxor.u32 %v1088, 2147483648
    %v1091 = vxor.u32 %v1089, 2147483648
    %v1092 = vmul.f32 %v1090, 1.442695
    %v1093 = vpow.pop %v1092
    %v1094 = vmul.f32 %v1091, 1.442695
    %v1095 = vpow.pop %v1094
    %v1096 = vadd.f32 %v1093, 1.0
    %v1097 = vadd.f32 %v1095, 1.0
    %v1098 = vrcp.pop %v1096
    %v1099 = vmul.f32 1.0, %v1098
    %v1100 = vrcp.pop %v1097
    %v1101 = vmul.f32 1.0, %v1100
    %v1102 = vtanh.pop %v1089
    %v1104 = vrot.slane %v1000, 6
    %v1106 = vmul.f32 %v1099, %v1104
    %1108 = vrot.lane.b32.xlu0 %v1102, 64
    %v1109 = vpop.permute.xlu0 %1108
    %v1111 = vmul.f32 %v1099, %v1109
    %1113 = vrot.lane.b32.xlu0 %v1111, 64
    %v1114 = vpop.permute.xlu0 %1113
    %v1116 = vadd.f32 %v1106, %v1114
    %v1117 = vtanh.pop %v1116
    %1119 = vrot.lane.b32.xlu0 %v1117, 64
    %v1120 = vpop.permute.xlu0 %1119
    %v1122 = vmul.f32 %v1101, %v1120
    %v1124 = vrot.slane %v1122, 4
    %v1125 = vsel %vm308, %v1124, 0
    %1127 = vmatprep.subr.mxu0 %v189
    %1128 = vmatpush1.msra.mxu0 %v188
    %1129 = vmatprep.subr.mxu0 %v191
    %1130 = vmatpush1.msra.mxu0 %v190
    %1131 = vmatprep.subr.mxu0 %v193
    %1132 = vmatpush1.msra.mxu0 %v192
    %1133 = vmatprep.subr.mxu0 %v195
    %1134 = vmatpush1.msra.mxu0 %v194
    %1135 = vmatprep.subr.mxu0 %v197
    %1136 = vmatpush1.msra.mxu0 %v196
    %1137 = vmatprep.subr.mxu0 %v199
    %1138 = vmatpush1.msra.mxu0 %v198
    %1139 = vmatprep.subr.mxu0 %v201
    %1140 = vmatpush1.msra.mxu0 %v200
    %1141 = vmatprep.subr.mxu0 %v203
    %1142 = vmatpush1.msra.mxu0 %v202
    %1143 = vmatprep.subr.mxu0 0.0
    %1144 = vmatpush1.msra.mxu0 0.0
    %1145 = vmatprep.subr.mxu0 0.0
    %1146 = vmatpush1.msra.mxu0 0.0
    %1147 = vmatprep.subr.mxu0 0.0
    %1148 = vmatpush1.msra.mxu0 0.0
    %1149 = vmatprep.subr.mxu0 0.0
    %1150 = vmatpush1.msra.mxu0 0.0
    %1151 = vmatprep.subr.mxu0 0.0
    %1152 = vmatpush1.msra.mxu0 0.0
    %1153 = vmatprep.subr.mxu0 0.0
    %1154 = vmatpush1.msra.mxu0 0.0
    %1155 = vmatprep.subr.mxu0 0.0
    %1156 = vmatpush1.msra.mxu0 0.0
    %1157 = vmatprep.subr.mxu0 0.0
    %1158 = vmatpush1.msra.mxu0 0.0
    %1159 = vmatprep.subr.mxu0 0.0
    %1160 = vmatpush1.msra.mxu0 0.0
    %1161 = vmatprep.subr.mxu0 0.0
    %1162 = vmatpush1.msra.mxu0 0.0
    %1163 = vmatprep.subr.mxu0 0.0
    %1164 = vmatpush1.msra.mxu0 0.0
    %1165 = vmatprep.subr.mxu0 0.0
    %1166 = vmatpush1.msra.mxu0 0.0
    %1167 = vmatprep.subr.mxu0 0.0
    %1168 = vmatpush1.msra.mxu0 0.0
    %1169 = vmatprep.subr.mxu0 0.0
    %1170 = vmatpush1.msra.mxu0 0.0
    %1171 = vmatprep.subr.mxu0 0.0
    %1172 = vmatpush1.msra.mxu0 0.0
    %1173 = vmatprep.subr.mxu0 0.0
    %1174 = vmatpush1.msra.mxu0 0.0
    %1175 = vmatprep.subr.mxu0 0.0
    %1176 = vmatpush1.msra.mxu0 0.0
    %1177 = vmatprep.subr.mxu0 0.0
    %1178 = vmatpush1.msra.mxu0 0.0
    %1179 = vmatprep.subr.mxu0 0.0
    %1180 = vmatpush1.msra.mxu0 0.0
    %1181 = vmatprep.subr.mxu0 0.0
    %1182 = vmatpush1.msra.mxu0 0.0
    %1183 = vmatprep.subr.mxu0 0.0
    %1184 = vmatpush1.msra.mxu0 0.0
    %1185 = vmatprep.subr.mxu0 0.0
    %1186 = vmatpush1.msra.mxu0 0.0
    %1187 = vmatprep.subr.mxu0 0.0
    %1188 = vmatpush1.msra.mxu0 0.0
    %1189 = vmatprep.subr.mxu0 0.0
    %1190 = vmatpush1.msra.mxu0 0.0
    %1191 = vmatprep.mubr.f32.mxu0 0.0
    %1192 = vmatmul.mubr.f32.gmra.mrb[0].mxu0 %v1125
    %v1193 = vpop.f32.mrb[0].mxu0
    %v1194 = vadd.f32 0.0, %v1193
    %v1195 = vpop.f32.mrb[0].mxu0
    %v1196 = vadd.f32 0.0, %v1195
    %1197 = vdwg.mxu0
    %v1200 = vrot.slane %v1194, 2
    %v1201 = vrot.slane %v1196, 2
    %v1204 = vadd.f32 %v890, %v1200
    %v1205 = vadd.f32 %v891, %v1201
    %v1206 = vxor.u32 %v1204, 2147483648
    %v1207 = vxor.u32 %v1205, 2147483648
    %v1208 = vmul.f32 %v1206, 1.442695
    %v1209 = vpow.pop %v1208
    %v1210 = vmul.f32 %v1207, 1.442695
    %v1211 = vpow.pop %v1210
    %v1212 = vadd.f32 %v1209, 1.0
    %v1213 = vadd.f32 %v1211, 1.0
    %v1214 = vrcp.pop %v1212
    %v1215 = vmul.f32 1.0, %v1214
    %v1216 = vrcp.pop %v1213
    %v1217 = vmul.f32 1.0, %v1216
    %v1218 = vtanh.pop %v1205
    %v1220 = vrot.slane %v1116, 6
    %v1222 = vmul.f32 %v1215, %v1220
    %1224 = vrot.lane.b32.xlu0 %v1218, 64
    %v1225 = vpop.permute.xlu0 %1224
    %v1227 = vmul.f32 %v1215, %v1225
    %1229 = vrot.lane.b32.xlu0 %v1227, 64
    %v1230 = vpop.permute.xlu0 %1229
    %v1232 = vadd.f32 %v1222, %v1230
    %v1233 = vtanh.pop %v1232
    %1235 = vrot.lane.b32.xlu0 %v1233, 64
    %v1236 = vpop.permute.xlu0 %1235
    %v1238 = vmul.f32 %v1217, %v1236
    %v1239 = vsel %vm132, %v414, %v535
    %v1240 = vsel %vm136, %v1239, %v651
    %v1241 = vsel %vm140, %v1240, %v767
    %v1242 = vsel %vm132, %v885, %v1006
    %v1243 = vsel %vm136, %v1242, %v1122
    %v1244 = vsel %vm140, %v1243, %v1238
    %v1246 = vrot.slane %v1238, 6
    %v1248 = vrot.slane %v1122, 2
    %v1250 = vrot.slane %v1006, 6
    %v1252 = vrot.slane %v885, 2
    %v1255 = vrot.slane %v651, 2
    %v1257 = vrot.slane %v535, 6
    %v1259 = vrot.slane %v414, 2
    %v1261 = vsel %vm132, %v1246, %v1248
    %v1262 = vsel %vm136, %v1261, %v1250
    %v1263 = vsel %vm140, %v1262, %v1252
    %v1264 = vsel %vm132, %v777, %v1255
    %v1265 = vsel %vm136, %v1264, %v1257
    %v1266 = vsel %vm140, %v1265, %v1259
    %v1267 = vsel %vm216, %v1241, %v1263
    %v1268 = vsel %vm216, %v1244, %v1266
    %v1269 = vld [vmem:[%s5] sm:$0xff]
    %v1270 = vld [vmem:[%s5 + $0x8] sm:$0xff]
    %v1271 = vld [vmem:[%s5 + $0x10] sm:$0xff]
    %v1272 = vld [vmem:[%s5 + $0x18] sm:$0xff]
    %v1273 = vld [vmem:[%s5 + $0x20] sm:$0xff]
    %v1274 = vld [vmem:[%s5 + $0x28] sm:$0xff]
    %v1275 = vld [vmem:[%s5 + $0x30] sm:$0xff]
    %v1276 = vld [vmem:[%s5 + $0x38] sm:$0xff]
    %v1277 = vld [vmem:[%s5 + $0x40] sm:$0xff]
    %v1278 = vld [vmem:[%s5 + $0x48] sm:$0xff]
    %v1279 = vld [vmem:[%s5 + $0x50] sm:$0xff]
    %v1280 = vld [vmem:[%s5 + $0x58] sm:$0xff]
    %v1281 = vld [vmem:[%s5 + $0x60] sm:$0xff]
    %v1282 = vld [vmem:[%s5 + $0x68] sm:$0xff]
    %v1283 = vld [vmem:[%s5 + $0x70] sm:$0xff]
    %v1284 = vld [vmem:[%s5 + $0x78] sm:$0xff]
    %v1285 = vld [vmem:[%s6] sm:$0xff]
    %v1286 = vld [vmem:[%s6 + $0x8] sm:$0xff]
    %v1287 = vld [vmem:[%s6 + $0x10] sm:$0xff]
    %v1288 = vld [vmem:[%s6 + $0x18] sm:$0xff]
    %v1289 = vld [vmem:[%s6 + $0x20] sm:$0xff]
    %v1290 = vld [vmem:[%s6 + $0x28] sm:$0xff]
    %v1291 = vld [vmem:[%s6 + $0x30] sm:$0xff]
    %v1292 = vld [vmem:[%s6 + $0x38] sm:$0xff]
    %v1293 = vld [vmem:[%s6 + $0x40] sm:$0xff]
    %v1294 = vld [vmem:[%s6 + $0x48] sm:$0xff]
    %v1295 = vld [vmem:[%s6 + $0x50] sm:$0xff]
    %v1296 = vld [vmem:[%s6 + $0x58] sm:$0xff]
    %v1297 = vld [vmem:[%s6 + $0x60] sm:$0xff]
    %v1298 = vld [vmem:[%s6 + $0x68] sm:$0xff]
    %v1299 = vld [vmem:[%s6 + $0x70] sm:$0xff]
    %v1300 = vld [vmem:[%s6 + $0x78] sm:$0xff]
    %v1301 = vld [vmem:[%s7] sm:$0x3]
    %v1303 = vlaneseq
    %v1304 = vshrl.u32 %v1303, 7
    %v1305 = vsub.s32 0, %v1304
    %v1306 = vrot.slane %v1301, %v1305
    %v1307 = vlaneseq
    %v1308 = vshrl.u32 %v1307, 7
    %v1309 = vsub.s32 1, %v1308
    %v1310 = vrot.slane %v1301, %v1309
    %v1314 = vsel %vm308, %v1267, 0
    %v1317 = vsel %vm308, %v1268, 0
    %1319 = vmatprep.subr.mxu0 %v1270
    %1320 = vmatpush1.msra.mxu0 %v1269
    %1321 = vmatprep.subr.mxu0 %v1272
    %1322 = vmatpush1.msra.mxu0 %v1271
    %1323 = vmatprep.subr.mxu0 %v1274
    %1324 = vmatpush1.msra.mxu0 %v1273
    %1325 = vmatprep.subr.mxu0 %v1276
    %1326 = vmatpush1.msra.mxu0 %v1275
    %1327 = vmatprep.subr.mxu0 %v1278
    %1328 = vmatpush1.msra.mxu0 %v1277
    %1329 = vmatprep.subr.mxu0 %v1280
    %1330 = vmatpush1.msra.mxu0 %v1279
    %1331 = vmatprep.subr.mxu0 %v1282
    %1332 = vmatpush1.msra.mxu0 %v1281
    %1333 = vmatprep.subr.mxu0 %v1284
    %1334 = vmatpush1.msra.mxu0 %v1283
    %1335 = vmatprep.subr.mxu0 0.0
    %1336 = vmatpush1.msra.mxu0 0.0
    %1337 = vmatprep.subr.mxu0 0.0
    %1338 = vmatpush1.msra.mxu0 0.0
    %1339 = vmatprep.subr.mxu0 0.0
    %1340 = vmatpush1.msra.mxu0 0.0
    %1341 = vmatprep.subr.mxu0 0.0
    %1342 = vmatpush1.msra.mxu0 0.0
    %1343 = vmatprep.subr.mxu0 0.0
    %1344 = vmatpush1.msra.mxu0 0.0
    %1345 = vmatprep.subr.mxu0 0.0
    %1346 = vmatpush1.msra.mxu0 0.0
    %1347 = vmatprep.subr.mxu0 0.0
    %1348 = vmatpush1.msra.mxu0 0.0
    %1349 = vmatprep.subr.mxu0 0.0
    %1350 = vmatpush1.msra.mxu0 0.0
    %1351 = vmatprep.subr.mxu0 0.0
    %1352 = vmatpush1.msra.mxu0 0.0
    %1353 = vmatprep.subr.mxu0 0.0
    %1354 = vmatpush1.msra.mxu0 0.0
    %1355 = vmatprep.subr.mxu0 0.0
    %1356 = vmatpush1.msra.mxu0 0.0
    %1357 = vmatprep.subr.mxu0 0.0
    %1358 = vmatpush1.msra.mxu0 0.0
    %1359 = vmatprep.subr.mxu0 0.0
    %1360 = vmatpush1.msra.mxu0 0.0
    %1361 = vmatprep.subr.mxu0 0.0
    %1362 = vmatpush1.msra.mxu0 0.0
    %1363 = vmatprep.subr.mxu0 0.0
    %1364 = vmatpush1.msra.mxu0 0.0
    %1365 = vmatprep.subr.mxu0 0.0
    %1366 = vmatpush1.msra.mxu0 0.0
    %1367 = vmatprep.subr.mxu0 0.0
    %1368 = vmatpush1.msra.mxu0 0.0
    %1369 = vmatprep.subr.mxu0 0.0
    %1370 = vmatpush1.msra.mxu0 0.0
    %1371 = vmatprep.subr.mxu0 0.0
    %1372 = vmatpush1.msra.mxu0 0.0
    %1373 = vmatprep.subr.mxu0 0.0
    %1374 = vmatpush1.msra.mxu0 0.0
    %1375 = vmatprep.subr.mxu0 0.0
    %1376 = vmatpush1.msra.mxu0 0.0
    %1377 = vmatprep.subr.mxu0 0.0
    %1378 = vmatpush1.msra.mxu0 0.0
    %1379 = vmatprep.subr.mxu0 0.0
    %1380 = vmatpush1.msra.mxu0 0.0
    %1381 = vmatprep.subr.mxu0 0.0
    %1382 = vmatpush1.msra.mxu0 0.0
    %1383 = vmatprep.mubr.f32.mxu0 0.0
    %1384 = vmatmul.mubr.f32.gmra.mrb[0].mxu0 %v1314
    %v1385 = vpop.f32.mrb[0].mxu0
    %v1386 = vadd.f32 %v1306, %v1385
    %v1387 = vpop.f32.mrb[0].mxu0
    %v1388 = vadd.f32 %v1310, %v1387
    %1389 = vmatprep.mubr.f32.mxu0 0.0
    %1390 = vmatmul.mubr.f32.gmra.mrb[0].mxu0 %v1317
    %v1391 = vpop.f32.mrb[0].mxu0
    %v1392 = vadd.f32 %v1306, %v1391
    %v1393 = vpop.f32.mrb[0].mxu0
    %v1394 = vadd.f32 %v1310, %v1393
    %1395 = vdwg.mxu0
    %v1398 = vrot.slane %v1392, 6
    %v1399 = vrot.slane %v1394, 6
    %v1402 = vsel %vm178, %v1386, %v1398
    %v1403 = vsel %vm179, %v1388, %v1399
    %1404 = vmatprep.subr.mxu0 %v1286
    %1405 = vmatpush1.msra.mxu0 %v1285
    %1406 = vmatprep.subr.mxu0 %v1288
    %1407 = vmatpush1.msra.mxu0 %v1287
    %1408 = vmatprep.subr.mxu0 %v1290
    %1409 = vmatpush1.msra.mxu0 %v1289
    %1410 = vmatprep.subr.mxu0 %v1292
    %1411 = vmatpush1.msra.mxu0 %v1291
    %1412 = vmatprep.subr.mxu0 %v1294
    %1413 = vmatpush1.msra.mxu0 %v1293
    %1414 = vmatprep.subr.mxu0 %v1296
    %1415 = vmatpush1.msra.mxu0 %v1295
    %1416 = vmatprep.subr.mxu0 %v1298
    %1417 = vmatpush1.msra.mxu0 %v1297
    %1418 = vmatprep.subr.mxu0 %v1300
    %1419 = vmatpush1.msra.mxu0 %v1299
    %1420 = vmatprep.subr.mxu0 0.0
    %1421 = vmatpush1.msra.mxu0 0.0
    %1422 = vmatprep.subr.mxu0 0.0
    %1423 = vmatpush1.msra.mxu0 0.0
    %1424 = vmatprep.subr.mxu0 0.0
    %1425 = vmatpush1.msra.mxu0 0.0
    %1426 = vmatprep.subr.mxu0 0.0
    %1427 = vmatpush1.msra.mxu0 0.0
    %1428 = vmatprep.subr.mxu0 0.0
    %1429 = vmatpush1.msra.mxu0 0.0
    %1430 = vmatprep.subr.mxu0 0.0
    %1431 = vmatpush1.msra.mxu0 0.0
    %1432 = vmatprep.subr.mxu0 0.0
    %1433 = vmatpush1.msra.mxu0 0.0
    %1434 = vmatprep.subr.mxu0 0.0
    %1435 = vmatpush1.msra.mxu0 0.0
    %1436 = vmatprep.subr.mxu0 0.0
    %1437 = vmatpush1.msra.mxu0 0.0
    %1438 = vmatprep.subr.mxu0 0.0
    %1439 = vmatpush1.msra.mxu0 0.0
    %1440 = vmatprep.subr.mxu0 0.0
    %1441 = vmatpush1.msra.mxu0 0.0
    %1442 = vmatprep.subr.mxu0 0.0
    %1443 = vmatpush1.msra.mxu0 0.0
    %1444 = vmatprep.subr.mxu0 0.0
    %1445 = vmatpush1.msra.mxu0 0.0
    %1446 = vmatprep.subr.mxu0 0.0
    %1447 = vmatpush1.msra.mxu0 0.0
    %1448 = vmatprep.subr.mxu0 0.0
    %1449 = vmatpush1.msra.mxu0 0.0
    %1450 = vmatprep.subr.mxu0 0.0
    %1451 = vmatpush1.msra.mxu0 0.0
    %1452 = vmatprep.subr.mxu0 0.0
    %1453 = vmatpush1.msra.mxu0 0.0
    %1454 = vmatprep.subr.mxu0 0.0
    %1455 = vmatpush1.msra.mxu0 0.0
    %1456 = vmatprep.subr.mxu0 0.0
    %1457 = vmatpush1.msra.mxu0 0.0
    %1458 = vmatprep.subr.mxu0 0.0
    %1459 = vmatpush1.msra.mxu0 0.0
    %1460 = vmatprep.subr.mxu0 0.0
    %1461 = vmatpush1.msra.mxu0 0.0
    %1462 = vmatprep.subr.mxu0 0.0
    %1463 = vmatpush1.msra.mxu0 0.0
    %1464 = vmatprep.subr.mxu0 0.0
    %1465 = vmatpush1.msra.mxu0 0.0
    %1466 = vmatprep.subr.mxu0 0.0
    %1467 = vmatpush1.msra.mxu0 0.0
    %1468 = vmatprep.mubr.f32.mxu0 0.0
    %1469 = vmatmul.mubr.f32.gmra.mrb[0].mxu0 %v310
    %v1470 = vpop.f32.mrb[0].mxu0
    %v1471 = vadd.f32 0.0, %v1470
    %v1472 = vpop.f32.mrb[0].mxu0
    %v1473 = vadd.f32 0.0, %v1472
    %1474 = vdwg.mxu0
    %v1475 = vadd.f32 %v1402, %v1471
    %v1476 = vadd.f32 %v1403, %v1473
    %v1477 = vxor.u32 %v1475, 2147483648
    %v1478 = vxor.u32 %v1476, 2147483648
    %v1479 = vmul.f32 %v1477, 1.442695
    %v1480 = vpow.pop %v1479
    %v1481 = vmul.f32 %v1478, 1.442695
    %v1482 = vpow.pop %v1481
    %v1483 = vadd.f32 %v1480, 1.0
    %v1484 = vadd.f32 %v1482, 1.0
    %v1485 = vrcp.pop %v1483
    %v1486 = vmul.f32 1.0, %v1485
    %v1487 = vrcp.pop %v1484
    %v1488 = vmul.f32 1.0, %v1487
    %v1489 = vtanh.pop %v1476
    %v1490 = vmul.f32 %v1486, 0.0
    %1492 = vrot.lane.b32.xlu0 %v1489, 64
    %v1493 = vpop.permute.xlu0 %1492
    %v1495 = vmul.f32 %v1486, %v1493
    %1497 = vrot.lane.b32.xlu0 %v1495, 64
    %v1498 = vpop.permute.xlu0 %1497
    %v1500 = vadd.f32 %v1490, %v1498
    %v1501 = vtanh.pop %v1500
    %1503 = vrot.lane.b32.xlu0 %v1501, 64
    %v1504 = vpop.permute.xlu0 %1503
    %v1506 = vmul.f32 %v1488, %v1504
    %v1507 = vrot.slane %v1392, 2
    %v1508 = vrot.slane %v1394, 2
    %v1511 = vsel %vm178, %v1386, %v1507
    %v1512 = vsel %vm179, %v1388, %v1508
    %v1514 = vsel %vm308, %v1506, 0
    %1516 = vmatprep.subr.mxu0 %v1286
    %1517 = vmatpush1.msra.mxu0 %v1285
    %1518 = vmatprep.subr.mxu0 %v1288
    %1519 = vmatpush1.msra.mxu0 %v1287
    %1520 = vmatprep.subr.mxu0 %v1290
    %1521 = vmatpush1.msra.mxu0 %v1289
    %1522 = vmatprep.subr.mxu0 %v1292
    %1523 = vmatpush1.msra.mxu0 %v1291
    %1524 = vmatprep.subr.mxu0 %v1294
    %1525 = vmatpush1.msra.mxu0 %v1293
    %1526 = vmatprep.subr.mxu0 %v1296
    %1527 = vmatpush1.msra.mxu0 %v1295
    %1528 = vmatprep.subr.mxu0 %v1298
    %1529 = vmatpush1.msra.mxu0 %v1297
    %1530 = vmatprep.subr.mxu0 %v1300
    %1531 = vmatpush1.msra.mxu0 %v1299
    %1532 = vmatprep.subr.mxu0 0.0
    %1533 = vmatpush1.msra.mxu0 0.0
    %1534 = vmatprep.subr.mxu0 0.0
    %1535 = vmatpush1.msra.mxu0 0.0
    %1536 = vmatprep.subr.mxu0 0.0
    %1537 = vmatpush1.msra.mxu0 0.0
    %1538 = vmatprep.subr.mxu0 0.0
    %1539 = vmatpush1.msra.mxu0 0.0
    %1540 = vmatprep.subr.mxu0 0.0
    %1541 = vmatpush1.msra.mxu0 0.0
    %1542 = vmatprep.subr.mxu0 0.0
    %1543 = vmatpush1.msra.mxu0 0.0
    %1544 = vmatprep.subr.mxu0 0.0
    %1545 = vmatpush1.msra.mxu0 0.0
    %1546 = vmatprep.subr.mxu0 0.0
    %1547 = vmatpush1.msra.mxu0 0.0
    %1548 = vmatprep.subr.mxu0 0.0
    %1549 = vmatpush1.msra.mxu0 0.0
    %1550 = vmatprep.subr.mxu0 0.0
    %1551 = vmatpush1.msra.mxu0 0.0
    %1552 = vmatprep.subr.mxu0 0.0
    %1553 = vmatpush1.msra.mxu0 0.0
    %1554 = vmatprep.subr.mxu0 0.0
    %1555 = vmatpush1.msra.mxu0 0.0
    %1556 = vmatprep.subr.mxu0 0.0
    %1557 = vmatpush1.msra.mxu0 0.0
    %1558 = vmatprep.subr.mxu0 0.0
    %1559 = vmatpush1.msra.mxu0 0.0
    %1560 = vmatprep.subr.mxu0 0.0
    %1561 = vmatpush1.msra.mxu0 0.0
    %1562 = vmatprep.subr.mxu0 0.0
    %1563 = vmatpush1.msra.mxu0 0.0
    %1564 = vmatprep.subr.mxu0 0.0
    %1565 = vmatpush1.msra.mxu0 0.0
    %1566 = vmatprep.subr.mxu0 0.0
    %1567 = vmatpush1.msra.mxu0 0.0
    %1568 = vmatprep.subr.mxu0 0.0
    %1569 = vmatpush1.msra.mxu0 0.0
    %1570 = vmatprep.subr.mxu0 0.0
    %1571 = vmatpush1.msra.mxu0 0.0
    %1572 = vmatprep.subr.mxu0 0.0
    %1573 = vmatpush1.msra.mxu0 0.0
    %1574 = vmatprep.subr.mxu0 0.0
    %1575 = vmatpush1.msra.mxu0 0.0
    %1576 = vmatprep.subr.mxu0 0.0
    %1577 = vmatpush1.msra.mxu0 0.0
    %1578 = vmatprep.subr.mxu0 0.0
    %1579 = vmatpush1.msra.mxu0 0.0
    %1580 = vmatprep.mubr.f32.mxu0 0.0
    %1581 = vmatmul.mubr.f32.gmra.mrb[0].mxu0 %v1514
    %v1582 = vpop.f32.mrb[0].mxu0
    %v1583 = vadd.f32 0.0, %v1582
    %v1584 = vpop.f32.mrb[0].mxu0
    %v1585 = vadd.f32 0.0, %v1584
    %1586 = vdwg.mxu0
    %v1589 = vrot.slane %v1583, 6
    %v1590 = vrot.slane %v1585, 6
    %v1593 = vadd.f32 %v1511, %v1589
    %v1594 = vadd.f32 %v1512, %v1590
    %v1595 = vxor.u32 %v1593, 2147483648
    %v1596 = vxor.u32 %v1594, 2147483648
    %v1597 = vmul.f32 %v1595, 1.442695
    %v1598 = vpow.pop %v1597
    %v1599 = vmul.f32 %v1596, 1.442695
    %v1600 = vpow.pop %v1599
    %v1601 = vadd.f32 %v1598, 1.0
    %v1602 = vadd.f32 %v1600, 1.0
    %v1603 = vrcp.pop %v1601
    %v1604 = vmul.f32 1.0, %v1603
    %v1605 = vrcp.pop %v1602
    %v1606 = vmul.f32 1.0, %v1605
    %v1607 = vtanh.pop %v1594
    %v1609 = vrot.slane %v1500, 6
    %v1611 = vmul.f32 %v1604, %v1609
    %1613 = vrot.lane.b32.xlu0 %v1607, 64
    %v1614 = vpop.permute.xlu0 %1613
    %v1616 = vmul.f32 %v1604, %v1614
    %1618 = vrot.lane.b32.xlu0 %v1616, 64
    %v1619 = vpop.permute.xlu0 %1618
    %v1621 = vadd.f32 %v1611, %v1619
    %v1622 = vtanh.pop %v1621
    %1624 = vrot.lane.b32.xlu0 %v1622, 64
    %v1625 = vpop.permute.xlu0 %1624
    %v1627 = vmul.f32 %v1606, %v1625
    %v1629 = vrot.slane %v1627, 2
    %v1630 = vsel %vm308, %v1629, 0
    %1632 = vmatprep.subr.mxu0 %v1286
    %1633 = vmatpush1.msra.mxu0 %v1285
    %1634 = vmatprep.subr.mxu0 %v1288
    %1635 = vmatpush1.msra.mxu0 %v1287
    %1636 = vmatprep.subr.mxu0 %v1290
    %1637 = vmatpush1.msra.mxu0 %v1289
    %1638 = vmatprep.subr.mxu0 %v1292
    %1639 = vmatpush1.msra.mxu0 %v1291
    %1640 = vmatprep.subr.mxu0 %v1294
    %1641 = vmatpush1.msra.mxu0 %v1293
    %1642 = vmatprep.subr.mxu0 %v1296
    %1643 = vmatpush1.msra.mxu0 %v1295
    %1644 = vmatprep.subr.mxu0 %v1298
    %1645 = vmatpush1.msra.mxu0 %v1297
    %1646 = vmatprep.subr.mxu0 %v1300
    %1647 = vmatpush1.msra.mxu0 %v1299
    %1648 = vmatprep.subr.mxu0 0.0
    %1649 = vmatpush1.msra.mxu0 0.0
    %1650 = vmatprep.subr.mxu0 0.0
    %1651 = vmatpush1.msra.mxu0 0.0
    %1652 = vmatprep.subr.mxu0 0.0
    %1653 = vmatpush1.msra.mxu0 0.0
    %1654 = vmatprep.subr.mxu0 0.0
    %1655 = vmatpush1.msra.mxu0 0.0
    %1656 = vmatprep.subr.mxu0 0.0
    %1657 = vmatpush1.msra.mxu0 0.0
    %1658 = vmatprep.subr.mxu0 0.0
    %1659 = vmatpush1.msra.mxu0 0.0
    %1660 = vmatprep.subr.mxu0 0.0
    %1661 = vmatpush1.msra.mxu0 0.0
    %1662 = vmatprep.subr.mxu0 0.0
    %1663 = vmatpush1.msra.mxu0 0.0
    %1664 = vmatprep.subr.mxu0 0.0
    %1665 = vmatpush1.msra.mxu0 0.0
    %1666 = vmatprep.subr.mxu0 0.0
    %1667 = vmatpush1.msra.mxu0 0.0
    %1668 = vmatprep.subr.mxu0 0.0
    %1669 = vmatpush1.msra.mxu0 0.0
    %1670 = vmatprep.subr.mxu0 0.0
    %1671 = vmatpush1.msra.mxu0 0.0
    %1672 = vmatprep.subr.mxu0 0.0
    %1673 = vmatpush1.msra.mxu0 0.0
    %1674 = vmatprep.subr.mxu0 0.0
    %1675 = vmatpush1.msra.mxu0 0.0
    %1676 = vmatprep.subr.mxu0 0.0
    %1677 = vmatpush1.msra.mxu0 0.0
    %1678 = vmatprep.subr.mxu0 0.0
    %1679 = vmatpush1.msra.mxu0 0.0
    %1680 = vmatprep.subr.mxu0 0.0
    %1681 = vmatpush1.msra.mxu0 0.0
    %1682 = vmatprep.subr.mxu0 0.0
    %1683 = vmatpush1.msra.mxu0 0.0
    %1684 = vmatprep.subr.mxu0 0.0
    %1685 = vmatpush1.msra.mxu0 0.0
    %1686 = vmatprep.subr.mxu0 0.0
    %1687 = vmatpush1.msra.mxu0 0.0
    %1688 = vmatprep.subr.mxu0 0.0
    %1689 = vmatpush1.msra.mxu0 0.0
    %1690 = vmatprep.subr.mxu0 0.0
    %1691 = vmatpush1.msra.mxu0 0.0
    %1692 = vmatprep.subr.mxu0 0.0
    %1693 = vmatpush1.msra.mxu0 0.0
    %1694 = vmatprep.subr.mxu0 0.0
    %1695 = vmatpush1.msra.mxu0 0.0
    %1696 = vmatprep.mubr.f32.mxu0 0.0
    %1697 = vmatmul.mubr.f32.gmra.mrb[0].mxu0 %v1630
    %v1698 = vpop.f32.mrb[0].mxu0
    %v1699 = vadd.f32 0.0, %v1698
    %v1700 = vpop.f32.mrb[0].mxu0
    %v1701 = vadd.f32 0.0, %v1700
    %1702 = vdwg.mxu0
    %v1705 = vrot.slane %v1699, 4
    %v1706 = vrot.slane %v1701, 4
    %v1709 = vadd.f32 %v1402, %v1705
    %v1710 = vadd.f32 %v1403, %v1706
    %v1711 = vxor.u32 %v1709, 2147483648
    %v1712 = vxor.u32 %v1710, 2147483648
    %v1713 = vmul.f32 %v1711, 1.442695
    %v1714 = vpow.pop %v1713
    %v1715 = vmul.f32 %v1712, 1.442695
    %v1716 = vpow.pop %v1715
    %v1717 = vadd.f32 %v1714, 1.0
    %v1718 = vadd.f32 %v1716, 1.0
    %v1719 = vrcp.pop %v1717
    %v1720 = vmul.f32 1.0, %v1719
    %v1721 = vrcp.pop %v1718
    %v1722 = vmul.f32 1.0, %v1721
    %v1723 = vtanh.pop %v1710
    %v1725 = vrot.slane %v1621, 6
    %v1727 = vmul.f32 %v1720, %v1725
    %1729 = vrot.lane.b32.xlu0 %v1723, 64
    %v1730 = vpop.permute.xlu0 %1729
    %v1732 = vmul.f32 %v1720, %v1730
    %1734 = vrot.lane.b32.xlu0 %v1732, 64
    %v1735 = vpop.permute.xlu0 %1734
    %v1737 = vadd.f32 %v1727, %v1735
    %v1738 = vtanh.pop %v1737
    %1740 = vrot.lane.b32.xlu0 %v1738, 64
    %v1741 = vpop.permute.xlu0 %1740
    %v1743 = vmul.f32 %v1722, %v1741
    %v1745 = vrot.slane %v1743, 4
    %v1746 = vsel %vm308, %v1745, 0
    %1748 = vmatprep.subr.mxu0 %v1286
    %1749 = vmatpush1.msra.mxu0 %v1285
    %1750 = vmatprep.subr.mxu0 %v1288
    %1751 = vmatpush1.msra.mxu0 %v1287
    %1752 = vmatprep.subr.mxu0 %v1290
    %1753 = vmatpush1.msra.mxu0 %v1289
    %1754 = vmatprep.subr.mxu0 %v1292
    %1755 = vmatpush1.msra.mxu0 %v1291
    %1756 = vmatprep.subr.mxu0 %v1294
    %1757 = vmatpush1.msra.mxu0 %v1293
    %1758 = vmatprep.subr.mxu0 %v1296
    %1759 = vmatpush1.msra.mxu0 %v1295
    %1760 = vmatprep.subr.mxu0 %v1298
    %1761 = vmatpush1.msra.mxu0 %v1297
    %1762 = vmatprep.subr.mxu0 %v1300
    %1763 = vmatpush1.msra.mxu0 %v1299
    %1764 = vmatprep.subr.mxu0 0.0
    %1765 = vmatpush1.msra.mxu0 0.0
    %1766 = vmatprep.subr.mxu0 0.0
    %1767 = vmatpush1.msra.mxu0 0.0
    %1768 = vmatprep.subr.mxu0 0.0
    %1769 = vmatpush1.msra.mxu0 0.0
    %1770 = vmatprep.subr.mxu0 0.0
    %1771 = vmatpush1.msra.mxu0 0.0
    %1772 = vmatprep.subr.mxu0 0.0
    %1773 = vmatpush1.msra.mxu0 0.0
    %1774 = vmatprep.subr.mxu0 0.0
    %1775 = vmatpush1.msra.mxu0 0.0
    %1776 = vmatprep.subr.mxu0 0.0
    %1777 = vmatpush1.msra.mxu0 0.0
    %1778 = vmatprep.subr.mxu0 0.0
    %1779 = vmatpush1.msra.mxu0 0.0
    %1780 = vmatprep.subr.mxu0 0.0
    %1781 = vmatpush1.msra.mxu0 0.0
    %1782 = vmatprep.subr.mxu0 0.0
    %1783 = vmatpush1.msra.mxu0 0.0
    %1784 = vmatprep.subr.mxu0 0.0
    %1785 = vmatpush1.msra.mxu0 0.0
    %1786 = vmatprep.subr.mxu0 0.0
    %1787 = vmatpush1.msra.mxu0 0.0
    %1788 = vmatprep.subr.mxu0 0.0
    %1789 = vmatpush1.msra.mxu0 0.0
    %1790 = vmatprep.subr.mxu0 0.0
    %1791 = vmatpush1.msra.mxu0 0.0
    %1792 = vmatprep.subr.mxu0 0.0
    %1793 = vmatpush1.msra.mxu0 0.0
    %1794 = vmatprep.subr.mxu0 0.0
    %1795 = vmatpush1.msra.mxu0 0.0
    %1796 = vmatprep.subr.mxu0 0.0
    %1797 = vmatpush1.msra.mxu0 0.0
    %1798 = vmatprep.subr.mxu0 0.0
    %1799 = vmatpush1.msra.mxu0 0.0
    %1800 = vmatprep.subr.mxu0 0.0
    %1801 = vmatpush1.msra.mxu0 0.0
    %1802 = vmatprep.subr.mxu0 0.0
    %1803 = vmatpush1.msra.mxu0 0.0
    %1804 = vmatprep.subr.mxu0 0.0
    %1805 = vmatpush1.msra.mxu0 0.0
    %1806 = vmatprep.subr.mxu0 0.0
    %1807 = vmatpush1.msra.mxu0 0.0
    %1808 = vmatprep.subr.mxu0 0.0
    %1809 = vmatpush1.msra.mxu0 0.0
    %1810 = vmatprep.subr.mxu0 0.0
    %1811 = vmatpush1.msra.mxu0 0.0
    %1812 = vmatprep.mubr.f32.mxu0 0.0
    %1813 = vmatmul.mubr.f32.gmra.mrb[0].mxu0 %v1746
    %v1814 = vpop.f32.mrb[0].mxu0
    %v1815 = vadd.f32 0.0, %v1814
    %v1816 = vpop.f32.mrb[0].mxu0
    %v1817 = vadd.f32 0.0, %v1816
    %1818 = vdwg.mxu0
    %v1821 = vrot.slane %v1815, 2
    %v1822 = vrot.slane %v1817, 2
    %v1825 = vadd.f32 %v1511, %v1821
    %v1826 = vadd.f32 %v1512, %v1822
    %v1827 = vxor.u32 %v1825, 2147483648
    %v1828 = vxor.u32 %v1826, 2147483648
    %v1829 = vmul.f32 %v1827, 1.442695
    %v1830 = vpow.pop %v1829
    %v1831 = vmul.f32 %v1828, 1.442695
    %v1832 = vpow.pop %v1831
    %v1833 = vadd.f32 %v1830, 1.0
    %v1834 = vadd.f32 %v1832, 1.0
    %v1835 = vrcp.pop %v1833
    %v1836 = vmul.f32 1.0, %v1835
    %v1837 = vrcp.pop %v1834
    %v1838 = vmul.f32 1.0, %v1837
    %v1839 = vtanh.pop %v1826
    %v1841 = vrot.slane %v1737, 6
    %v1843 = vmul.f32 %v1836, %v1841
    %1845 = vrot.lane.b32.xlu0 %v1839, 64
    %v1846 = vpop.permute.xlu0 %1845
    %v1848 = vmul.f32 %v1836, %v1846
    %1850 = vrot.lane.b32.xlu0 %v1848, 64
    %v1851 = vpop.permute.xlu0 %1850
    %v1853 = vadd.f32 %v1843, %v1851
    %v1854 = vtanh.pop %v1853
    %1856 = vrot.lane.b32.xlu0 %v1854, 64
    %v1857 = vpop.permute.xlu0 %1856
    %v1859 = vmul.f32 %v1838, %v1857
    %v1862 = vrot.slane %v1386, 6
    %v1863 = vrot.slane %v1388, 6
    %v1866 = vsel %vm178, %v1392, %v1862
    %v1867 = vsel %vm179, %v1394, %v1863
    %v1869 = vrot.slane %v1859, 6
    %v1870 = vsel %vm308, %v1869, 0
    %1872 = vmatprep.subr.mxu0 %v1286
    %1873 = vmatpush1.msra.mxu0 %v1285
    %1874 = vmatprep.subr.mxu0 %v1288
    %1875 = vmatpush1.msra.mxu0 %v1287
    %1876 = vmatprep.subr.mxu0 %v1290
    %1877 = vmatpush1.msra.mxu0 %v1289
    %1878 = vmatprep.subr.mxu0 %v1292
    %1879 = vmatpush1.msra.mxu0 %v1291
    %1880 = vmatprep.subr.mxu0 %v1294
    %1881 = vmatpush1.msra.mxu0 %v1293
    %1882 = vmatprep.subr.mxu0 %v1296
    %1883 = vmatpush1.msra.mxu0 %v1295
    %1884 = vmatprep.subr.mxu0 %v1298
    %1885 = vmatpush1.msra.mxu0 %v1297
    %1886 = vmatprep.subr.mxu0 %v1300
    %1887 = vmatpush1.msra.mxu0 %v1299
    %1888 = vmatprep.subr.mxu0 0.0
    %1889 = vmatpush1.msra.mxu0 0.0
    %1890 = vmatprep.subr.mxu0 0.0
    %1891 = vmatpush1.msra.mxu0 0.0
    %1892 = vmatprep.subr.mxu0 0.0
    %1893 = vmatpush1.msra.mxu0 0.0
    %1894 = vmatprep.subr.mxu0 0.0
    %1895 = vmatpush1.msra.mxu0 0.0
    %1896 = vmatprep.subr.mxu0 0.0
    %1897 = vmatpush1.msra.mxu0 0.0
    %1898 = vmatprep.subr.mxu0 0.0
    %1899 = vmatpush1.msra.mxu0 0.0
    %1900 = vmatprep.subr.mxu0 0.0
    %1901 = vmatpush1.msra.mxu0 0.0
    %1902 = vmatprep.subr.mxu0 0.0
    %1903 = vmatpush1.msra.mxu0 0.0
    %1904 = vmatprep.subr.mxu0 0.0
    %1905 = vmatpush1.msra.mxu0 0.0
    %1906 = vmatprep.subr.mxu0 0.0
    %1907 = vmatpush1.msra.mxu0 0.0
    %1908 = vmatprep.subr.mxu0 0.0
    %1909 = vmatpush1.msra.mxu0 0.0
    %1910 = vmatprep.subr.mxu0 0.0
    %1911 = vmatpush1.msra.mxu0 0.0
    %1912 = vmatprep.subr.mxu0 0.0
    %1913 = vmatpush1.msra.mxu0 0.0
    %1914 = vmatprep.subr.mxu0 0.0
    %1915 = vmatpush1.msra.mxu0 0.0
    %1916 = vmatprep.subr.mxu0 0.0
    %1917 = vmatpush1.msra.mxu0 0.0
    %1918 = vmatprep.subr.mxu0 0.0
    %1919 = vmatpush1.msra.mxu0 0.0
    %1920 = vmatprep.subr.mxu0 0.0
    %1921 = vmatpush1.msra.mxu0 0.0
    %1922 = vmatprep.subr.mxu0 0.0
    %1923 = vmatpush1.msra.mxu0 0.0
    %1924 = vmatprep.subr.mxu0 0.0
    %1925 = vmatpush1.msra.mxu0 0.0
    %1926 = vmatprep.subr.mxu0 0.0
    %1927 = vmatpush1.msra.mxu0 0.0
    %1928 = vmatprep.subr.mxu0 0.0
    %1929 = vmatpush1.msra.mxu0 0.0
    %1930 = vmatprep.subr.mxu0 0.0
    %1931 = vmatpush1.msra.mxu0 0.0
    %1932 = vmatprep.subr.mxu0 0.0
    %1933 = vmatpush1.msra.mxu0 0.0
    %1934 = vmatprep.subr.mxu0 0.0
    %1935 = vmatpush1.msra.mxu0 0.0
    %1936 = vmatprep.mubr.f32.mxu0 0.0
    %1937 = vmatmul.mubr.f32.gmra.mrb[0].mxu0 %v1870
    %v1938 = vpop.f32.mrb[0].mxu0
    %v1939 = vadd.f32 0.0, %v1938
    %v1940 = vpop.f32.mrb[0].mxu0
    %v1941 = vadd.f32 0.0, %v1940
    %1942 = vdwg.mxu0
    %v1943 = vadd.f32 %v1866, %v1939
    %v1944 = vadd.f32 %v1867, %v1941
    %v1945 = vxor.u32 %v1943, 2147483648
    %v1946 = vxor.u32 %v1944, 2147483648
    %v1947 = vmul.f32 %v1945, 1.442695
    %v1948 = vpow.pop %v1947
    %v1949 = vmul.f32 %v1946, 1.442695
    %v1950 = vpow.pop %v1949
    %v1951 = vadd.f32 %v1948, 1.0
    %v1952 = vadd.f32 %v1950, 1.0
    %v1953 = vrcp.pop %v1951
    %v1954 = vmul.f32 1.0, %v1953
    %v1955 = vrcp.pop %v1952
    %v1956 = vmul.f32 1.0, %v1955
    %v1957 = vtanh.pop %v1944
    %v1959 = vrot.slane %v1853, 6
    %v1961 = vmul.f32 %v1954, %v1959
    %1963 = vrot.lane.b32.xlu0 %v1957, 64
    %v1964 = vpop.permute.xlu0 %1963
    %v1966 = vmul.f32 %v1954, %v1964
    %1968 = vrot.lane.b32.xlu0 %v1966, 64
    %v1969 = vpop.permute.xlu0 %1968
    %v1971 = vadd.f32 %v1961, %v1969
    %v1972 = vtanh.pop %v1971
    %1974 = vrot.lane.b32.xlu0 %v1972, 64
    %v1975 = vpop.permute.xlu0 %1974
    %v1977 = vmul.f32 %v1956, %v1975
    %v1978 = vrot.slane %v1386, 2
    %v1979 = vrot.slane %v1388, 2
    %v1982 = vsel %vm178, %v1392, %v1978
    %v1983 = vsel %vm179, %v1394, %v1979
    %v1985 = vsel %vm308, %v1977, 0
    %1987 = vmatprep.subr.mxu0 %v1286
    %1988 = vmatpush1.msra.mxu0 %v1285
    %1989 = vmatprep.subr.mxu0 %v1288
    %1990 = vmatpush1.msra.mxu0 %v1287
    %1991 = vmatprep.subr.mxu0 %v1290
    %1992 = vmatpush1.msra.mxu0 %v1289
    %1993 = vmatprep.subr.mxu0 %v1292
    %1994 = vmatpush1.msra.mxu0 %v1291
    %1995 = vmatprep.subr.mxu0 %v1294
    %1996 = vmatpush1.msra.mxu0 %v1293
    %1997 = vmatprep.subr.mxu0 %v1296
    %1998 = vmatpush1.msra.mxu0 %v1295
    %1999 = vmatprep.subr.mxu0 %v1298
    %2000 = vmatpush1.msra.mxu0 %v1297
    %2001 = vmatprep.subr.mxu0 %v1300
    %2002 = vmatpush1.msra.mxu0 %v1299
    %2003 = vmatprep.subr.mxu0 0.0
    %2004 = vmatpush1.msra.mxu0 0.0
    %2005 = vmatprep.subr.mxu0 0.0
    %2006 = vmatpush1.msra.mxu0 0.0
    %2007 = vmatprep.subr.mxu0 0.0
    %2008 = vmatpush1.msra.mxu0 0.0
    %2009 = vmatprep.subr.mxu0 0.0
    %2010 = vmatpush1.msra.mxu0 0.0
    %2011 = vmatprep.subr.mxu0 0.0
    %2012 = vmatpush1.msra.mxu0 0.0
    %2013 = vmatprep.subr.mxu0 0.0
    %2014 = vmatpush1.msra.mxu0 0.0
    %2015 = vmatprep.subr.mxu0 0.0
    %2016 = vmatpush1.msra.mxu0 0.0
    %2017 = vmatprep.subr.mxu0 0.0
    %2018 = vmatpush1.msra.mxu0 0.0
    %2019 = vmatprep.subr.mxu0 0.0
    %2020 = vmatpush1.msra.mxu0 0.0
    %2021 = vmatprep.subr.mxu0 0.0
    %2022 = vmatpush1.msra.mxu0 0.0
    %2023 = vmatprep.subr.mxu0 0.0
    %2024 = vmatpush1.msra.mxu0 0.0
    %2025 = vmatprep.subr.mxu0 0.0
    %2026 = vmatpush1.msra.mxu0 0.0
    %2027 = vmatprep.subr.mxu0 0.0
    %2028 = vmatpush1.msra.mxu0 0.0
    %2029 = vmatprep.subr.mxu0 0.0
    %2030 = vmatpush1.msra.mxu0 0.0
    %2031 = vmatprep.subr.mxu0 0.0
    %2032 = vmatpush1.msra.mxu0 0.0
    %2033 = vmatprep.subr.mxu0 0.0
    %2034 = vmatpush1.msra.mxu0 0.0
    %2035 = vmatprep.subr.mxu0 0.0
    %2036 = vmatpush1.msra.mxu0 0.0
    %2037 = vmatprep.subr.mxu0 0.0
    %2038 = vmatpush1.msra.mxu0 0.0
    %2039 = vmatprep.subr.mxu0 0.0
    %2040 = vmatpush1.msra.mxu0 0.0
    %2041 = vmatprep.subr.mxu0 0.0
    %2042 = vmatpush1.msra.mxu0 0.0
    %2043 = vmatprep.subr.mxu0 0.0
    %2044 = vmatpush1.msra.mxu0 0.0
    %2045 = vmatprep.subr.mxu0 0.0
    %2046 = vmatpush1.msra.mxu0 0.0
    %2047 = vmatprep.subr.mxu0 0.0
    %2048 = vmatpush1.msra.mxu0 0.0
    %2049 = vmatprep.subr.mxu0 0.0
    %2050 = vmatpush1.msra.mxu0 0.0
    %2051 = vmatprep.mubr.f32.mxu0 0.0
    %2052 = vmatmul.mubr.f32.gmra.mrb[0].mxu0 %v1985
    %v2053 = vpop.f32.mrb[0].mxu0
    %v2054 = vadd.f32 0.0, %v2053
    %v2055 = vpop.f32.mrb[0].mxu0
    %v2056 = vadd.f32 0.0, %v2055
    %2057 = vdwg.mxu0
    %v2060 = vrot.slane %v2054, 6
    %v2061 = vrot.slane %v2056, 6
    %v2064 = vadd.f32 %v1982, %v2060
    %v2065 = vadd.f32 %v1983, %v2061
    %v2066 = vxor.u32 %v2064, 2147483648
    %v2067 = vxor.u32 %v2065, 2147483648
    %v2068 = vmul.f32 %v2066, 1.442695
    %v2069 = vpow.pop %v2068
    %v2070 = vmul.f32 %v2067, 1.442695
    %v2071 = vpow.pop %v2070
    %v2072 = vadd.f32 %v2069, 1.0
    %v2073 = vadd.f32 %v2071, 1.0
    %v2074 = vrcp.pop %v2072
    %v2075 = vmul.f32 1.0, %v2074
    %v2076 = vrcp.pop %v2073
    %v2077 = vmul.f32 1.0, %v2076
    %v2078 = vtanh.pop %v2065
    %v2080 = vrot.slane %v1971, 6
    %v2082 = vmul.f32 %v2075, %v2080
    %2084 = vrot.lane.b32.xlu0 %v2078, 64
    %v2085 = vpop.permute.xlu0 %2084
    %v2087 = vmul.f32 %v2075, %v2085
    %2089 = vrot.lane.b32.xlu0 %v2087, 64
    %v2090 = vpop.permute.xlu0 %2089
    %v2092 = vadd.f32 %v2082, %v2090
    %v2093 = vtanh.pop %v2092
    %2095 = vrot.lane.b32.xlu0 %v2093, 64
    %v2096 = vpop.permute.xlu0 %2095
    %v2098 = vmul.f32 %v2077, %v2096
    %v2100 = vrot.slane %v2098, 2
    %v2101 = vsel %vm308, %v2100, 0
    %2103 = vmatprep.subr.mxu0 %v1286
    %2104 = vmatpush1.msra.mxu0 %v1285
    %2105 = vmatprep.subr.mxu0 %v1288
    %2106 = vmatpush1.msra.mxu0 %v1287
    %2107 = vmatprep.subr.mxu0 %v1290
    %2108 = vmatpush1.msra.mxu0 %v1289
    %2109 = vmatprep.subr.mxu0 %v1292
    %2110 = vmatpush1.msra.mxu0 %v1291
    %2111 = vmatprep.subr.mxu0 %v1294
    %2112 = vmatpush1.msra.mxu0 %v1293
    %2113 = vmatprep.subr.mxu0 %v1296
    %2114 = vmatpush1.msra.mxu0 %v1295
    %2115 = vmatprep.subr.mxu0 %v1298
    %2116 = vmatpush1.msra.mxu0 %v1297
    %2117 = vmatprep.subr.mxu0 %v1300
    %2118 = vmatpush1.msra.mxu0 %v1299
    %2119 = vmatprep.subr.mxu0 0.0
    %2120 = vmatpush1.msra.mxu0 0.0
    %2121 = vmatprep.subr.mxu0 0.0
    %2122 = vmatpush1.msra.mxu0 0.0
    %2123 = vmatprep.subr.mxu0 0.0
    %2124 = vmatpush1.msra.mxu0 0.0
    %2125 = vmatprep.subr.mxu0 0.0
    %2126 = vmatpush1.msra.mxu0 0.0
    %2127 = vmatprep.subr.mxu0 0.0
    %2128 = vmatpush1.msra.mxu0 0.0
    %2129 = vmatprep.subr.mxu0 0.0
    %2130 = vmatpush1.msra.mxu0 0.0
    %2131 = vmatprep.subr.mxu0 0.0
    %2132 = vmatpush1.msra.mxu0 0.0
    %2133 = vmatprep.subr.mxu0 0.0
    %2134 = vmatpush1.msra.mxu0 0.0
    %2135 = vmatprep.subr.mxu0 0.0
    %2136 = vmatpush1.msra.mxu0 0.0
    %2137 = vmatprep.subr.mxu0 0.0
    %2138 = vmatpush1.msra.mxu0 0.0
    %2139 = vmatprep.subr.mxu0 0.0
    %2140 = vmatpush1.msra.mxu0 0.0
    %2141 = vmatprep.subr.mxu0 0.0
    %2142 = vmatpush1.msra.mxu0 0.0
    %2143 = vmatprep.subr.mxu0 0.0
    %2144 = vmatpush1.msra.mxu0 0.0
    %2145 = vmatprep.subr.mxu0 0.0
    %2146 = vmatpush1.msra.mxu0 0.0
    %2147 = vmatprep.subr.mxu0 0.0
    %2148 = vmatpush1.msra.mxu0 0.0
    %2149 = vmatprep.subr.mxu0 0.0
    %2150 = vmatpush1.msra.mxu0 0.0
    %2151 = vmatprep.subr.mxu0 0.0
    %2152 = vmatpush1.msra.mxu0 0.0
    %2153 = vmatprep.subr.mxu0 0.0
    %2154 = vmatpush1.msra.mxu0 0.0
    %2155 = vmatprep.subr.mxu0 0.0
    %2156 = vmatpush1.msra.mxu0 0.0
    %2157 = vmatprep.subr.mxu0 0.0
    %2158 = vmatpush1.msra.mxu0 0.0
    %2159 = vmatprep.subr.mxu0 0.0
    %2160 = vmatpush1.msra.mxu0 0.0
    %2161 = vmatprep.subr.mxu0 0.0
    %2162 = vmatpush1.msra.mxu0 0.0
    %2163 = vmatprep.subr.mxu0 0.0
    %2164 = vmatpush1.msra.mxu0 0.0
    %2165 = vmatprep.subr.mxu0 0.0
    %2166 = vmatpush1.msra.mxu0 0.0
    %2167 = vmatprep.mubr.f32.mxu0 0.0
    %2168 = vmatmul.mubr.f32.gmra.mrb[0].mxu0 %v2101
    %v2169 = vpop.f32.mrb[0].mxu0
    %v2170 = vadd.f32 0.0, %v2169
    %v2171 = vpop.f32.mrb[0].mxu0
    %v2172 = vadd.f32 0.0, %v2171
    %2173 = vdwg.mxu0
    %v2176 = vrot.slane %v2170, 4
    %v2177 = vrot.slane %v2172, 4
    %v2180 = vadd.f32 %v1866, %v2176
    %v2181 = vadd.f32 %v1867, %v2177
    %v2182 = vxor.u32 %v2180, 2147483648
    %v2183 = vxor.u32 %v2181, 2147483648
    %v2184 = vmul.f32 %v2182, 1.442695
    %v2185 = vpow.pop %v2184
    %v2186 = vmul.f32 %v2183, 1.442695
    %v2187 = vpow.pop %v2186
    %v2188 = vadd.f32 %v2185, 1.0
    %v2189 = vadd.f32 %v2187, 1.0
    %v2190 = vrcp.pop %v2188
    %v2191 = vmul.f32 1.0, %v2190
    %v2192 = vrcp.pop %v2189
    %v2193 = vmul.f32 1.0, %v2192
    %v2194 = vtanh.pop %v2181
    %v2196 = vrot.slane %v2092, 6
    %v2198 = vmul.f32 %v2191, %v2196
    %2200 = vrot.lane.b32.xlu0 %v2194, 64
    %v2201 = vpop.permute.xlu0 %2200
    %v2203 = vmul.f32 %v2191, %v2201
    %2205 = vrot.lane.b32.xlu0 %v2203, 64
    %v2206 = vpop.permute.xlu0 %2205
    %v2208 = vadd.f32 %v2198, %v2206
    %v2209 = vtanh.pop %v2208
    %2211 = vrot.lane.b32.xlu0 %v2209, 64
    %v2212 = vpop.permute.xlu0 %2211
    %v2214 = vmul.f32 %v2193, %v2212
    %v2216 = vrot.slane %v2214, 4
    %v2217 = vsel %vm308, %v2216, 0
    %2219 = vmatprep.subr.mxu0 %v1286
    %2220 = vmatpush1.msra.mxu0 %v1285
    %2221 = vmatprep.subr.mxu0 %v1288
    %2222 = vmatpush1.msra.mxu0 %v1287
    %2223 = vmatprep.subr.mxu0 %v1290
    %2224 = vmatpush1.msra.mxu0 %v1289
    %2225 = vmatprep.subr.mxu0 %v1292
    %2226 = vmatpush1.msra.mxu0 %v1291
    %2227 = vmatprep.subr.mxu0 %v1294
    %2228 = vmatpush1.msra.mxu0 %v1293
    %2229 = vmatprep.subr.mxu0 %v1296
    %2230 = vmatpush1.msra.mxu0 %v1295
    %2231 = vmatprep.subr.mxu0 %v1298
    %2232 = vmatpush1.msra.mxu0 %v1297
    %2233 = vmatprep.subr.mxu0 %v1300
    %2234 = vmatpush1.msra.mxu0 %v1299
    %2235 = vmatprep.subr.mxu0 0.0
    %2236 = vmatpush1.msra.mxu0 0.0
    %2237 = vmatprep.subr.mxu0 0.0
    %2238 = vmatpush1.msra.mxu0 0.0
    %2239 = vmatprep.subr.mxu0 0.0
    %2240 = vmatpush1.msra.mxu0 0.0
    %2241 = vmatprep.subr.mxu0 0.0
    %2242 = vmatpush1.msra.mxu0 0.0
    %2243 = vmatprep.subr.mxu0 0.0
    %2244 = vmatpush1.msra.mxu0 0.0
    %2245 = vmatprep.subr.mxu0 0.0
    %2246 = vmatpush1.msra.mxu0 0.0
    %2247 = vmatprep.subr.mxu0 0.0
    %2248 = vmatpush1.msra.mxu0 0.0
    %2249 = vmatprep.subr.mxu0 0.0
    %2250 = vmatpush1.msra.mxu0 0.0
    %2251 = vmatprep.subr.mxu0 0.0
    %2252 = vmatpush1.msra.mxu0 0.0
    %2253 = vmatprep.subr.mxu0 0.0
    %2254 = vmatpush1.msra.mxu0 0.0
    %2255 = vmatprep.subr.mxu0 0.0
    %2256 = vmatpush1.msra.mxu0 0.0
    %2257 = vmatprep.subr.mxu0 0.0
    %2258 = vmatpush1.msra.mxu0 0.0
    %2259 = vmatprep.subr.mxu0 0.0
    %2260 = vmatpush1.msra.mxu0 0.0
    %2261 = vmatprep.subr.mxu0 0.0
    %2262 = vmatpush1.msra.mxu0 0.0
    %2263 = vmatprep.subr.mxu0 0.0
    %2264 = vmatpush1.msra.mxu0 0.0
    %2265 = vmatprep.subr.mxu0 0.0
    %2266 = vmatpush1.msra.mxu0 0.0
    %2267 = vmatprep.subr.mxu0 0.0
    %2268 = vmatpush1.msra.mxu0 0.0
    %2269 = vmatprep.subr.mxu0 0.0
    %2270 = vmatpush1.msra.mxu0 0.0
    %2271 = vmatprep.subr.mxu0 0.0
    %2272 = vmatpush1.msra.mxu0 0.0
    %2273 = vmatprep.subr.mxu0 0.0
    %2274 = vmatpush1.msra.mxu0 0.0
    %2275 = vmatprep.subr.mxu0 0.0
    %2276 = vmatpush1.msra.mxu0 0.0
    %2277 = vmatprep.subr.mxu0 0.0
    %2278 = vmatpush1.msra.mxu0 0.0
    %2279 = vmatprep.subr.mxu0 0.0
    %2280 = vmatpush1.msra.mxu0 0.0
    %2281 = vmatprep.subr.mxu0 0.0
    %2282 = vmatpush1.msra.mxu0 0.0
    %2283 = vmatprep.mubr.f32.mxu0 0.0
    %2284 = vmatmul.mubr.f32.gmra.mrb[0].mxu0 %v2217
    %v2285 = vpop.f32.mrb[0].mxu0
    %v2286 = vadd.f32 0.0, %v2285
    %v2287 = vpop.f32.mrb[0].mxu0
    %v2288 = vadd.f32 0.0, %v2287
    %2289 = vdwg.mxu0
    %v2292 = vrot.slane %v2286, 2
    %v2293 = vrot.slane %v2288, 2
    %v2296 = vadd.f32 %v1982, %v2292
    %v2297 = vadd.f32 %v1983, %v2293
    %v2298 = vxor.u32 %v2296, 2147483648
    %v2299 = vxor.u32 %v2297, 2147483648
    %v2300 = vmul.f32 %v2298, 1.442695
    %v2301 = vpow.pop %v2300
    %v2302 = vmul.f32 %v2299, 1.442695
    %v2303 = vpow.pop %v2302
    %v2304 = vadd.f32 %v2301, 1.0
    %v2305 = vadd.f32 %v2303, 1.0
    %v2306 = vrcp.pop %v2304
    %v2307 = vmul.f32 1.0, %v2306
    %v2308 = vrcp.pop %v2305
    %v2309 = vmul.f32 1.0, %v2308
    %v2310 = vtanh.pop %v2297
    %v2312 = vrot.slane %v2208, 6
    %v2314 = vmul.f32 %v2307, %v2312
    %2316 = vrot.lane.b32.xlu0 %v2310, 64
    %v2317 = vpop.permute.xlu0 %2316
    %v2319 = vmul.f32 %v2307, %v2317
    %2321 = vrot.lane.b32.xlu0 %v2319, 64
    %v2322 = vpop.permute.xlu0 %2321
    %v2324 = vadd.f32 %v2314, %v2322
    %v2325 = vtanh.pop %v2324
    %2327 = vrot.lane.b32.xlu0 %v2325, 64
    %v2328 = vpop.permute.xlu0 %2327
    %v2330 = vmul.f32 %v2309, %v2328
    %v2331 = vld [vmem:[%s8] sm:$0xff]
    %v2332 = vld [vmem:[%s8 + $0x8] sm:$0xff]
    %v2333 = vld [vmem:[%s8 + $0x10] sm:$0xff]
    %v2334 = vld [vmem:[%s8 + $0x18] sm:$0xff]
    %v2335 = vld [vmem:[%s8 + $0x20] sm:$0xff]
    %v2336 = vld [vmem:[%s8 + $0x28] sm:$0xff]
    %v2337 = vld [vmem:[%s8 + $0x30] sm:$0xff]
    %v2338 = vld [vmem:[%s8 + $0x38] sm:$0xff]
    %v2339 = vld [vmem:[%s9] sm:$0x1]
    %v2341 = vlaneseq
    %v2342 = vshrl.u32 %v2341, 7
    %v2343 = vsub.s32 0, %v2342
    %v2344 = vrot.slane %v2339, %v2343
    %v2347 = vrot.slane %v2330, 6
    %v2348 = vsel %vm308, %v2347, 0
    %2350 = vmatprep.subr.mxu0 0.0
    %2351 = vmatpush1.msra.mxu0 %v2331
    %2352 = vmatprep.subr.mxu0 0.0
    %2353 = vmatpush1.msra.mxu0 %v2332
    %2354 = vmatprep.subr.mxu0 0.0
    %2355 = vmatpush1.msra.mxu0 %v2333
    %2356 = vmatprep.subr.mxu0 0.0
    %2357 = vmatpush1.msra.mxu0 %v2334
    %2358 = vmatprep.subr.mxu0 0.0
    %2359 = vmatpush1.msra.mxu0 %v2335
    %2360 = vmatprep.subr.mxu0 0.0
    %2361 = vmatpush1.msra.mxu0 %v2336
    %2362 = vmatprep.subr.mxu0 0.0
    %2363 = vmatpush1.msra.mxu0 %v2337
    %2364 = vmatprep.subr.mxu0 0.0
    %2365 = vmatpush1.msra.mxu0 %v2338
    %2366 = vmatprep.subr.mxu0 0.0
    %2367 = vmatpush1.msra.mxu0 0.0
    %2368 = vmatprep.subr.mxu0 0.0
    %2369 = vmatpush1.msra.mxu0 0.0
    %2370 = vmatprep.subr.mxu0 0.0
    %2371 = vmatpush1.msra.mxu0 0.0
    %2372 = vmatprep.subr.mxu0 0.0
    %2373 = vmatpush1.msra.mxu0 0.0
    %2374 = vmatprep.subr.mxu0 0.0
    %2375 = vmatpush1.msra.mxu0 0.0
    %2376 = vmatprep.subr.mxu0 0.0
    %2377 = vmatpush1.msra.mxu0 0.0
    %2378 = vmatprep.subr.mxu0 0.0
    %2379 = vmatpush1.msra.mxu0 0.0
    %2380 = vmatprep.subr.mxu0 0.0
    %2381 = vmatpush1.msra.mxu0 0.0
    %2382 = vmatprep.subr.mxu0 0.0
    %2383 = vmatpush1.msra.mxu0 0.0
    %2384 = vmatprep.subr.mxu0 0.0
    %2385 = vmatpush1.msra.mxu0 0.0
    %2386 = vmatprep.subr.mxu0 0.0
    %2387 = vmatpush1.msra.mxu0 0.0
    %2388 = vmatprep.subr.mxu0 0.0
    %2389 = vmatpush1.msra.mxu0 0.0
    %2390 = vmatprep.subr.mxu0 0.0
    %2391 = vmatpush1.msra.mxu0 0.0
    %2392 = vmatprep.subr.mxu0 0.0
    %2393 = vmatpush1.msra.mxu0 0.0
    %2394 = vmatprep.subr.mxu0 0.0
    %2395 = vmatpush1.msra.mxu0 0.0
    %2396 = vmatprep.subr.mxu0 0.0
    %2397 = vmatpush1.msra.mxu0 0.0
    %2398 = vmatprep.subr.mxu0 0.0
    %2399 = vmatpush1.msra.mxu0 0.0
    %2400 = vmatprep.subr.mxu0 0.0
    %2401 = vmatpush1.msra.mxu0 0.0
    %2402 = vmatprep.subr.mxu0 0.0
    %2403 = vmatpush1.msra.mxu0 0.0
    %2404 = vmatprep.subr.mxu0 0.0
    %2405 = vmatpush1.msra.mxu0 0.0
    %2406 = vmatprep.subr.mxu0 0.0
    %2407 = vmatpush1.msra.mxu0 0.0
    %2408 = vmatprep.subr.mxu0 0.0
    %2409 = vmatpush1.msra.mxu0 0.0
    %2410 = vmatprep.subr.mxu0 0.0
    %2411 = vmatpush1.msra.mxu0 0.0
    %2412 = vmatprep.subr.mxu0 0.0
    %2413 = vmatpush1.msra.mxu0 0.0
    %2414 = vmatprep.mubr.f32.mxu0 0.0
    %2415 = vmatmul.mubr.f32.gmra.mrb[0].mxu0 %v2348
    %v2416 = vpop.f32.mrb[0].mxu0
    %v2417 = vadd.f32 %v2344, %v2416
    %v2418 = vpop.f32.mrb[0].mxu0
    %2419 = vdwg.mxu0
    %vm2420 = vcmask 9216
    %2421 = vst.msk [vmem:[#allocation4] sm:$0x3] %vm2420, %v2417
    // Predicated region
    $region38: #{sentiment_forward.1} parent=1 // pred_check
      _
    $region39: #{sentiment_forward.1} parent=1 // pred_check_branch
      %2423 = sbr.rel (0) target = $region41
    $region40: #{sentiment_forward.1} parent=1 // pred_region
      %s2425 = ssub.s32 32, 32
      %2426 = vsyncadd [#allocation5], %s2425
      %s2428 = sshll.u32 [#allocation4], 4
      %s2429 = int_to_ptr.vmem [resolvable:$true] %s2428
      %2431 = dma.vmem_to_hbm [thread:$0]  %s2429, 32, %s10, [#allocation5]
    $region41: #{sentiment_forward.1} parent=1 // pred_fallthru
      _
    // Predicated region
    $region42: #{sentiment_forward.1} parent=1 // pred_check
      _
    $region43: #{sentiment_forward.1} parent=1 // pred_check_branch
      %2433 = sbr.rel (0) target = $region45
    $region44: #{sentiment_forward.1} parent=1 // pred_region
      %2434 = dma.done [#allocation5], 32
    $region45: #{sentiment_forward.1} parent=1 // pred_fallthru
      _
    %2435 = vsyncpa [#allocation5], 1

</llo_original>
